<compile_context>
chip_gen: v7x
topology: tpu7x:2x2x1
jax: 0.10.0
libtpu: 0.0.40
codegen_flags: <defaults>
</compile_context>

<pallas_src>
import functools
import math

import jax
import jax.numpy as jnp
from jax.experimental import pallas as pl
from jax.experimental.pallas import tpu as pltpu


def _chip_tuning():
    """(vmem_limit_bytes, row-tile target) per TPU generation."""
    try:
        cap = getattr(pltpu.get_tpu_info(), "vmem_capacity_bytes",
                      64 * 1024 * 1024)
    except Exception:          # fall back to settings that are safe everywhere
        cap = 64 * 1024 * 1024
    if cap > 64 * 1024 * 1024:           # v5e / v6e: 128 MiB physical VMEM
        return 100 * 1024 * 1024, 512
    return 48 * 1024 * 1024, 256         # v7x: 64 MiB physical per TensorCore


_VMEM_LIMIT, _TM_TARGET = _chip_tuning()
_SQRT2_INV = 1.0 / math.sqrt(2.0)


def _pick_row_tile(m):
    return m if m <= _TM_TARGET else _TM_TARGET


def _gelu(y):
    # torch nn.GELU() default = exact erf GELU (f32 math).
    # (tanh-approx GELU would move the transcendental to the EUP slot on v5e,
    #  at a small numeric deviation from torch -- not applied.)
    return 0.5 * y * (1.0 + jax.lax.erf(y * _SQRT2_INV))


def _ln(x, g, b, eps):
    mu = jnp.mean(x, axis=-1, keepdims=True)
    var = jnp.mean((x - mu) ** 2, axis=-1, keepdims=True)
    return (x - mu) * jax.lax.rsqrt(var + eps) * g + b


# ----------------------------------------------------------------------------
# Pallas kernels
# ----------------------------------------------------------------------------
def _fused_linear_kernel(*refs, ln, act, residual, eps):
    """[optional LN] -> bf16 GEMM (+bias) -> [optional GELU] -> [optional +res]."""
    it = iter(refs)
    x_ref = next(it)
    if ln:
        g_ref = next(it)
        bln_ref = next(it)
    w_ref = next(it)
    b_ref = next(it)
    if residual:
        res_ref = next(it)
    o_ref = next(it)

    x = x_ref[...]
    if ln:
        x = _ln(x.astype(jnp.float32), g_ref[...], bln_ref[...], eps)
    y = jnp.dot(x.astype(jnp.bfloat16), w_ref[...],
                preferred_element_type=jnp.float32)
    y = y + b_ref[...]
    if act == "gelu":
        y = _gelu(y)
    if residual:
        y = y + res_ref[...].astype(jnp.float32)     # residual add stays f32
    o_ref[...] = y.astype(o_ref.dtype)


def _ln_qkv_kernel(x_ref, g_ref, bln_ref, w_ref, b_ref,
                   q_ref, k_ref, v_ref, *, eps):
    """Fused LN1 + single (E,3E) QKV GEMM; three lane-sliced stores."""
    E = q_ref.shape[-1]
    h = _ln(x_ref[...].astype(jnp.float32), g_ref[...], bln_ref[...], eps)
    y = jnp.dot(h.astype(jnp.bfloat16), w_ref[...],
                preferred_element_type=jnp.float32) + b_ref[...]
    q_ref[...] = y[:, :E].astype(q_ref.dtype)
    k_ref[...] = y[:, E:2 * E].astype(k_ref.dtype)
    v_ref[...] = y[:, 2 * E:].astype(v_ref.dtype)


def _attention_kernel(q_ref, k_ref, v_ref, o_ref, *, hg, dh):
    """One (batch, head-group) block per grid step.

    q/k/v blocks are (1, S, hg*dh) bf16; the 1/sqrt(dh) scale is already
    folded into wq/bq.  Each head's output is stored directly into its lane
    slice of o_ref (no concat / no big live list).
    """
    q = q_ref[0]
    k = k_ref[0]
    v = v_ref[0]
    contract_last = (((1,), (1,)), ((), ()))      # q @ k^T without a transpose
    for h in range(hg):
        sl = slice(h * dh, (h + 1) * dh)
        s = jax.lax.dot_general(q[:, sl], k[:, sl], contract_last,
                                preferred_element_type=jnp.float32)
        s = s - jnp.max(s, axis=-1, keepdims=True)
        p = jnp.exp(s)
        l = jnp.sum(p, axis=-1, keepdims=True)
        o = jnp.dot(p.astype(jnp.bfloat16), v[:, sl],
                    preferred_element_type=jnp.float32)
        o_ref[0, :, sl] = (o * pl.reciprocal(l, approx=True)).astype(o_ref.dtype)


def _patch_embed_kernel(p_ref, w_ref, b_ref, cls_ref, pos_ref, o_ref):
    """conv_proj GEMM + cls-token prepend + positional embedding, fused."""
    y = jnp.dot(p_ref[0].astype(jnp.bfloat16), w_ref[...],
                preferred_element_type=jnp.float32) + b_ref[...]
    tok = jnp.concatenate([cls_ref[...].astype(jnp.float32), y], axis=0)
    o_ref[0] = (tok + pos_ref[0].astype(jnp.float32)).astype(o_ref.dtype)


def _layernorm_kernel(x_ref, g_ref, b_ref, o_ref, *, eps):
    o_ref[...] = _ln(x_ref[...].astype(jnp.float32), g_ref[...], b_ref[...],
                     eps).astype(o_ref.dtype)


# ----------------------------------------------------------------------------
# pallas_call wrappers
# ----------------------------------------------------------------------------
def fused_linear(x, w, b, *, ln=None, act=None, residual=None, eps=1e-6,
                 out_dtype=None):
    """x:(M,K), w:(K,N) bf16, b:(N,); full weight resident, row-tiled grid."""
    M, K = x.shape
    Nout = w.shape[1]
    out_dtype = out_dtype or x.dtype
    tm = _pick_row_tile(M)

    in_specs = [pl.BlockSpec((tm, K), lambda i: (i, 0))]
    args = [x]
    if ln is not None:
        g, bb = ln
        in_specs += [pl.BlockSpec((1, K), lambda i: (0, 0)),
                     pl.BlockSpec((1, K), lambda i: (0, 0))]
        args += [g.reshape(1, K), bb.reshape(1, K)]
    in_specs += [pl.BlockSpec((K, Nout), lambda i: (0, 0)),     # weight resident
                 pl.BlockSpec((1, Nout), lambda i: (0, 0))]
    args += [w, b.reshape(1, Nout)]
    if residual is not None:
        in_specs += [pl.BlockSpec((tm, Nout), lambda i: (i, 0))]
        args += [residual]

    kernel = functools.partial(_fused_linear_kernel, ln=ln is not None,
                               act=act, residual=residual is not None, eps=eps)
    return pl.pallas_call(
        kernel,
        out_shape=jax.ShapeDtypeStruct((M, Nout), out_dtype),
        grid=(pl.cdiv(M, tm),),
        in_specs=in_specs,
        out_specs=pl.BlockSpec((tm, Nout), lambda i: (i, 0)),
        compiler_params=pltpu.CompilerParams(
            dimension_semantics=("parallel",),
            vmem_limit_bytes=_VMEM_LIMIT),
    )(*args)


def ln_qkv(x, g, bln, w_qkv, b_qkv, eps=1e-6):
    """Fused LN1 + QKV projection; x:(M,E) f32 -> (q,k,v) each (M,E) bf16."""
    M, E = x.shape
    tm = _pick_row_tile(M)
    row_in = pl.BlockSpec((tm, E), lambda i: (i, 0))
    row_out = pl.BlockSpec((tm, E), lambda i: (i, 0))
    vec_e = pl.BlockSpec((1, E), lambda i: (0, 0))
    w_spec = pl.BlockSpec((E, 3 * E), lambda i: (0, 0))
    vec_3e = pl.BlockSpec((1, 3 * E), lambda i: (0, 0))
    return pl.pallas_call(
        functools.partial(_ln_qkv_kernel, eps=eps),
        out_shape=tuple(jax.ShapeDtypeStruct((M, E), jnp.bfloat16)
                        for _ in range(3)),
        grid=(pl.cdiv(M, tm),),
        in_specs=[row_in, vec_e, vec_e, w_spec, vec_3e],
        out_specs=(row_out, row_out, row_out),
        compiler_params=pltpu.CompilerParams(
            dimension_semantics=("parallel",),
            vmem_limit_bytes=_VMEM_LIMIT),
    )(x, g.reshape(1, E), bln.reshape(1, E), w_qkv, b_qkv.reshape(1, 3 * E))


def attention(q, k, v, heads):
    """q/k/v: (N,S,E) bf16 -> (N,S,E) bf16; grid over (batch, head-group)."""
    N, S, E = q.shape
    dh = E // heads
    # smallest head-group whose lane width is a multiple of 128 (else full E)
    hg = heads
    for cand in range(1, heads):
        if (cand * dh) % 128 == 0 and heads % cand == 0:
            hg = cand
            break
    hgd = hg * dh
    ng = heads // hg
    spec = pl.BlockSpec((1, S, hgd), lambda b, g: (b, 0, g))
    return pl.pallas_call(
        functools.partial(_attention_kernel, hg=hg, dh=dh),
        out_shape=jax.ShapeDtypeStruct((N, S, E), jnp.bfloat16),
        grid=(N, ng),
        in_specs=[spec, spec, spec],
        out_specs=spec,
        compiler_params=pltpu.CompilerParams(
            dimension_semantics=("parallel", "parallel"),
            vmem_limit_bytes=_VMEM_LIMIT),
    )(q, k, v)


def patch_embed(patches, w, b, cls, pos):
    """patches:(N,np,K) f32, w:(K,E) bf16 -> (N, np+1, E) f32 with cls+pos fused."""
    N, npch, K = patches.shape
    E = w.shape[1]
    S = pos.shape[1]
    return pl.pallas_call(
        _patch_embed_kernel,
        out_shape=jax.ShapeDtypeStruct((N, S, E), jnp.float32),
        grid=(N,),
        in_specs=[pl.BlockSpec((1, npch, K), lambda n: (n, 0, 0)),
                  pl.BlockSpec((K, E), lambda n: (0, 0)),
                  pl.BlockSpec((1, E), lambda n: (0, 0)),
                  pl.BlockSpec((1, E), lambda n: (0, 0)),
                  pl.BlockSpec((1, S, E), lambda n: (0, 0, 0))],
        out_specs=pl.BlockSpec((1, S, E), lambda n: (n, 0, 0)),
        compiler_params=pltpu.CompilerParams(
            dimension_semantics=("parallel",),
            vmem_limit_bytes=_VMEM_LIMIT),
    )(patches, w, b.reshape(1, E), cls.reshape(1, E), pos)


def layernorm(x, g, b, eps=1e-6):
    M, E = x.shape
    tm = _pick_row_tile(M)
    row = pl.BlockSpec((tm, E), lambda i: (i, 0))
    vec = pl.BlockSpec((1, E), lambda i: (0, 0))
    return pl.pallas_call(
        functools.partial(_layernorm_kernel, eps=eps),
        out_shape=jax.ShapeDtypeStruct((M, E), x.dtype),
        grid=(pl.cdiv(M, tm),),
        in_specs=[row, vec, vec],
        out_specs=row,
        compiler_params=pltpu.CompilerParams(
            dimension_semantics=("parallel",),
            vmem_limit_bytes=_VMEM_LIMIT),
    )(x, g.reshape(1, E), b.reshape(1, E))


# ----------------------------------------------------------------------------
# ViT forward (mirrors torchvision VisionTransformer._process_input + encoder)
# ----------------------------------------------------------------------------
def encoder_block(x2d, L, heads, N, S, E):
    # --- self-attention sub-block: LN1+QKV fused, attn, out-proj+residual fused
    q, k, v = ln_qkv(x2d, L["ln1_g"], L["ln1_b"], L["w_qkv"], L["b_qkv"])
    o = attention(q.reshape(N, S, E), k.reshape(N, S, E), v.reshape(N, S, E),
                  heads)
    x2d = fused_linear(o.reshape(N * S, E), L["out_w"], L["out_b"],
                       residual=x2d, out_dtype=jnp.float32)   # dropout p=0
    # --- MLP sub-block: LN2+fc1+GELU fused (bf16 hidden), fc2+residual fused
    h = fused_linear(x2d, L["w1"], L["b1"],
                     ln=(L["ln2_g"], L["ln2_b"]), act="gelu",
                     out_dtype=jnp.bfloat16)
    x2d = fused_linear(h, L["w2"], L["b2"], residual=x2d,
                       out_dtype=jnp.float32)
    return x2d


def vit_forward(x_nchw, params, cfg):
    N, C, H, W = x_nchw.shape
    p, E, heads = cfg["patch"], cfg["hidden"], cfg["heads"]
    nh, nw = H // p, W // p
    npch = nh * nw

    # _process_input: conv_proj with kernel==stride==patch  <=>  patchify + GEMM
    patches = (
        x_nchw.reshape(N, C, nh, p, nw, p)
        .transpose(0, 2, 4, 1, 3, 5)
        .reshape(N, npch, C * p * p)
    )
    # patch-embed GEMM with cls-token prepend + pos-embedding add fused in
    # (dropout p=0 -> identity)
    x = patch_embed(patches, params["conv_w_t"], params["conv_b"],
                    params["class_token"], params["pos_embedding"])
    S = npch + 1

    x2d = x.reshape(N * S, E)
    for L in params["layers"]:
        x2d = encoder_block(x2d, L, heads, N, S, E)
    x2d = layernorm(x2d, params["ln_g"], params["ln_b"])
    return x2d.reshape(N, S, E)


# ----------------------------------------------------------------------------
# Deterministic parameter construction (synthetic, small ViT config).
# TODO(synk): real IMAGENET1K_SWAG_E2E_V1 weights would be loaded from the
# torchvision checkpoint and converted once with the same transposes below.
# ----------------------------------------------------------------------------
def make_params(key, cfg, in_ch):
    p, E, M, L = cfg["patch"], cfg["hidden"], cfg["mlp"], cfg["layers"]
    heads, seq = cfg["heads"], cfg["seq"]
    scale = 1.0 / math.sqrt(E // heads)
    keys = iter(jax.random.split(key, 8 + 12 * L))

    def nrm(shape, s=0.02):
        return (s * jax.random.normal(next(keys), shape)).astype(jnp.float32)

    def as_mxu(w):  # pre-transpose/cast ONCE: MXU wants (in, out) bf16
        return w.astype(jnp.bfloat16)

    params = {
        # torch conv weight (E, C, p, p) -> pre-flattened/transposed (C*p*p, E)
        "conv_w_t": as_mxu(nrm((E, in_ch * p * p)).T),
        "conv_b": nrm((E,)),
        "class_token": nrm((1, 1, E)),
        "pos_embedding": nrm((1, seq, E)),
        "ln_g": jnp.ones((E,), jnp.float32),
        "ln_b": jnp.zeros((E,), jnp.float32),
        "layers": [],
    }
    for _ in range(L):
        in_w = nrm((3 * E, E))          # torch MHA in_proj_weight layout (3E,E)
        in_b = nrm((3 * E,))
        # fold 1/sqrt(dh) into the q projection; split/transpose/concat ONCE
        w_qkv = jnp.concatenate(
            [in_w[:E].T * scale, in_w[E:2 * E].T, in_w[2 * E:].T], axis=1)
        b_qkv = jnp.concatenate(
            [in_b[:E] * scale, in_b[E:2 * E], in_b[2 * E:]])
        params["layers"].append(
            {
                "ln1_g": jnp.ones((E,), jnp.float32),
                "ln1_b": jnp.zeros((E,), jnp.float32),
                "w_qkv": as_mxu(w_qkv),              # (E, 3E)
                "b_qkv": b_qkv,                      # (3E,)
                "out_w": as_mxu(nrm((E, E)).T),      # torch (out,in) -> (in,out)
                "out_b": nrm((E,)),
                "ln2_g": jnp.ones((E,), jnp.float32),
                "ln2_b": jnp.zeros((E,), jnp.float32),
                "w1": as_mxu(nrm((M, E)).T),
                "b1": nrm((M,)),
                "w2": as_mxu(nrm((E, M)).T),
                "b2": nrm((E,)),
            }
        )
    return params


if __name__ == "__main__":
    # Small smoke-test config consistent with the module's forward structure:
    # image 32x32, patch 16 -> 4 patches + 1 class token = seq 5.
    cfg = {"patch": 16, "hidden": 32, "heads": 4, "mlp": 64, "layers": 2, "seq": 5}
    batch, channels, img = 2, 3, 32

    key = jax.random.PRNGKey(0)
    k_x, k_p = jax.random.split(key)
    x = jax.random.normal(k_x, (batch, channels, img, img), dtype=jnp.float32)
    params = make_params(k_p, cfg, channels)

    fwd = jax.jit(functools.partial(vit_forward, cfg=cfg))
    out = jax.block_until_ready(fwd(x, params))
    assert out.shape == (batch, cfg["seq"], cfg["hidden"]), out.shape
    assert jnp.all(jnp.isfinite(out))
    print("KERNEL_OK")
</pallas_src>

<mosaic_0001>
module attributes {stable_mosaic.version = 11 : i64} {
  func.func @_patch_embed_kernel(%arg0: i32, %arg1: memref<1x4x768xf32, #tpu.memory_space<vmem>>, %arg2: memref<768x32xbf16, #tpu.memory_space<vmem>>, %arg3: memref<1x32xf32, #tpu.memory_space<vmem>>, %arg4: memref<1x32xf32, #tpu.memory_space<vmem>>, %arg5: memref<1x5x32xf32, #tpu.memory_space<vmem>>, %arg6: memref<1x5x32xf32, #tpu.memory_space<vmem>>) attributes {dimension_semantics = [#tpu.dimension_semantics<parallel>], iteration_bounds = array<i64: 2>, scalar_prefetch = 0 : i64, scratch_operands = 0 : i64, tpu.core_type = #tpu.core_type<tc>, window_params = [{transform_indices = @transform_0, window_bounds = array<i64: 1, 4, 768>}, {pipeline_mode = #tpu.pipeline_mode<synchronous>, transform_indices = @transform_1, window_bounds = array<i64: 768, 32>}, {pipeline_mode = #tpu.pipeline_mode<synchronous>, transform_indices = @transform_2, window_bounds = array<i64: 1, 32>}, {pipeline_mode = #tpu.pipeline_mode<synchronous>, transform_indices = @transform_3, window_bounds = array<i64: 1, 32>}, {pipeline_mode = #tpu.pipeline_mode<synchronous>, transform_indices = @transform_4, window_bounds = array<i64: 1, 5, 32>}, {transform_indices = @transform_5, window_bounds = array<i64: 1, 5, 32>}]} {
    %c0 = arith.constant 0 : index
    %c0_0 = arith.constant 0 : index
    %c0_1 = arith.constant 0 : index
    %0 = vector.load %arg1[%c0, %c0_0, %c0_1] : memref<1x4x768xf32, #tpu.memory_space<vmem>>, vector<1x4x768xf32>
    %1 = vector.shape_cast %0 : vector<1x4x768xf32> to vector<4x768xf32>
    %2 = arith.truncf %1 : vector<4x768xf32> to vector<4x768xbf16>
    %c0_2 = arith.constant 0 : index
    %c0_3 = arith.constant 0 : index
    %3 = vector.load %arg2[%c0_2, %c0_3] : memref<768x32xbf16, #tpu.memory_space<vmem>>, vector<768x32xbf16>
    %cst = arith.constant dense<0.000000e+00> : vector<4x32xf32>
    %4 = tpu.matmul %2, %3, %cst {dimension_numbers = #tpu.dot_dimension_numbers<[1], [0], [0], [1], [0, 0, 1, 1], [], []>} : vector<4x768xbf16>, vector<768x32xbf16>, vector<4x32xf32> -> vector<4x32xf32>
    %c0_4 = arith.constant 0 : index
    %c0_5 = arith.constant 0 : index
    %5 = vector.load %arg3[%c0_4, %c0_5] : memref<1x32xf32, #tpu.memory_space<vmem>>, vector<1x32xf32>
    %6 = vector.broadcast %5 : vector<1x32xf32> to vector<4x32xf32>
    %7 = arith.addf %4, %6 : vector<4x32xf32>
    %c0_6 = arith.constant 0 : index
    %c0_7 = arith.constant 0 : index
    %8 = vector.load %arg4[%c0_6, %c0_7] : memref<1x32xf32, #tpu.memory_space<vmem>>, vector<1x32xf32>
    %9 = tpu.concatenate %8, %7 in 0 : vector<1x32xf32>, vector<4x32xf32> -> vector<5x32xf32>
    %c0_8 = arith.constant 0 : index
    %c0_9 = arith.constant 0 : index
    %c0_10 = arith.constant 0 : index
    %10 = vector.load %arg5[%c0_8, %c0_9, %c0_10] : memref<1x5x32xf32, #tpu.memory_space<vmem>>, vector<1x5x32xf32>
    %11 = vector.shape_cast %10 : vector<1x5x32xf32> to vector<5x32xf32>
    %12 = arith.addf %9, %11 : vector<5x32xf32>
    %c0_11 = arith.constant 0 : index
    %c0_12 = arith.constant 0 : index
    %c0_13 = arith.constant 0 : index
    %13 = vector.load %arg6[%c0_11, %c0_12, %c0_13] : memref<1x5x32xf32, #tpu.memory_space<vmem>>, vector<1x5x32xf32>
    %14 = vector.shape_cast %13 : vector<1x5x32xf32> to vector<5x32xf32>
    %15 = vector.shape_cast %12 : vector<5x32xf32> to vector<1x5x32xf32>
    tpu.vector_store %arg6[%c0_11, %c0_12, %c0_13], %15 {strides = array<i32>} : memref<1x5x32xf32, #tpu.memory_space<vmem>>, vector<1x5x32xf32>,
    return
  }
  func.func @transform_0(%arg0: i32) -> (i32, i32, i32) {
    %c0_i32 = arith.constant 0 : i32
    %c0_i32_0 = arith.constant 0 : i32
    %c0_i32_1 = arith.constant 0 : i32
    return %arg0, %c0_i32, %c0_i32_0 : i32, i32, i32
  }
  func.func @transform_1(%arg0: i32) -> (i32, i32) {
    %c0_i32 = arith.constant 0 : i32
    %c0_i32_0 = arith.constant 0 : i32
    %c0_i32_1 = arith.constant 0 : i32
    return %c0_i32, %c0_i32_0 : i32, i32
  }
  func.func @transform_2(%arg0: i32) -> (i32, i32) {
    %c0_i32 = arith.constant 0 : i32
    %c0_i32_0 = arith.constant 0 : i32
    %c0_i32_1 = arith.constant 0 : i32
    return %c0_i32, %c0_i32_0 : i32, i32
  }
  func.func @transform_3(%arg0: i32) -> (i32, i32) {
    %c0_i32 = arith.constant 0 : i32
    %c0_i32_0 = arith.constant 0 : i32
    %c0_i32_1 = arith.constant 0 : i32
    return %c0_i32, %c0_i32_0 : i32, i32
  }
  func.func @transform_4(%arg0: i32) -> (i32, i32, i32) {
    %c0_i32 = arith.constant 0 : i32
    %c0_i32_0 = arith.constant 0 : i32
    %c0_i32_1 = arith.constant 0 : i32
    %c0_i32_2 = arith.constant 0 : i32
    return %c0_i32, %c0_i32_0, %c0_i32_1 : i32, i32, i32
  }
  func.func @transform_5(%arg0: i32) -> (i32, i32, i32) {
    %c0_i32 = arith.constant 0 : i32
    %c0_i32_0 = arith.constant 0 : i32
    %c0_i32_1 = arith.constant 0 : i32
    return %arg0, %c0_i32, %c0_i32_0 : i32, i32, i32
  }
}

module attributes {stable_mosaic.version = 11 : i64} {
  func.func @_ln_qkv_kernel(%arg0: i32, %arg1: memref<10x32xf32, #tpu.memory_space<vmem>>, %arg2: memref<1x32xf32, #tpu.memory_space<vmem>>, %arg3: memref<1x32xf32, #tpu.memory_space<vmem>>, %arg4: memref<32x96xbf16, #tpu.memory_space<vmem>>, %arg5: memref<1x96xf32, #tpu.memory_space<vmem>>, %arg6: memref<10x32xbf16, #tpu.memory_space<vmem>>, %arg7: memref<10x32xbf16, #tpu.memory_space<vmem>>, %arg8: memref<10x32xbf16, #tpu.memory_space<vmem>>) attributes {dimension_semantics = [#tpu.dimension_semantics<parallel>], iteration_bounds = array<i64: 1>, scalar_prefetch = 0 : i64, scratch_operands = 0 : i64, tpu.core_type = #tpu.core_type<tc>, window_params = [{transform_indices = @transform_0, window_bounds = array<i64: 10, 32>}, {pipeline_mode = #tpu.pipeline_mode<synchronous>, transform_indices = @transform_1, window_bounds = array<i64: 1, 32>}, {pipeline_mode = #tpu.pipeline_mode<synchronous>, transform_indices = @transform_2, window_bounds = array<i64: 1, 32>}, {pipeline_mode = #tpu.pipeline_mode<synchronous>, transform_indices = @transform_3, window_bounds = array<i64: 32, 96>}, {pipeline_mode = #tpu.pipeline_mode<synchronous>, transform_indices = @transform_4, window_bounds = array<i64: 1, 96>}, {transform_indices = @transform_5, window_bounds = array<i64: 10, 32>}, {transform_indices = @transform_6, window_bounds = array<i64: 10, 32>}, {transform_indices = @transform_7, window_bounds = array<i64: 10, 32>}]} {
    %c0 = arith.constant 0 : index
    %c0_0 = arith.constant 0 : index
    %0 = vector.load %arg1[%c0, %c0_0] : memref<10x32xf32, #tpu.memory_space<vmem>>, vector<10x32xf32>
    %c0_1 = arith.constant 0 : index
    %c0_2 = arith.constant 0 : index
    %1 = vector.load %arg2[%c0_1, %c0_2] : memref<1x32xf32, #tpu.memory_space<vmem>>, vector<1x32xf32>
    %c0_3 = arith.constant 0 : index
    %c0_4 = arith.constant 0 : index
    %2 = vector.load %arg3[%c0_3, %c0_4] : memref<1x32xf32, #tpu.memory_space<vmem>>, vector<1x32xf32>
    %cst = arith.constant dense<0.000000e+00> : vector<10xf32>
    %3 = vector.multi_reduction <add>, %0, %cst [1] : vector<10x32xf32> to vector<10xf32>
    %4 = vector.shape_cast %3 : vector<10xf32> to vector<10x1xf32>
    %cst_5 = arith.constant 3.200000e+01 : f32
    %5 = vector.broadcast %cst_5 : f32 to vector<10x1xf32>
    %6 = arith.divf %4, %5 : vector<10x1xf32>
    %7 = vector.broadcast %6 : vector<10x1xf32> to vector<10x32xf32>
    %8 = arith.subf %0, %7 : vector<10x32xf32>
    %9 = arith.mulf %8, %8 : vector<10x32xf32>
    %cst_6 = arith.constant dense<0.000000e+00> : vector<10xf32>
    %10 = vector.multi_reduction <add>, %9, %cst_6 [1] : vector<10x32xf32> to vector<10xf32>
    %11 = vector.shape_cast %10 : vector<10xf32> to vector<10x1xf32>
    %cst_7 = arith.constant 3.200000e+01 : f32
    %12 = vector.broadcast %cst_7 : f32 to vector<10x1xf32>
    %13 = arith.divf %11, %12 : vector<10x1xf32>
    %14 = vector.broadcast %6 : vector<10x1xf32> to vector<10x32xf32>
    %15 = arith.subf %0, %14 : vector<10x32xf32>
    %cst_8 = arith.constant 9.99999997E-7 : f32
    %16 = vector.broadcast %cst_8 : f32 to vector<10x1xf32>
    %17 = arith.addf %13, %16 : vector<10x1xf32>
    %18 = math.rsqrt %17 : vector<10x1xf32>
    %19 = vector.broadcast %18 : vector<10x1xf32> to vector<10x32xf32>
    %20 = arith.mulf %15, %19 : vector<10x32xf32>
    %21 = vector.broadcast %1 : vector<1x32xf32> to vector<10x32xf32>
    %22 = arith.mulf %20, %21 : vector<10x32xf32>
    %23 = vector.broadcast %2 : vector<1x32xf32> to vector<10x32xf32>
    %24 = arith.addf %22, %23 : vector<10x32xf32>
    %25 = arith.truncf %24 : vector<10x32xf32> to vector<10x32xbf16>
    %c0_9 = arith.constant 0 : index
    %c0_10 = arith.constant 0 : index
    %26 = vector.load %arg4[%c0_9, %c0_10] : memref<32x96xbf16, #tpu.memory_space<vmem>>, vector<32x96xbf16>
    %cst_11 = arith.constant dense<0.000000e+00> : vector<10x96xf32>
    %27 = tpu.matmul %25, %26, %cst_11 {dimension_numbers = #tpu.dot_dimension_numbers<[1], [0], [0], [1], [0, 0, 1, 1], [], []>} : vector<10x32xbf16>, vector<32x96xbf16>, vector<10x96xf32> -> vector<10x96xf32>
    %c0_12 = arith.constant 0 : index
    %c0_13 = arith.constant 0 : index
    %28 = vector.load %arg5[%c0_12, %c0_13] : memref<1x96xf32, #tpu.memory_space<vmem>>, vector<1x96xf32>
    %29 = vector.broadcast %28 : vector<1x96xf32> to vector<10x96xf32>
    %30 = arith.addf %27, %29 : vector<10x96xf32>
    %31 = vector.extract_strided_slice %30 {offsets = [0, 0], sizes = [10, 32], strides = [1, 1]} : vector<10x96xf32> to vector<10x32xf32>
    %32 = arith.truncf %31 : vector<10x32xf32> to vector<10x32xbf16>
    %c0_14 = arith.constant 0 : index
    %c0_15 = arith.constant 0 : index
    %33 = vector.load %arg6[%c0_14, %c0_15] : memref<10x32xbf16, #tpu.memory_space<vmem>>, vector<10x32xbf16>
    tpu.vector_store %arg6[%c0_14, %c0_15], %32 {strides = array<i32>} : memref<10x32xbf16, #tpu.memory_space<vmem>>, vector<10x32xbf16>,
    %34 = vector.extract_strided_slice %30 {offsets = [0, 32], sizes = [10, 32], strides = [1, 1]} : vector<10x96xf32> to vector<10x32xf32>
    %35 = arith.truncf %34 : vector<10x32xf32> to vector<10x32xbf16>
    %c0_16 = arith.constant 0 : index
    %c0_17 = arith.constant 0 : index
    %36 = vector.load %arg7[%c0_16, %c0_17] : memref<10x32xbf16, #tpu.memory_space<vmem>>, vector<10x32xbf16>
    tpu.vector_store %arg7[%c0_16, %c0_17], %35 {strides = array<i32>} : memref<10x32xbf16, #tpu.memory_space<vmem>>, vector<10x32xbf16>,
    %37 = vector.extract_strided_slice %30 {offsets = [0, 64], sizes = [10, 32], strides = [1, 1]} : vector<10x96xf32> to vector<10x32xf32>
    %38 = arith.truncf %37 : vector<10x32xf32> to vector<10x32xbf16>
    %c0_18 = arith.constant 0 : index
    %c0_19 = arith.constant 0 : index
    %39 = vector.load %arg8[%c0_18, %c0_19] : memref<10x32xbf16, #tpu.memory_space<vmem>>, vector<10x32xbf16>
    tpu.vector_store %arg8[%c0_18, %c0_19], %38 {strides = array<i32>} : memref<10x32xbf16, #tpu.memory_space<vmem>>, vector<10x32xbf16>,
    return
  }
  func.func @transform_0(%arg0: i32) -> (i32, i32) {
    %c0_i32 = arith.constant 0 : i32
    %c0_i32_0 = arith.constant 0 : i32
    return %arg0, %c0_i32 : i32, i32
  }
  func.func @transform_1(%arg0: i32) -> (i32, i32) {
    %c0_i32 = arith.constant 0 : i32
    %c0_i32_0 = arith.constant 0 : i32
    %c0_i32_1 = arith.constant 0 : i32
    return %c0_i32, %c0_i32_0 : i32, i32
  }
  func.func @transform_2(%arg0: i32) -> (i32, i32) {
    %c0_i32 = arith.constant 0 : i32
    %c0_i32_0 = arith.constant 0 : i32
    %c0_i32_1 = arith.constant 0 : i32
    return %c0_i32, %c0_i32_0 : i32, i32
  }
  func.func @transform_3(%arg0: i32) -> (i32, i32) {
    %c0_i32 = arith.constant 0 : i32
    %c0_i32_0 = arith.constant 0 : i32
    %c0_i32_1 = arith.constant 0 : i32
    return %c0_i32, %c0_i32_0 : i32, i32
  }
  func.func @transform_4(%arg0: i32) -> (i32, i32) {
    %c0_i32 = arith.constant 0 : i32
    %c0_i32_0 = arith.constant 0 : i32
    %c0_i32_1 = arith.constant 0 : i32
    return %c0_i32, %c0_i32_0 : i32, i32
  }
  func.func @transform_5(%arg0: i32) -> (i32, i32) {
    %c0_i32 = arith.constant 0 : i32
    %c0_i32_0 = arith.constant 0 : i32
    return %arg0, %c0_i32 : i32, i32
  }
  func.func @transform_6(%arg0: i32) -> (i32, i32) {
    %c0_i32 = arith.constant 0 : i32
    %c0_i32_0 = arith.constant 0 : i32
    return %arg0, %c0_i32 : i32, i32
  }
  func.func @transform_7(%arg0: i32) -> (i32, i32) {
    %c0_i32 = arith.constant 0 : i32
    %c0_i32_0 = arith.constant 0 : i32
    return %arg0, %c0_i32 : i32, i32
  }
}

module attributes {stable_mosaic.version = 11 : i64} {
  func.func @_fused_linear_kernel(%arg0: i32, %arg1: memref<10x32xbf16, #tpu.memory_space<vmem>>, %arg2: memref<32x32xbf16, #tpu.memory_space<vmem>>, %arg3: memref<1x32xf32, #tpu.memory_space<vmem>>, %arg4: memref<10x32xf32, #tpu.memory_space<vmem>>, %arg5: memref<10x32xf32, #tpu.memory_space<vmem>>) attributes {dimension_semantics = [#tpu.dimension_semantics<parallel>], iteration_bounds = array<i64: 1>, scalar_prefetch = 0 : i64, scratch_operands = 0 : i64, tpu.core_type = #tpu.core_type<tc>, window_params = [{transform_indices = @transform_0, window_bounds = array<i64: 10, 32>}, {pipeline_mode = #tpu.pipeline_mode<synchronous>, transform_indices = @transform_1, window_bounds = array<i64: 32, 32>}, {pipeline_mode = #tpu.pipeline_mode<synchronous>, transform_indices = @transform_2, window_bounds = array<i64: 1, 32>}, {transform_indices = @transform_3, window_bounds = array<i64: 10, 32>}, {transform_indices = @transform_4, window_bounds = array<i64: 10, 32>}]} {
    %c0 = arith.constant 0 : index
    %c0_0 = arith.constant 0 : index
    %0 = vector.load %arg1[%c0, %c0_0] : memref<10x32xbf16, #tpu.memory_space<vmem>>, vector<10x32xbf16>
    %c0_1 = arith.constant 0 : index
    %c0_2 = arith.constant 0 : index
    %1 = vector.load %arg2[%c0_1, %c0_2] : memref<32x32xbf16, #tpu.memory_space<vmem>>, vector<32x32xbf16>
    %cst = arith.constant dense<0.000000e+00> : vector<10x32xf32>
    %2 = tpu.matmul %0, %1, %cst {dimension_numbers = #tpu.dot_dimension_numbers<[1], [0], [0], [1], [0, 0, 1, 1], [], []>} : vector<10x32xbf16>, vector<32x32xbf16>, vector<10x32xf32> -> vector<10x32xf32>
    %c0_3 = arith.constant 0 : index
    %c0_4 = arith.constant 0 : index
    %3 = vector.load %arg3[%c0_3, %c0_4] : memref<1x32xf32, #tpu.memory_space<vmem>>, vector<1x32xf32>
    %4 = vector.broadcast %3 : vector<1x32xf32> to vector<10x32xf32>
    %5 = arith.addf %2, %4 : vector<10x32xf32>
    %c0_5 = arith.constant 0 : index
    %c0_6 = arith.constant 0 : index
    %6 = vector.load %arg4[%c0_5, %c0_6] : memref<10x32xf32, #tpu.memory_space<vmem>>, vector<10x32xf32>
    %7 = arith.addf %5, %6 : vector<10x32xf32>
    %c0_7 = arith.constant 0 : index
    %c0_8 = arith.constant 0 : index
    %8 = vector.load %arg5[%c0_7, %c0_8] : memref<10x32xf32, #tpu.memory_space<vmem>>, vector<10x32xf32>
    tpu.vector_store %arg5[%c0_7, %c0_8], %7 {strides = array<i32>} : memref<10x32xf32, #tpu.memory_space<vmem>>, vector<10x32xf32>,
    return
  }
  func.func @transform_0(%arg0: i32) -> (i32, i32) {
    %c0_i32 = arith.constant 0 : i32
    %c0_i32_0 = arith.constant 0 : i32
    return %arg0, %c0_i32 : i32, i32
  }
  func.func @transform_1(%arg0: i32) -> (i32, i32) {
    %c0_i32 = arith.constant 0 : i32
    %c0_i32_0 = arith.constant 0 : i32
    %c0_i32_1 = arith.constant 0 : i32
    return %c0_i32, %c0_i32_0 : i32, i32
  }
  func.func @transform_2(%arg0: i32) -> (i32, i32) {
    %c0_i32 = arith.constant 0 : i32
    %c0_i32_0 = arith.constant 0 : i32
    %c0_i32_1 = arith.constant 0 : i32
    return %c0_i32, %c0_i32_0 : i32, i32
  }
  func.func @transform_3(%arg0: i32) -> (i32, i32) {
    %c0_i32 = arith.constant 0 : i32
    %c0_i32_0 = arith.constant 0 : i32
    return %arg0, %c0_i32 : i32, i32
  }
  func.func @transform_4(%arg0: i32) -> (i32, i32) {
    %c0_i32 = arith.constant 0 : i32
    %c0_i32_0 = arith.constant 0 : i32
    return %arg0, %c0_i32 : i32, i32
  }
}

module attributes {stable_mosaic.version = 11 : i64} {
  func.func @_attention_kernel(%arg0: i32, %arg1: i32, %arg2: memref<1x5x32xbf16, #tpu.memory_space<vmem>>, %arg3: memref<1x5x32xbf16, #tpu.memory_space<vmem>>, %arg4: memref<1x5x32xbf16, #tpu.memory_space<vmem>>, %arg5: memref<1x5x32xbf16, #tpu.memory_space<vmem>>) attributes {dimension_semantics = [#tpu.dimension_semantics<parallel>, #tpu.dimension_semantics<parallel>], iteration_bounds = array<i64: 2, 1>, scalar_prefetch = 0 : i64, scratch_operands = 0 : i64, tpu.core_type = #tpu.core_type<tc>, window_params = [{transform_indices = @transform_0, window_bounds = array<i64: 1, 5, 32>}, {transform_indices = @transform_1, window_bounds = array<i64: 1, 5, 32>}, {transform_indices = @transform_2, window_bounds = array<i64: 1, 5, 32>}, {transform_indices = @transform_3, window_bounds = array<i64: 1, 5, 32>}]} {
    %c0 = arith.constant 0 : index
    %c0_0 = arith.constant 0 : index
    %c0_1 = arith.constant 0 : index
    %0 = vector.load %arg2[%c0, %c0_0, %c0_1] : memref<1x5x32xbf16, #tpu.memory_space<vmem>>, vector<1x5x32xbf16>
    %1 = vector.shape_cast %0 : vector<1x5x32xbf16> to vector<5x32xbf16>
    %c0_2 = arith.constant 0 : index
    %c0_3 = arith.constant 0 : index
    %c0_4 = arith.constant 0 : index
    %2 = vector.load %arg3[%c0_2, %c0_3, %c0_4] : memref<1x5x32xbf16, #tpu.memory_space<vmem>>, vector<1x5x32xbf16>
    %3 = vector.shape_cast %2 : vector<1x5x32xbf16> to vector<5x32xbf16>
    %c0_5 = arith.constant 0 : index
    %c0_6 = arith.constant 0 : index
    %c0_7 = arith.constant 0 : index
    %4 = vector.load %arg4[%c0_5, %c0_6, %c0_7] : memref<1x5x32xbf16, #tpu.memory_space<vmem>>, vector<1x5x32xbf16>
    %5 = vector.shape_cast %4 : vector<1x5x32xbf16> to vector<5x32xbf16>
    %6 = vector.extract_strided_slice %1 {offsets = [0, 0], sizes = [5, 8], strides = [1, 1]} : vector<5x32xbf16> to vector<5x8xbf16>
    %7 = vector.extract_strided_slice %3 {offsets = [0, 0], sizes = [5, 8], strides = [1, 1]} : vector<5x32xbf16> to vector<5x8xbf16>
    %cst = arith.constant dense<0.000000e+00> : vector<5x5xf32>
    %8 = tpu.matmul %6, %7, %cst {dimension_numbers = #tpu.dot_dimension_numbers<[1], [1], [0], [0], [0, 0, 1, 0], [], []>} : vector<5x8xbf16>, vector<5x8xbf16>, vector<5x5xf32> -> vector<5x5xf32>
    %cst_8 = arith.constant dense<0xFF800000> : vector<5xf32>
    %9 = vector.multi_reduction <maximumf>, %8, %cst_8 [1] : vector<5x5xf32> to vector<5xf32>
    %10 = vector.shape_cast %9 : vector<5xf32> to vector<5x1xf32>
    %11 = vector.broadcast %10 : vector<5x1xf32> to vector<5x5xf32>
    %12 = arith.subf %8, %11 : vector<5x5xf32>
    %13 = math.exp %12 : vector<5x5xf32>
    %cst_9 = arith.constant dense<0.000000e+00> : vector<5xf32>
    %14 = vector.multi_reduction <add>, %13, %cst_9 [1] : vector<5x5xf32> to vector<5xf32>
    %15 = vector.shape_cast %14 : vector<5xf32> to vector<5x1xf32>
    %16 = arith.truncf %13 : vector<5x5xf32> to vector<5x5xbf16>
    %17 = vector.extract_strided_slice %5 {offsets = [0, 0], sizes = [5, 8], strides = [1, 1]} : vector<5x32xbf16> to vector<5x8xbf16>
    %cst_10 = arith.constant dense<0.000000e+00> : vector<5x8xf32>
    %18 = tpu.matmul %16, %17, %cst_10 {dimension_numbers = #tpu.dot_dimension_numbers<[1], [0], [0], [1], [0, 0, 1, 1], [], []>} : vector<5x5xbf16>, vector<5x8xbf16>, vector<5x8xf32> -> vector<5x8xf32>
    %19 = tpu.reciprocal %15 {approx = true} : vector<5x1xf32> -> vector<5x1xf32>
    %20 = vector.broadcast %19 : vector<5x1xf32> to vector<5x8xf32>
    %21 = arith.mulf %18, %20 : vector<5x8xf32>
    %22 = arith.truncf %21 : vector<5x8xf32> to vector<5x8xbf16>
    %c0_11 = arith.constant 0 : index
    %c0_12 = arith.constant 0 : index
    %c0_13 = arith.constant 0 : index
    %23 = vector.load %arg5[%c0_11, %c0_12, %c0_13] : memref<1x5x32xbf16, #tpu.memory_space<vmem>>, vector<1x5x8xbf16>
    %24 = vector.shape_cast %23 : vector<1x5x8xbf16> to vector<5x8xbf16>
    %25 = vector.shape_cast %22 : vector<5x8xbf16> to vector<1x5x8xbf16>
    tpu.vector_store %arg5[%c0_11, %c0_12, %c0_13], %25 {strides = array<i32>} : memref<1x5x32xbf16, #tpu.memory_space<vmem>>, vector<1x5x8xbf16>,
    %26 = vector.extract_strided_slice %1 {offsets = [0, 8], sizes = [5, 8], strides = [1, 1]} : vector<5x32xbf16> to vector<5x8xbf16>
    %27 = vector.extract_strided_slice %3 {offsets = [0, 8], sizes = [5, 8], strides = [1, 1]} : vector<5x32xbf16> to vector<5x8xbf16>
    %cst_14 = arith.constant dense<0.000000e+00> : vector<5x5xf32>
    %28 = tpu.matmul %26, %27, %cst_14 {dimension_numbers = #tpu.dot_dimension_numbers<[1], [1], [0], [0], [0, 0, 1, 0], [], []>} : vector<5x8xbf16>, vector<5x8xbf16>, vector<5x5xf32> -> vector<5x5xf32>
    %cst_15 = arith.constant dense<0xFF800000> : vector<5xf32>
    %29 = vector.multi_reduction <maximumf>, %28, %cst_15 [1] : vector<5x5xf32> to vector<5xf32>
    %30 = vector.shape_cast %29 : vector<5xf32> to vector<5x1xf32>
    %31 = vector.broadcast %30 : vector<5x1xf32> to vector<5x5xf32>
    %32 = arith.subf %28, %31 : vector<5x5xf32>
    %33 = math.exp %32 : vector<5x5xf32>
    %cst_16 = arith.constant dense<0.000000e+00> : vector<5xf32>
    %34 = vector.multi_reduction <add>, %33, %cst_16 [1] : vector<5x5xf32> to vector<5xf32>
    %35 = vector.shape_cast %34 : vector<5xf32> to vector<5x1xf32>
    %36 = arith.truncf %33 : vector<5x5xf32> to vector<5x5xbf16>
    %37 = vector.extract_strided_slice %5 {offsets = [0, 8], sizes = [5, 8], strides = [1, 1]} : vector<5x32xbf16> to vector<5x8xbf16>
    %cst_17 = arith.constant dense<0.000000e+00> : vector<5x8xf32>
    %38 = tpu.matmul %36, %37, %cst_17 {dimension_numbers = #tpu.dot_dimension_numbers<[1], [0], [0], [1], [0, 0, 1, 1], [], []>} : vector<5x5xbf16>, vector<5x8xbf16>, vector<5x8xf32> -> vector<5x8xf32>
    %39 = tpu.reciprocal %35 {approx = true} : vector<5x1xf32> -> vector<5x1xf32>
    %40 = vector.broadcast %39 : vector<5x1xf32> to vector<5x8xf32>
    %41 = arith.mulf %38, %40 : vector<5x8xf32>
    %42 = arith.truncf %41 : vector<5x8xf32> to vector<5x8xbf16>
    %c0_18 = arith.constant 0 : index
    %c0_19 = arith.constant 0 : index
    %c8 = arith.constant 8 : index
    %43 = vector.load %arg5[%c0_18, %c0_19, %c8] : memref<1x5x32xbf16, #tpu.memory_space<vmem>>, vector<1x5x8xbf16>
    %44 = vector.shape_cast %43 : vector<1x5x8xbf16> to vector<5x8xbf16>
    %45 = vector.shape_cast %42 : vector<5x8xbf16> to vector<1x5x8xbf16>
    tpu.vector_store %arg5[%c0_18, %c0_19, %c8], %45 {strides = array<i32>} : memref<1x5x32xbf16, #tpu.memory_space<vmem>>, vector<1x5x8xbf16>,
    %46 = vector.extract_strided_slice %1 {offsets = [0, 16], sizes = [5, 8], strides = [1, 1]} : vector<5x32xbf16> to vector<5x8xbf16>
    %47 = vector.extract_strided_slice %3 {offsets = [0, 16], sizes = [5, 8], strides = [1, 1]} : vector<5x32xbf16> to vector<5x8xbf16>
    %cst_20 = arith.constant dense<0.000000e+00> : vector<5x5xf32>
    %48 = tpu.matmul %46, %47, %cst_20 {dimension_numbers = #tpu.dot_dimension_numbers<[1], [1], [0], [0], [0, 0, 1, 0], [], []>} : vector<5x8xbf16>, vector<5x8xbf16>, vector<5x5xf32> -> vector<5x5xf32>
    %cst_21 = arith.constant dense<0xFF800000> : vector<5xf32>
    %49 = vector.multi_reduction <maximumf>, %48, %cst_21 [1] : vector<5x5xf32> to vector<5xf32>
    %50 = vector.shape_cast %49 : vector<5xf32> to vector<5x1xf32>
    %51 = vector.broadcast %50 : vector<5x1xf32> to vector<5x5xf32>
    %52 = arith.subf %48, %51 : vector<5x5xf32>
    %53 = math.exp %52 : vector<5x5xf32>
    %cst_22 = arith.constant dense<0.000000e+00> : vector<5xf32>
    %54 = vector.multi_reduction <add>, %53, %cst_22 [1] : vector<5x5xf32> to vector<5xf32>
    %55 = vector.shape_cast %54 : vector<5xf32> to vector<5x1xf32>
    %56 = arith.truncf %53 : vector<5x5xf32> to vector<5x5xbf16>
    %57 = vector.extract_strided_slice %5 {offsets = [0, 16], sizes = [5, 8], strides = [1, 1]} : vector<5x32xbf16> to vector<5x8xbf16>
    %cst_23 = arith.constant dense<0.000000e+00> : vector<5x8xf32>
    %58 = tpu.matmul %56, %57, %cst_23 {dimension_numbers = #tpu.dot_dimension_numbers<[1], [0], [0], [1], [0, 0, 1, 1], [], []>} : vector<5x5xbf16>, vector<5x8xbf16>, vector<5x8xf32> -> vector<5x8xf32>
    %59 = tpu.reciprocal %55 {approx = true} : vector<5x1xf32> -> vector<5x1xf32>
    %60 = vector.broadcast %59 : vector<5x1xf32> to vector<5x8xf32>
    %61 = arith.mulf %58, %60 : vector<5x8xf32>
    %62 = arith.truncf %61 : vector<5x8xf32> to vector<5x8xbf16>
    %c0_24 = arith.constant 0 : index
    %c0_25 = arith.constant 0 : index
    %c16 = arith.constant 16 : index
    %63 = vector.load %arg5[%c0_24, %c0_25, %c16] : memref<1x5x32xbf16, #tpu.memory_space<vmem>>, vector<1x5x8xbf16>
    %64 = vector.shape_cast %63 : vector<1x5x8xbf16> to vector<5x8xbf16>
    %65 = vector.shape_cast %62 : vector<5x8xbf16> to vector<1x5x8xbf16>
    tpu.vector_store %arg5[%c0_24, %c0_25, %c16], %65 {strides = array<i32>} : memref<1x5x32xbf16, #tpu.memory_space<vmem>>, vector<1x5x8xbf16>,
    %66 = vector.extract_strided_slice %1 {offsets = [0, 24], sizes = [5, 8], strides = [1, 1]} : vector<5x32xbf16> to vector<5x8xbf16>
    %67 = vector.extract_strided_slice %3 {offsets = [0, 24], sizes = [5, 8], strides = [1, 1]} : vector<5x32xbf16> to vector<5x8xbf16>
    %cst_26 = arith.constant dense<0.000000e+00> : vector<5x5xf32>
    %68 = tpu.matmul %66, %67, %cst_26 {dimension_numbers = #tpu.dot_dimension_numbers<[1], [1], [0], [0], [0, 0, 1, 0], [], []>} : vector<5x8xbf16>, vector<5x8xbf16>, vector<5x5xf32> -> vector<5x5xf32>
    %cst_27 = arith.constant dense<0xFF800000> : vector<5xf32>
    %69 = vector.multi_reduction <maximumf>, %68, %cst_27 [1] : vector<5x5xf32> to vector<5xf32>
    %70 = vector.shape_cast %69 : vector<5xf32> to vector<5x1xf32>
    %71 = vector.broadcast %70 : vector<5x1xf32> to vector<5x5xf32>
    %72 = arith.subf %68, %71 : vector<5x5xf32>
    %73 = math.exp %72 : vector<5x5xf32>
    %cst_28 = arith.constant dense<0.000000e+00> : vector<5xf32>
    %74 = vector.multi_reduction <add>, %73, %cst_28 [1] : vector<5x5xf32> to vector<5xf32>
    %75 = vector.shape_cast %74 : vector<5xf32> to vector<5x1xf32>
    %76 = arith.truncf %73 : vector<5x5xf32> to vector<5x5xbf16>
    %77 = vector.extract_strided_slice %5 {offsets = [0, 24], sizes = [5, 8], strides = [1, 1]} : vector<5x32xbf16> to vector<5x8xbf16>
    %cst_29 = arith.constant dense<0.000000e+00> : vector<5x8xf32>
    %78 = tpu.matmul %76, %77, %cst_29 {dimension_numbers = #tpu.dot_dimension_numbers<[1], [0], [0], [1], [0, 0, 1, 1], [], []>} : vector<5x5xbf16>, vector<5x8xbf16>, vector<5x8xf32> -> vector<5x8xf32>
    %79 = tpu.reciprocal %75 {approx = true} : vector<5x1xf32> -> vector<5x1xf32>
    %80 = vector.broadcast %79 : vector<5x1xf32> to vector<5x8xf32>
    %81 = arith.mulf %78, %80 : vector<5x8xf32>
    %82 = arith.truncf %81 : vector<5x8xf32> to vector<5x8xbf16>
    %c0_30 = arith.constant 0 : index
    %c0_31 = arith.constant 0 : index
    %c24 = arith.constant 24 : index
    %83 = vector.load %arg5[%c0_30, %c0_31, %c24] : memref<1x5x32xbf16, #tpu.memory_space<vmem>>, vector<1x5x8xbf16>
    %84 = vector.shape_cast %83 : vector<1x5x8xbf16> to vector<5x8xbf16>
    %85 = vector.shape_cast %82 : vector<5x8xbf16> to vector<1x5x8xbf16>
    tpu.vector_store %arg5[%c0_30, %c0_31, %c24], %85 {strides = array<i32>} : memref<1x5x32xbf16, #tpu.memory_space<vmem>>, vector<1x5x8xbf16>,
    return
  }
  func.func @transform_0(%arg0: i32, %arg1: i32) -> (i32, i32, i32) {
    %c0_i32 = arith.constant 0 : i32
    %c0_i32_0 = arith.constant 0 : i32
    return %arg0, %c0_i32, %arg1 : i32, i32, i32
  }
  func.func @transform_1(%arg0: i32, %arg1: i32) -> (i32, i32, i32) {
    %c0_i32 = arith.constant 0 : i32
    %c0_i32_0 = arith.constant 0 : i32
    return %arg0, %c0_i32, %arg1 : i32, i32, i32
  }
  func.func @transform_2(%arg0: i32, %arg1: i32) -> (i32, i32, i32) {
    %c0_i32 = arith.constant 0 : i32
    %c0_i32_0 = arith.constant 0 : i32
    return %arg0, %c0_i32, %arg1 : i32, i32, i32
  }
  func.func @transform_3(%arg0: i32, %arg1: i32) -> (i32, i32, i32) {
    %c0_i32 = arith.constant 0 : i32
    %c0_i32_0 = arith.constant 0 : i32
    return %arg0, %c0_i32, %arg1 : i32, i32, i32
  }
}

module attributes {stable_mosaic.version = 11 : i64} {
  func.func @_fused_linear_kernel(%arg0: i32, %arg1: memref<10x64xbf16, #tpu.memory_space<vmem>>, %arg2: memref<64x32xbf16, #tpu.memory_space<vmem>>, %arg3: memref<1x32xf32, #tpu.memory_space<vmem>>, %arg4: memref<10x32xf32, #tpu.memory_space<vmem>>, %arg5: memref<10x32xf32, #tpu.memory_space<vmem>>) attributes {dimension_semantics = [#tpu.dimension_semantics<parallel>], iteration_bounds = array<i64: 1>, scalar_prefetch = 0 : i64, scratch_operands = 0 : i64, tpu.core_type = #tpu.core_type<tc>, window_params = [{transform_indices = @transform_0, window_bounds = array<i64: 10, 64>}, {pipeline_mode = #tpu.pipeline_mode<synchronous>, transform_indices = @transform_1, window_bounds = array<i64: 64, 32>}, {pipeline_mode = #tpu.pipeline_mode<synchronous>, transform_indices = @transform_2, window_bounds = array<i64: 1, 32>}, {transform_indices = @transform_3, window_bounds = array<i64: 10, 32>}, {transform_indices = @transform_4, window_bounds = array<i64: 10, 32>}]} {
    %c0 = arith.constant 0 : index
    %c0_0 = arith.constant 0 : index
    %0 = vector.load %arg1[%c0, %c0_0] : memref<10x64xbf16, #tpu.memory_space<vmem>>, vector<10x64xbf16>
    %c0_1 = arith.constant 0 : index
    %c0_2 = arith.constant 0 : index
    %1 = vector.load %arg2[%c0_1, %c0_2] : memref<64x32xbf16, #tpu.memory_space<vmem>>, vector<64x32xbf16>
    %cst = arith.constant dense<0.000000e+00> : vector<10x32xf32>
    %2 = tpu.matmul %0, %1, %cst {dimension_numbers = #tpu.dot_dimension_numbers<[1], [0], [0], [1], [0, 0, 1, 1], [], []>} : vector<10x64xbf16>, vector<64x32xbf16>, vector<10x32xf32> -> vector<10x32xf32>
    %c0_3 = arith.constant 0 : index
    %c0_4 = arith.constant 0 : index
    %3 = vector.load %arg3[%c0_3, %c0_4] : memref<1x32xf32, #tpu.memory_space<vmem>>, vector<1x32xf32>
    %4 = vector.broadcast %3 : vector<1x32xf32> to vector<10x32xf32>
    %5 = arith.addf %2, %4 : vector<10x32xf32>
    %c0_5 = arith.constant 0 : index
    %c0_6 = arith.constant 0 : index
    %6 = vector.load %arg4[%c0_5, %c0_6] : memref<10x32xf32, #tpu.memory_space<vmem>>, vector<10x32xf32>
    %7 = arith.addf %5, %6 : vector<10x32xf32>
    %c0_7 = arith.constant 0 : index
    %c0_8 = arith.constant 0 : index
    %8 = vector.load %arg5[%c0_7, %c0_8] : memref<10x32xf32, #tpu.memory_space<vmem>>, vector<10x32xf32>
    tpu.vector_store %arg5[%c0_7, %c0_8], %7 {strides = array<i32>} : memref<10x32xf32, #tpu.memory_space<vmem>>, vector<10x32xf32>,
    return
  }
  func.func @transform_0(%arg0: i32) -> (i32, i32) {
    %c0_i32 = arith.constant 0 : i32
    %c0_i32_0 = arith.constant 0 : i32
    return %arg0, %c0_i32 : i32, i32
  }
  func.func @transform_1(%arg0: i32) -> (i32, i32) {
    %c0_i32 = arith.constant 0 : i32
    %c0_i32_0 = arith.constant 0 : i32
    %c0_i32_1 = arith.constant 0 : i32
    return %c0_i32, %c0_i32_0 : i32, i32
  }
  func.func @transform_2(%arg0: i32) -> (i32, i32) {
    %c0_i32 = arith.constant 0 : i32
    %c0_i32_0 = arith.constant 0 : i32
    %c0_i32_1 = arith.constant 0 : i32
    return %c0_i32, %c0_i32_0 : i32, i32
  }
  func.func @transform_3(%arg0: i32) -> (i32, i32) {
    %c0_i32 = arith.constant 0 : i32
    %c0_i32_0 = arith.constant 0 : i32
    return %arg0, %c0_i32 : i32, i32
  }
  func.func @transform_4(%arg0: i32) -> (i32, i32) {
    %c0_i32 = arith.constant 0 : i32
    %c0_i32_0 = arith.constant 0 : i32
    return %arg0, %c0_i32 : i32, i32
  }
}

module attributes {stable_mosaic.version = 11 : i64} {
  func.func @_layernorm_kernel(%arg0: i32, %arg1: memref<10x32xf32, #tpu.memory_space<vmem>>, %arg2: memref<1x32xf32, #tpu.memory_space<vmem>>, %arg3: memref<1x32xf32, #tpu.memory_space<vmem>>, %arg4: memref<10x32xf32, #tpu.memory_space<vmem>>) attributes {dimension_semantics = [#tpu.dimension_semantics<parallel>], iteration_bounds = array<i64: 1>, scalar_prefetch = 0 : i64, scratch_operands = 0 : i64, tpu.core_type = #tpu.core_type<tc>, window_params = [{transform_indices = @transform_0, window_bounds = array<i64: 10, 32>}, {pipeline_mode = #tpu.pipeline_mode<synchronous>, transform_indices = @transform_1, window_bounds = array<i64: 1, 32>}, {pipeline_mode = #tpu.pipeline_mode<synchronous>, transform_indices = @transform_2, window_bounds = array<i64: 1, 32>}, {transform_indices = @transform_3, window_bounds = array<i64: 10, 32>}]} {
    %c0 = arith.constant 0 : index
    %c0_0 = arith.constant 0 : index
    %0 = vector.load %arg1[%c0, %c0_0] : memref<10x32xf32, #tpu.memory_space<vmem>>, vector<10x32xf32>
    %c0_1 = arith.constant 0 : index
    %c0_2 = arith.constant 0 : index
    %1 = vector.load %arg2[%c0_1, %c0_2] : memref<1x32xf32, #tpu.memory_space<vmem>>, vector<1x32xf32>
    %c0_3 = arith.constant 0 : index
    %c0_4 = arith.constant 0 : index
    %2 = vector.load %arg3[%c0_3, %c0_4] : memref<1x32xf32, #tpu.memory_space<vmem>>, vector<1x32xf32>
    %cst = arith.constant dense<0.000000e+00> : vector<10xf32>
    %3 = vector.multi_reduction <add>, %0, %cst [1] : vector<10x32xf32> to vector<10xf32>
    %4 = vector.shape_cast %3 : vector<10xf32> to vector<10x1xf32>
    %cst_5 = arith.constant 3.200000e+01 : f32
    %5 = vector.broadcast %cst_5 : f32 to vector<10x1xf32>
    %6 = arith.divf %4, %5 : vector<10x1xf32>
    %7 = vector.broadcast %6 : vector<10x1xf32> to vector<10x32xf32>
    %8 = arith.subf %0, %7 : vector<10x32xf32>
    %9 = arith.mulf %8, %8 : vector<10x32xf32>
    %cst_6 = arith.constant dense<0.000000e+00> : vector<10xf32>
    %10 = vector.multi_reduction <add>, %9, %cst_6 [1] : vector<10x32xf32> to vector<10xf32>
    %11 = vector.shape_cast %10 : vector<10xf32> to vector<10x1xf32>
    %cst_7 = arith.constant 3.200000e+01 : f32
    %12 = vector.broadcast %cst_7 : f32 to vector<10x1xf32>
    %13 = arith.divf %11, %12 : vector<10x1xf32>
    %14 = vector.broadcast %6 : vector<10x1xf32> to vector<10x32xf32>
    %15 = arith.subf %0, %14 : vector<10x32xf32>
    %cst_8 = arith.constant 9.99999997E-7 : f32
    %16 = vector.broadcast %cst_8 : f32 to vector<10x1xf32>
    %17 = arith.addf %13, %16 : vector<10x1xf32>
    %18 = math.rsqrt %17 : vector<10x1xf32>
    %19 = vector.broadcast %18 : vector<10x1xf32> to vector<10x32xf32>
    %20 = arith.mulf %15, %19 : vector<10x32xf32>
    %21 = vector.broadcast %1 : vector<1x32xf32> to vector<10x32xf32>
    %22 = arith.mulf %20, %21 : vector<10x32xf32>
    %23 = vector.broadcast %2 : vector<1x32xf32> to vector<10x32xf32>
    %24 = arith.addf %22, %23 : vector<10x32xf32>
    %c0_9 = arith.constant 0 : index
    %c0_10 = arith.constant 0 : index
    %25 = vector.load %arg4[%c0_9, %c0_10] : memref<10x32xf32, #tpu.memory_space<vmem>>, vector<10x32xf32>
    tpu.vector_store %arg4[%c0_9, %c0_10], %24 {strides = array<i32>} : memref<10x32xf32, #tpu.memory_space<vmem>>, vector<10x32xf32>,
    return
  }
  func.func @transform_0(%arg0: i32) -> (i32, i32) {
    %c0_i32 = arith.constant 0 : i32
    %c0_i32_0 = arith.constant 0 : i32
    return %arg0, %c0_i32 : i32, i32
  }
  func.func @transform_1(%arg0: i32) -> (i32, i32) {
    %c0_i32 = arith.constant 0 : i32
    %c0_i32_0 = arith.constant 0 : i32
    %c0_i32_1 = arith.constant 0 : i32
    return %c0_i32, %c0_i32_0 : i32, i32
  }
  func.func @transform_2(%arg0: i32) -> (i32, i32) {
    %c0_i32 = arith.constant 0 : i32
    %c0_i32_0 = arith.constant 0 : i32
    %c0_i32_1 = arith.constant 0 : i32
    return %c0_i32, %c0_i32_0 : i32, i32
  }
  func.func @transform_3(%arg0: i32) -> (i32, i32) {
    %c0_i32 = arith.constant 0 : i32
    %c0_i32_0 = arith.constant 0 : i32
    return %arg0, %c0_i32 : i32, i32
  }
}

module attributes {stable_mosaic.version = 11 : i64} {
  func.func @_fused_linear_kernel(%arg0: i32, %arg1: memref<10x32xf32, #tpu.memory_space<vmem>>, %arg2: memref<1x32xf32, #tpu.memory_space<vmem>>, %arg3: memref<1x32xf32, #tpu.memory_space<vmem>>, %arg4: memref<32x64xbf16, #tpu.memory_space<vmem>>, %arg5: memref<1x64xf32, #tpu.memory_space<vmem>>, %arg6: memref<10x64xbf16, #tpu.memory_space<vmem>>) attributes {dimension_semantics = [#tpu.dimension_semantics<parallel>], iteration_bounds = array<i64: 1>, scalar_prefetch = 0 : i64, scratch_operands = 0 : i64, tpu.core_type = #tpu.core_type<tc>, window_params = [{transform_indices = @transform_0, window_bounds = array<i64: 10, 32>}, {pipeline_mode = #tpu.pipeline_mode<synchronous>, transform_indices = @transform_1, window_bounds = array<i64: 1, 32>}, {pipeline_mode = #tpu.pipeline_mode<synchronous>, transform_indices = @transform_2, window_bounds = array<i64: 1, 32>}, {pipeline_mode = #tpu.pipeline_mode<synchronous>, transform_indices = @transform_3, window_bounds = array<i64: 32, 64>}, {pipeline_mode = #tpu.pipeline_mode<synchronous>, transform_indices = @transform_4, window_bounds = array<i64: 1, 64>}, {transform_indices = @transform_5, window_bounds = array<i64: 10, 64>}]} {
    %c0 = arith.constant 0 : index
    %c0_0 = arith.constant 0 : index
    %0 = vector.load %arg1[%c0, %c0_0] : memref<10x32xf32, #tpu.memory_space<vmem>>, vector<10x32xf32>
    %c0_1 = arith.constant 0 : index
    %c0_2 = arith.constant 0 : index
    %1 = vector.load %arg2[%c0_1, %c0_2] : memref<1x32xf32, #tpu.memory_space<vmem>>, vector<1x32xf32>
    %c0_3 = arith.constant 0 : index
    %c0_4 = arith.constant 0 : index
    %2 = vector.load %arg3[%c0_3, %c0_4] : memref<1x32xf32, #tpu.memory_space<vmem>>, vector<1x32xf32>
    %cst = arith.constant dense<0.000000e+00> : vector<10xf32>
    %3 = vector.multi_reduction <add>, %0, %cst [1] : vector<10x32xf32> to vector<10xf32>
    %4 = vector.shape_cast %3 : vector<10xf32> to vector<10x1xf32>
    %cst_5 = arith.constant 3.200000e+01 : f32
    %5 = vector.broadcast %cst_5 : f32 to vector<10x1xf32>
    %6 = arith.divf %4, %5 : vector<10x1xf32>
    %7 = vector.broadcast %6 : vector<10x1xf32> to vector<10x32xf32>
    %8 = arith.subf %0, %7 : vector<10x32xf32>
    %9 = arith.mulf %8, %8 : vector<10x32xf32>
    %cst_6 = arith.constant dense<0.000000e+00> : vector<10xf32>
    %10 = vector.multi_reduction <add>, %9, %cst_6 [1] : vector<10x32xf32> to vector<10xf32>
    %11 = vector.shape_cast %10 : vector<10xf32> to vector<10x1xf32>
    %cst_7 = arith.constant 3.200000e+01 : f32
    %12 = vector.broadcast %cst_7 : f32 to vector<10x1xf32>
    %13 = arith.divf %11, %12 : vector<10x1xf32>
    %14 = vector.broadcast %6 : vector<10x1xf32> to vector<10x32xf32>
    %15 = arith.subf %0, %14 : vector<10x32xf32>
    %cst_8 = arith.constant 9.99999997E-7 : f32
    %16 = vector.broadcast %cst_8 : f32 to vector<10x1xf32>
    %17 = arith.addf %13, %16 : vector<10x1xf32>
    %18 = math.rsqrt %17 : vector<10x1xf32>
    %19 = vector.broadcast %18 : vector<10x1xf32> to vector<10x32xf32>
    %20 = arith.mulf %15, %19 : vector<10x32xf32>
    %21 = vector.broadcast %1 : vector<1x32xf32> to vector<10x32xf32>
    %22 = arith.mulf %20, %21 : vector<10x32xf32>
    %23 = vector.broadcast %2 : vector<1x32xf32> to vector<10x32xf32>
    %24 = arith.addf %22, %23 : vector<10x32xf32>
    %25 = arith.truncf %24 : vector<10x32xf32> to vector<10x32xbf16>
    %c0_9 = arith.constant 0 : index
    %c0_10 = arith.constant 0 : index
    %26 = vector.load %arg4[%c0_9, %c0_10] : memref<32x64xbf16, #tpu.memory_space<vmem>>, vector<32x64xbf16>
    %cst_11 = arith.constant dense<0.000000e+00> : vector<10x64xf32>
    %27 = tpu.matmul %25, %26, %cst_11 {dimension_numbers = #tpu.dot_dimension_numbers<[1], [0], [0], [1], [0, 0, 1, 1], [], []>} : vector<10x32xbf16>, vector<32x64xbf16>, vector<10x64xf32> -> vector<10x64xf32>
    %c0_12 = arith.constant 0 : index
    %c0_13 = arith.constant 0 : index
    %28 = vector.load %arg5[%c0_12, %c0_13] : memref<1x64xf32, #tpu.memory_space<vmem>>, vector<1x64xf32>
    %29 = vector.broadcast %28 : vector<1x64xf32> to vector<10x64xf32>
    %30 = arith.addf %27, %29 : vector<10x64xf32>
    %cst_14 = arith.constant 5.000000e-01 : f32
    %31 = vector.broadcast %cst_14 : f32 to vector<10x64xf32>
    %32 = arith.mulf %31, %30 : vector<10x64xf32>
    %cst_15 = arith.constant 0.707106769 : f32
    %33 = vector.broadcast %cst_15 : f32 to vector<10x64xf32>
    %34 = arith.mulf %30, %33 : vector<10x64xf32>
    %35 = math.erf %34 : vector<10x64xf32>
    %cst_16 = arith.constant 1.000000e+00 : f32
    %36 = vector.broadcast %cst_16 : f32 to vector<10x64xf32>
    %37 = arith.addf %36, %35 : vector<10x64xf32>
    %38 = arith.mulf %32, %37 : vector<10x64xf32>
    %39 = arith.truncf %38 : vector<10x64xf32> to vector<10x64xbf16>
    %c0_17 = arith.constant 0 : index
    %c0_18 = arith.constant 0 : index
    %40 = vector.load %arg6[%c0_17, %c0_18] : memref<10x64xbf16, #tpu.memory_space<vmem>>, vector<10x64xbf16>
    tpu.vector_store %arg6[%c0_17, %c0_18], %39 {strides = array<i32>} : memref<10x64xbf16, #tpu.memory_space<vmem>>, vector<10x64xbf16>,
    return
  }
  func.func @transform_0(%arg0: i32) -> (i32, i32) {
    %c0_i32 = arith.constant 0 : i32
    %c0_i32_0 = arith.constant 0 : i32
    return %arg0, %c0_i32 : i32, i32
  }
  func.func @transform_1(%arg0: i32) -> (i32, i32) {
    %c0_i32 = arith.constant 0 : i32
    %c0_i32_0 = arith.constant 0 : i32
    %c0_i32_1 = arith.constant 0 : i32
    return %c0_i32, %c0_i32_0 : i32, i32
  }
  func.func @transform_2(%arg0: i32) -> (i32, i32) {
    %c0_i32 = arith.constant 0 : i32
    %c0_i32_0 = arith.constant 0 : i32
    %c0_i32_1 = arith.constant 0 : i32
    return %c0_i32, %c0_i32_0 : i32, i32
  }
  func.func @transform_3(%arg0: i32) -> (i32, i32) {
    %c0_i32 = arith.constant 0 : i32
    %c0_i32_0 = arith.constant 0 : i32
    %c0_i32_1 = arith.constant 0 : i32
    return %c0_i32, %c0_i32_0 : i32, i32
  }
  func.func @transform_4(%arg0: i32) -> (i32, i32) {
    %c0_i32 = arith.constant 0 : i32
    %c0_i32_0 = arith.constant 0 : i32
    %c0_i32_1 = arith.constant 0 : i32
    return %c0_i32, %c0_i32_0 : i32, i32
  }
  func.func @transform_5(%arg0: i32) -> (i32, i32) {
    %c0_i32 = arith.constant 0 : i32
    %c0_i32_0 = arith.constant 0 : i32
    return %arg0, %c0_i32 : i32, i32
  }
}

</mosaic_0001>

<llo_original>
// kernel: vit_forward.15
$region0: #{vit_forward.15}
  #allocation0 [shape = 'u32[]', space=smem, size = 0x4, offset = 0x4, fixed_abs, tag = 'smem constant byte address 0x4 - core index']
  #allocation1 [shape = 'u32[144,128]{1,0:T(1,128)}', space=vmem, size = 0x12000, scoped, tag = 'internal scratch']
  %s0 = inlined_call_operand.vmem [shape: bf16[10,32], index: 0, kind: input, shape index: {}]
  %s1 = inlined_call_operand.vmem [shape: bf16[32,32], index: 1, kind: input, shape index: {}]
  %s2 = inlined_call_operand.vmem [shape: f32[1,32], index: 2, kind: input, shape index: {}]
  %s3 = inlined_call_operand.vmem [shape: f32[10,32], index: 3, kind: input, shape index: {}]
  %s4 = inlined_call_operand.vmem [shape: f32[10,32], index: 4, kind: output, shape index: {}]
  %s5 = sld [smem:[#allocation0]]
  $region26: #{vit_forward.15} parent=0
    _
  %s7 = ssub.s32 1, %s5
  %s8 = scalar_select 0, %s7, %s5
  // Predicated region
  $region2: #{vit_forward.15} parent=0 // pred_check
    _
  $region3: #{vit_forward.15} parent=0 // pred_check_branch
    %10 = sbr.rel (0) target = $region5
  $region4: #{vit_forward.15} parent=0 // pred_region
    _
  $region5: #{vit_forward.15} parent=0 // pred_fallthru
    _
  // Predicated region
  $region6: #{vit_forward.15} parent=0 // pred_check
    _
  $region7: #{vit_forward.15} parent=0 // pred_check_branch
    %12 = sbr.rel (0) target = $region9
  $region8: #{vit_forward.15} parent=0 // pred_region
    _
  $region9: #{vit_forward.15} parent=0 // pred_fallthru
    _
  // Predicated region
  $region10: #{vit_forward.15} parent=0 // pred_check
    _
  $region11: #{vit_forward.15} parent=0 // pred_check_branch
    %14 = sbr.rel (0) target = $region13
  $region12: #{vit_forward.15} parent=0 // pred_region
    _
  $region13: #{vit_forward.15} parent=0 // pred_fallthru
    _
  // Predicated region
  $region14: #{vit_forward.15} parent=0 // pred_check
    _
  $region15: #{vit_forward.15} parent=0 // pred_check_branch
    %16 = sbr.rel (0) target = $region17
  $region16: #{vit_forward.15} parent=0 // pred_region
    _
  $region17: #{vit_forward.15} parent=0 // pred_fallthru
    _
  %v18 = vld [vmem:[%s0] sm:$0xf]
  %v19 = vld [vmem:[%s0 + $0x4] sm:$0x1]
  %v20 = vld [vmem:[%s1] sm:$0xf]
  %v21 = vld [vmem:[%s1 + $0x4] sm:$0xf]
  %v22 = vld [vmem:[%s1 + $0x8] sm:$0xf]
  %v23 = vld [vmem:[%s1 + $0xc] sm:$0xf]
  %v24 = vld [vmem:[%s2] sm:$0x1]
  %v26 = vlaneseq
  %v27 = vshrl.u32 %v26, 7
  %v28 = vsub.s32 0, %v27
  %v29 = vrot.slane %v24, %v28
  %v33 = vunpack.c.l.b16 %v18
  %v34 = vunpack.c.l.b16 %v19
  %v35 = vpack.c.b16 %v34, %v33
  %v40 = vunpack.c.l.b16 %v20
  %v41 = vunpack.c.l.b16 %v21
  %v42 = vunpack.c.l.b16 %v22
  %v43 = vunpack.c.l.b16 %v23
  %v44 = vpack.c.b16 %v41, %v40
  %v45 = vpack.c.b16 %v43, %v42
  %vm48 = vcmask 261120
  %v50 = vsel %vm48, %v35, 0
  %52 = vmatprep.subr.bf16.mxu0 0
  %53 = vmatpush1.bf16.msra.mxu0 %v44
  %54 = vmatprep.subr.bf16.mxu0 0
  %55 = vmatpush1.bf16.msra.mxu0 %v45
  %56 = vmatprep.subr.bf16.mxu0 0
  %57 = vmatpush1.bf16.msra.mxu0 0
  %58 = vmatprep.subr.bf16.mxu0 0
  %59 = vmatpush1.bf16.msra.mxu0 0
  %60 = vmatprep.subr.bf16.mxu0 0
  %61 = vmatpush1.bf16.msra.mxu0 0
  %62 = vmatprep.subr.bf16.mxu0 0
  %63 = vmatpush1.bf16.msra.mxu0 0
  %64 = vmatprep.subr.bf16.mxu0 0
  %65 = vmatpush1.bf16.msra.mxu0 0
  %66 = vmatprep.subr.bf16.mxu0 0
  %67 = vmatpush1.bf16.msra.mxu0 0
  %68 = vmatprep.subr.bf16.mxu0 0
  %69 = vmatpush1.bf16.msra.mxu0 0
  %70 = vmatprep.subr.bf16.mxu0 0
  %71 = vmatpush1.bf16.msra.mxu0 0
  %72 = vmatprep.subr.bf16.mxu0 0
  %73 = vmatpush1.bf16.msra.mxu0 0
  %74 = vmatprep.subr.bf16.mxu0 0
  %75 = vmatpush1.bf16.msra.mxu0 0
  %76 = vmatprep.subr.bf16.mxu0 0
  %77 = vmatpush1.bf16.msra.mxu0 0
  %78 = vmatprep.subr.bf16.mxu0 0
  %79 = vmatpush1.bf16.msra.mxu0 0
  %80 = vmatprep.subr.bf16.mxu0 0
  %81 = vmatpush1.bf16.msra.mxu0 0
  %82 = vmatprep.subr.bf16.mxu0 0
  %83 = vmatpush1.bf16.msra.mxu0 0
  %84 = vmatprep.mubr.bf16.mxu0 0
  %85 = vmatmul.mubr.bf16.gmra.mrb[0].mxu0 %v50
  %v86 = vpop.f32.mrb[0].mxu0
  %v87 = vadd.f32 %v29, %v86
  %v88 = vpop.f32.mrb[0].mxu0
  %v89 = vpop.f32.mrb[0].mxu0
  %v90 = vadd.f32 %v29, %v89
  %v91 = vpop.f32.mrb[0].mxu0
  %92 = vdwg.mxu0
  %v93 = vld [vmem:[%s3] sm:$0xff]
  %v94 = vld [vmem:[%s3 + $0x8] sm:$0x3]
  %v95 = vadd.f32 %v87, %v93
  %v96 = vadd.f32 %v90, %v94
  %97 = vst.msk [vmem:[%s4] sm:$0xff] %vm48, %v95
  %vm98 = vcmask 254976
  %99 = vst.msk [vmem:[%s4 + $0x8] sm:$0x3] %vm98, %v96
  // Predicated region
  $region18: #{vit_forward.15} parent=0 // pred_check
    _
  $region19: #{vit_forward.15} parent=0 // pred_check_branch
    %101 = sbr.rel (0) target = $region21
  $region20: #{vit_forward.15} parent=0 // pred_region
    _
  $region21: #{vit_forward.15} parent=0 // pred_fallthru
    _
  // Predicated region
  $region22: #{vit_forward.15} parent=0 // pred_check
    _
  $region23: #{vit_forward.15} parent=0 // pred_check_branch
    %103 = sbr.rel (0) target = $region25
  $region24: #{vit_forward.15} parent=0 // pred_region
    _
  $region25: #{vit_forward.15} parent=0 // pred_fallthru
    _

// kernel: vit_forward.13
$region0: #{vit_forward.13}
  #allocation0 [shape = 'u32[]', space=smem, size = 0x4, offset = 0x4, fixed_abs, tag = 'smem constant byte address 0x4 - core index']
  #allocation1 [shape = 'u32[144,128]{1,0:T(1,128)}', space=vmem, size = 0x12000, scoped, tag = 'internal scratch']
  %s0 = inlined_call_operand.vmem [shape: f32[10,32], index: 0, kind: input, shape index: {}]
  %s1 = inlined_call_operand.vmem [shape: f32[1,32], index: 1, kind: input, shape index: {}]
  %s2 = inlined_call_operand.vmem [shape: f32[1,32], index: 2, kind: input, shape index: {}]
  %s3 = inlined_call_operand.vmem [shape: bf16[32,96], index: 3, kind: input, shape index: {}]
  %s4 = inlined_call_operand.vmem [shape: f32[1,96], index: 4, kind: input, shape index: {}]
  %s5 = inlined_call_operand.vmem [shape: bf16[10,32], index: 5, kind: output, shape index: {0}]
  %s6 = inlined_call_operand.vmem [shape: bf16[10,32], index: 6, kind: output, shape index: {1}]
  %s7 = inlined_call_operand.vmem [shape: bf16[10,32], index: 7, kind: output, shape index: {2}]
  %8 = xla_tuple %s5, %s6, %s7
  %s9 = sld [smem:[#allocation0]]
  $region46: #{vit_forward.13} parent=0
    _
  %s11 = ssub.s32 1, %s9
  %s12 = scalar_select 0, %s11, %s9
  // Predicated region
  $region2: #{vit_forward.13} parent=0 // pred_check
    _
  $region3: #{vit_forward.13} parent=0 // pred_check_branch
    %14 = sbr.rel (0) target = $region5
  $region4: #{vit_forward.13} parent=0 // pred_region
    _
  $region5: #{vit_forward.13} parent=0 // pred_fallthru
    _
  // Predicated region
  $region6: #{vit_forward.13} parent=0 // pred_check
    _
  $region7: #{vit_forward.13} parent=0 // pred_check_branch
    %16 = sbr.rel (0) target = $region9
  $region8: #{vit_forward.13} parent=0 // pred_region
    _
  $region9: #{vit_forward.13} parent=0 // pred_fallthru
    _
  // Predicated region
  $region10: #{vit_forward.13} parent=0 // pred_check
    _
  $region11: #{vit_forward.13} parent=0 // pred_check_branch
    %18 = sbr.rel (0) target = $region13
  $region12: #{vit_forward.13} parent=0 // pred_region
    _
  $region13: #{vit_forward.13} parent=0 // pred_fallthru
    _
  // Predicated region
  $region14: #{vit_forward.13} parent=0 // pred_check
    _
  $region15: #{vit_forward.13} parent=0 // pred_check_branch
    %20 = sbr.rel (0) target = $region17
  $region16: #{vit_forward.13} parent=0 // pred_region
    _
  $region17: #{vit_forward.13} parent=0 // pred_fallthru
    _
  // Predicated region
  $region18: #{vit_forward.13} parent=0 // pred_check
    _
  $region19: #{vit_forward.13} parent=0 // pred_check_branch
    %22 = sbr.rel (0) target = $region21
  $region20: #{vit_forward.13} parent=0 // pred_region
    _
  $region21: #{vit_forward.13} parent=0 // pred_fallthru
    _
  %v24 = vld [vmem:[%s0] sm:$0xff]
  %v25 = vld [vmem:[%s0 + $0x8] sm:$0x3]
  %v26 = vld [vmem:[%s1] sm:$0x1]
  %v27 = vld [vmem:[%s2] sm:$0x1]
  %vm28 = vcmask 261120
  %v29 = vsel %vm28, %v24, 0.0
  %30 = vadd.xlane.f32.xlu0 %v29
  %v31 = vpop.xlane.xlu0 %30
  %vm32 = vcmask 254976
  %v33 = vsel %vm32, %v25, 0.0
  %34 = vadd.xlane.f32.xlu0 %v33
  %v35 = vpop.xlane.xlu0 %34
  %v36 = vrcp.pop 32.0
  %v37 = vmul.f32 %v31, %v36
  %v38 = vmul.f32 %v35, %v36
  %v39 = vsub.f32 %v24, %v37
  %v40 = vsub.f32 %v25, %v38
  %v41 = vmul.f32 %v39, %v39
  %v42 = vmul.f32 %v40, %v40
  %v43 = vsel %vm28, %v41, 0.0
  %44 = vadd.xlane.f32.xlu0 %v43
  %v45 = vpop.xlane.xlu0 %44
  %v46 = vsel %vm32, %v42, 0.0
  %47 = vadd.xlane.f32.xlu0 %v46
  %v48 = vpop.xlane.xlu0 %47
  %v49 = vmul.f32 %v45, %v36
  %v50 = vmul.f32 %v48, %v36
  %v51 = vadd.f32 %v49, 1e-06
  %v52 = vadd.f32 %v50, 1e-06
  %v53 = vrsqrt.pop %v51
  %v54 = vrsqrt.pop %v52
  %v55 = vmul.f32 %v39, %v53
  %v56 = vmul.f32 %v40, %v54
  %v58 = vlaneseq
  %v59 = vshrl.u32 %v58, 7
  %v60 = vsub.s32 0, %v59
  %v61 = vrot.slane %v26, %v60
  %v63 = vmul.f32 %v55, %v61
  %v64 = vmul.f32 %v56, %v61
  %v66 = vlaneseq
  %v67 = vshrl.u32 %v66, 7
  %v68 = vsub.s32 0, %v67
  %v69 = vrot.slane %v27, %v68
  %v71 = vadd.f32 %v63, %v69
  %v72 = vadd.f32 %v64, %v69
  %v73 = vpack.c.bf16 %v72, %v71
  %v74 = vld [vmem:[%s3] sm:$0xf]
  %v75 = vld [vmem:[%s3 + $0x4] sm:$0xf]
  %v76 = vld [vmem:[%s3 + $0x8] sm:$0xf]
  %v77 = vld [vmem:[%s3 + $0xc] sm:$0xf]
  %v78 = vld [vmem:[%s4] sm:$0x1]
  %v80 = vlaneseq
  %v81 = vshrl.u32 %v80, 7
  %v82 = vsub.s32 0, %v81
  %v83 = vrot.slane %v78, %v82
  %v89 = vunpack.c.l.b16 %v74
  %v90 = vunpack.c.l.b16 %v75
  %v91 = vunpack.c.l.b16 %v76
  %v92 = vunpack.c.l.b16 %v77
  %v93 = vpack.c.b16 %v90, %v89
  %v94 = vpack.c.b16 %v92, %v91
  %v98 = vsel %vm28, %v73, 0
  %100 = vmatprep.subr.bf16.mxu0 0
  %101 = vmatpush1.bf16.msra.mxu0 %v93
  %102 = vmatprep.subr.bf16.mxu0 0
  %103 = vmatpush1.bf16.msra.mxu0 %v94
  %104 = vmatprep.subr.bf16.mxu0 0
  %105 = vmatpush1.bf16.msra.mxu0 0
  %106 = vmatprep.subr.bf16.mxu0 0
  %107 = vmatpush1.bf16.msra.mxu0 0
  %108 = vmatprep.subr.bf16.mxu0 0
  %109 = vmatpush1.bf16.msra.mxu0 0
  %110 = vmatprep.subr.bf16.mxu0 0
  %111 = vmatpush1.bf16.msra.mxu0 0
  %112 = vmatprep.subr.bf16.mxu0 0
  %113 = vmatpush1.bf16.msra.mxu0 0
  %114 = vmatprep.subr.bf16.mxu0 0
  %115 = vmatpush1.bf16.msra.mxu0 0
  %116 = vmatprep.subr.bf16.mxu0 0
  %117 = vmatpush1.bf16.msra.mxu0 0
  %118 = vmatprep.subr.bf16.mxu0 0
  %119 = vmatpush1.bf16.msra.mxu0 0
  %120 = vmatprep.subr.bf16.mxu0 0
  %121 = vmatpush1.bf16.msra.mxu0 0
  %122 = vmatprep.subr.bf16.mxu0 0
  %123 = vmatpush1.bf16.msra.mxu0 0
  %124 = vmatprep.subr.bf16.mxu0 0
  %125 = vmatpush1.bf16.msra.mxu0 0
  %126 = vmatprep.subr.bf16.mxu0 0
  %127 = vmatpush1.bf16.msra.mxu0 0
  %128 = vmatprep.subr.bf16.mxu0 0
  %129 = vmatpush1.bf16.msra.mxu0 0
  %130 = vmatprep.subr.bf16.mxu0 0
  %131 = vmatpush1.bf16.msra.mxu0 0
  %132 = vmatprep.mubr.bf16.mxu0 0
  %133 = vmatmul.mubr.bf16.gmra.mrb[0].mxu0 %v98
  %v134 = vpop.f32.mrb[0].mxu0
  %v135 = vadd.f32 %v83, %v134
  %v136 = vpop.f32.mrb[0].mxu0
  %v137 = vpop.f32.mrb[0].mxu0
  %v138 = vadd.f32 %v83, %v137
  %v139 = vpop.f32.mrb[0].mxu0
  %140 = vdwg.mxu0
  %v141 = vpack.c.bf16 %v138, %v135
  %v143 = vunpack.c.l.b16 %v141
  %v144 = vunpack.c.h.b16 %v141
  %v145 = vpack.c.b16 %v143, %v143
  %v146 = vpack.c.b16 %v144, %v144
  %vm149 = vcmask 257024
  %150 = vst.msk [vmem:[%s5] sm:$0xf] %vm149, %v145
  %vm151 = vcmask 253952
  %152 = vst.msk [vmem:[%s5 + $0x4] sm:$0x1] %vm151, %v146
  %153 = vrot.lane.b32.xlu0 %v145, 96
  %v154 = vpop.permute.xlu0 %153
  %155 = vrot.lane.b32.xlu0 %v146, 96
  %v156 = vpop.permute.xlu0 %155
  %159 = vst.msk [vmem:[%s6] sm:$0xf] %vm149, %v154
  %160 = vst.msk [vmem:[%s6 + $0x4] sm:$0x1] %vm151, %v156
  %161 = vrot.lane.b32.xlu0 %v145, 64
  %v162 = vpop.permute.xlu0 %161
  %163 = vrot.lane.b32.xlu0 %v146, 64
  %v164 = vpop.permute.xlu0 %163
  %167 = vst.msk [vmem:[%s7] sm:$0xf] %vm149, %v162
  %168 = vst.msk [vmem:[%s7 + $0x4] sm:$0x1] %vm151, %v164
  // Predicated region
  $region22: #{vit_forward.13} parent=0 // pred_check
    _
  $region23: #{vit_forward.13} parent=0 // pred_check_branch
    %170 = sbr.rel (0) target = $region25
  $region24: #{vit_forward.13} parent=0 // pred_region
    _
  $region25: #{vit_forward.13} parent=0 // pred_fallthru
    _
  // Predicated region
  $region26: #{vit_forward.13} parent=0 // pred_check
    _
  $region27: #{vit_forward.13} parent=0 // pred_check_branch
    %172 = sbr.rel (0) target = $region29
  $region28: #{vit_forward.13} parent=0 // pred_region
    _
  $region29: #{vit_forward.13} parent=0 // pred_fallthru
    _
  // Predicated region
  $region30: #{vit_forward.13} parent=0 // pred_check
    _
  $region31: #{vit_forward.13} parent=0 // pred_check_branch
    %174 = sbr.rel (0) target = $region33
  $region32: #{vit_forward.13} parent=0 // pred_region
    _
  $region33: #{vit_forward.13} parent=0 // pred_fallthru
    _
  // Predicated region
  $region34: #{vit_forward.13} parent=0 // pred_check
    _
  $region35: #{vit_forward.13} parent=0 // pred_check_branch
    %176 = sbr.rel (0) target = $region37
  $region36: #{vit_forward.13} parent=0 // pred_region
    _
  $region37: #{vit_forward.13} parent=0 // pred_fallthru
    _
  // Predicated region
  $region38: #{vit_forward.13} parent=0 // pred_check
    _
  $region39: #{vit_forward.13} parent=0 // pred_check_branch
    %178 = sbr.rel (0) target = $region41
  $region40: #{vit_forward.13} parent=0 // pred_region
    _
  $region41: #{vit_forward.13} parent=0 // pred_fallthru
    _
  // Predicated region
  $region42: #{vit_forward.13} parent=0 // pred_check
    _
  $region43: #{vit_forward.13} parent=0 // pred_check_branch
    %180 = sbr.rel (0) target = $region45
  $region44: #{vit_forward.13} parent=0 // pred_region
    _
  $region45: #{vit_forward.13} parent=0 // pred_fallthru
    _

// kernel: vit_forward.14
$region0: #{vit_forward.14}
  #allocation0 [shape = 'u32[]', space=smem, size = 0x4, offset = 0x4, fixed_abs, tag = 'smem constant byte address 0x4 - core index']
  #allocation1 [shape = 'u32[144,128]{1,0:T(1,128)}', space=vmem, size = 0x12000, scoped, tag = 'internal scratch']
  %s0 = inlined_call_operand.vmem [shape: bf16[2,5,32], index: 0, kind: input, shape index: {}]
  %s1 = inlined_call_operand.vmem [shape: bf16[2,5,32], index: 1, kind: input, shape index: {}]
  %s2 = inlined_call_operand.vmem [shape: bf16[2,5,32], index: 2, kind: input, shape index: {}]
  %s3 = inlined_call_operand.vmem [shape: bf16[2,5,32], index: 3, kind: output, shape index: {}]
  %s4 = sld [smem:[#allocation0]]
  $region45: #{vit_forward.14} parent=0
    _
  %s6 = ssub.s32 1, %s4
  %s7 = scalar_select 0, %s6, %s4
  loop: start=0, step=1, limit=4
  $region2: #{vit_forward.14} parent=0 // loop_pre_header
    _
  $region3: #{vit_forward.14} parent=0 // loop_header
    %s9 = sphi 0, %s13
    %p10 = scmp.ge.s32.totalorder %s9, 4
    %s16 = sphi 0, %s28
    %s17 = sphi 0, %s24
    %s18 = sphi 0, %s16
    %s19 = sphi 0, %s17
    %s20 = sphi 0, %s18
    %s21 = sphi 0, %s19
    %s33 = sphi 0, %s35
    %s36 = sphi 0, %s33
    %s37 = sphi 0, %s36
    %s53 = sphi 0, %s37
    %s61 = sphi 0, %s63
    %s64 = sphi 0, %s61
    %s65 = sphi 0, %s64
    %s81 = sphi 0, %s65
    %s89 = sphi 0, %s91
    %s92 = sphi 0, %s89
    %s93 = sphi 0, %s92
    %s109 = sphi 0, %s93
    %s117 = sphi 0, %s119
    %s120 = sphi 0, %s117
    %s121 = sphi 0, %s120
    %s137 = sphi 0, %s121
  $region4: #{vit_forward.14} parent=0 // loop_header_branch
    %12 = sbr.rel (%p10) target = $region8
  $region5: #{vit_forward.14} parent=0 // loop_body
    %s14 = ssub.s32 %s9, 1
    %s15 = ssub.s32 %s9, 2
    %s22 = sadd.s32 1, %s17
    %p23 = scmp.ge.s32.totalorder %s22, 1
    %s24 = scalar_select %p23, 0, %s22
    %s25 = sadd.s32 1, %s16
    %s26 = scalar_select %p23, %s25, %s16
    %p27 = scmp.ge.s32.totalorder %s26, 2
    %s28 = scalar_select %p27, 0, %s26
    %s29 = ssub.s32 %s16, %s28
    %s30 = ssub.s32 %s17, %s24
    %s31 = sor.u32 %s29, %s30
    %p32 = scmp.eq.s32.totalorder %s31, 0
    %s34 = sadd.s32 %s33, 1
    %s35 = scalar_select %p32, %s33, %s34
    %p38 = pneg %p32
    %p39 = scmp.eq.s32.totalorder %s9, 1
    %p40 = por %p38, %p39
    %p41 = scmp.ne.s32.totalorder %s33, %s36
    %p42 = scmp.eq.s32.totalorder %s9, 0
    %p43 = por %p41, %p42
    %p44 = scmp.ne.s32.totalorder %s33, %s36
    %p45 = scmp.eq.s32.totalorder %s14, 1
    %p46 = por %p44, %p45
    %p47 = scmp.ne.s32.totalorder %s36, %s37
    %p48 = scmp.eq.s32.totalorder %s14, 0
    %p49 = por %p47, %p48
    %p50 = scmp.ne.s32.totalorder %s36, %s37
    %p51 = scmp.eq.s32.totalorder %s15, 1
    %p52 = por %p50, %p51
    %p54 = scmp.ne.s32.totalorder %s37, %s53
    %p55 = scmp.eq.s32.totalorder %s15, 0
    %p56 = por %p54, %p55
    %s57 = ssub.s32 %s16, %s28
    %s58 = ssub.s32 %s17, %s24
    %s59 = sor.u32 %s57, %s58
    %p60 = scmp.eq.s32.totalorder %s59, 0
    %s62 = sadd.s32 %s61, 1
    %s63 = scalar_select %p60, %s61, %s62
    %p66 = pneg %p60
    %p67 = scmp.eq.s32.totalorder %s9, 1
    %p68 = por %p66, %p67
    %p69 = scmp.ne.s32.totalorder %s61, %s64
    %p70 = scmp.eq.s32.totalorder %s9, 0
    %p71 = por %p69, %p70
    %p72 = scmp.ne.s32.totalorder %s61, %s64
    %p73 = scmp.eq.s32.totalorder %s14, 1
    %p74 = por %p72, %p73
    %p75 = scmp.ne.s32.totalorder %s64, %s65
    %p76 = scmp.eq.s32.totalorder %s14, 0
    %p77 = por %p75, %p76
    %p78 = scmp.ne.s32.totalorder %s64, %s65
    %p79 = scmp.eq.s32.totalorder %s15, 1
    %p80 = por %p78, %p79
    %p82 = scmp.ne.s32.totalorder %s65, %s81
    %p83 = scmp.eq.s32.totalorder %s15, 0
    %p84 = por %p82, %p83
    %s85 = ssub.s32 %s16, %s28
    %s86 = ssub.s32 %s17, %s24
    %s87 = sor.u32 %s85, %s86
    %p88 = scmp.eq.s32.totalorder %s87, 0
    %s90 = sadd.s32 %s89, 1
    %s91 = scalar_select %p88, %s89, %s90
    %p94 = pneg %p88
    %p95 = scmp.eq.s32.totalorder %s9, 1
    %p96 = por %p94, %p95
    %p97 = scmp.ne.s32.totalorder %s89, %s92
    %p98 = scmp.eq.s32.totalorder %s9, 0
    %p99 = por %p97, %p98
    %p100 = scmp.ne.s32.totalorder %s89, %s92
    %p101 = scmp.eq.s32.totalorder %s14, 1
    %p102 = por %p100, %p101
    %p103 = scmp.ne.s32.totalorder %s92, %s93
    %p104 = scmp.eq.s32.totalorder %s14, 0
    %p105 = por %p103, %p104
    %p106 = scmp.ne.s32.totalorder %s92, %s93
    %p107 = scmp.eq.s32.totalorder %s15, 1
    %p108 = por %p106, %p107
    %p110 = scmp.ne.s32.totalorder %s93, %s109
    %p111 = scmp.eq.s32.totalorder %s15, 0
    %p112 = por %p110, %p111
    %s113 = ssub.s32 %s16, %s28
    %s114 = ssub.s32 %s17, %s24
    %s115 = sor.u32 %s113, %s114
    %p116 = scmp.eq.s32.totalorder %s115, 0
    %s118 = sadd.s32 %s117, 1
    %s119 = scalar_select %p116, %s117, %s118
    %p122 = pneg %p116
    %p123 = scmp.eq.s32.totalorder %s9, 1
    %p124 = por %p122, %p123
    %p125 = scmp.ne.s32.totalorder %s117, %s120
    %p126 = scmp.eq.s32.totalorder %s9, 0
    %p127 = por %p125, %p126
    %p128 = scmp.ne.s32.totalorder %s117, %s120
    %p129 = scmp.eq.s32.totalorder %s14, 1
    %p130 = por %p128, %p129
    %p131 = scmp.ne.s32.totalorder %s120, %s121
    %p132 = scmp.eq.s32.totalorder %s14, 0
    %p133 = por %p131, %p132
    %p134 = scmp.ne.s32.totalorder %s120, %s121
    %p135 = scmp.eq.s32.totalorder %s15, 1
    %p136 = por %p134, %p135
    %p138 = scmp.ne.s32.totalorder %s121, %s137
    %p139 = scmp.eq.s32.totalorder %s15, 0
    %p140 = por %p138, %p139
    %p141 = scmp.le.s32.totalorder 1, %s9
    %p142 = scmp.lt.s32.totalorder %s9, 3
    %p143 = pnand %p141, %p142
    %p144 = pneg %p143
    // Predicated region
    $region9: #{vit_forward.14} parent=5 // pred_check
      _
    $region10: #{vit_forward.14} parent=5 // pred_check_branch
      %146 = sbr.rel (%p143) target = $region12
    $region11: #{vit_forward.14} parent=5 // pred_region
      %s147 = ssub.s32 %s9, 1
    $region12: #{vit_forward.14} parent=5 // pred_fallthru
      _
    %p148 = scmp.lt.s32.totalorder %s9, 2
    // Predicated region
    $region13: #{vit_forward.14} parent=5 // pred_check
      %p149 = pneg %p148
    $region14: #{vit_forward.14} parent=5 // pred_check_branch
      %151 = sbr.rel (%p149) target = $region16
    $region15: #{vit_forward.14} parent=5 // pred_region
      // Predicated region
      $region17: #{vit_forward.14} parent=15 // pred_check
        %p152 = pneg %p43
      $region18: #{vit_forward.14} parent=15 // pred_check_branch
        %154 = sbr.rel (%p152) target = $region20
      $region19: #{vit_forward.14} parent=15 // pred_region
        %p155 = scmp.lt.s32.totalorder %s16, 1
        %s156 = scalar_select %p155, %s16, 1
        %p157 = scmp.lt.s32.totalorder %s17, 0
        %s158 = scalar_select %p157, %s17, 0
        %s159 = sadd.s32 %s158, %s156
        %s160 = smul.addr %s159, 4
        %s161 = scalar_lea.vmem %s0, %s160
      $region20: #{vit_forward.14} parent=15 // pred_fallthru
        _
      // Predicated region
      $region21: #{vit_forward.14} parent=15 // pred_check
        %p162 = pneg %p71
      $region22: #{vit_forward.14} parent=15 // pred_check_branch
        %164 = sbr.rel (%p162) target = $region24
      $region23: #{vit_forward.14} parent=15 // pred_region
        %p165 = scmp.lt.s32.totalorder %s16, 1
        %s166 = scalar_select %p165, %s16, 1
        %p167 = scmp.lt.s32.totalorder %s17, 0
        %s168 = scalar_select %p167, %s17, 0
        %s169 = sadd.s32 %s168, %s166
        %s170 = smul.addr %s169, 4
        %s171 = scalar_lea.vmem %s1, %s170
      $region24: #{vit_forward.14} parent=15 // pred_fallthru
        _
      // Predicated region
      $region25: #{vit_forward.14} parent=15 // pred_check
        %p172 = pneg %p99
      $region26: #{vit_forward.14} parent=15 // pred_check_branch
        %174 = sbr.rel (%p172) target = $region28
      $region27: #{vit_forward.14} parent=15 // pred_region
        %p175 = scmp.lt.s32.totalorder %s16, 1
        %s176 = scalar_select %p175, %s16, 1
        %p177 = scmp.lt.s32.totalorder %s17, 0
        %s178 = scalar_select %p177, %s17, 0
        %s179 = sadd.s32 %s178, %s176
        %s180 = smul.addr %s179, 4
        %s181 = scalar_lea.vmem %s2, %s180
      $region28: #{vit_forward.14} parent=15 // pred_fallthru
        _
    $region16: #{vit_forward.14} parent=5 // pred_fallthru
      _
    %p182 = scmp.le.s32.totalorder 1, %s9
    %p183 = scmp.lt.s32.totalorder %s9, 3
    %p184 = pnand %p182, %p183
    %p185 = pneg %p184
    // Predicated region
    $region29: #{vit_forward.14} parent=5 // pred_check
      _
    $region30: #{vit_forward.14} parent=5 // pred_check_branch
      %187 = sbr.rel (%p184) target = $region32
    $region31: #{vit_forward.14} parent=5 // pred_region
      %s188 = ssub.s32 %s9, 1
      %p189 = scmp.lt.s32.totalorder %s18, 1
      %s190 = scalar_select %p189, %s18, 1
      %p191 = scmp.lt.s32.totalorder %s19, 0
      %s192 = scalar_select %p191, %s19, 0
      %s193 = sadd.s32 %s192, %s190
      %s194 = smul.addr %s193, 4
      %s195 = scalar_lea.vmem %s0, %s194
      %p196 = pneg %p49
      %p197 = pneg %p46
      %p198 = scmp.lt.s32.totalorder %s18, 1
      %s199 = scalar_select %p198, %s18, 1
      %p200 = scmp.lt.s32.totalorder %s19, 0
      %s201 = scalar_select %p200, %s19, 0
      %s202 = sadd.s32 %s201, %s199
      %s203 = smul.addr %s202, 4
      %s204 = scalar_lea.vmem %s1, %s203
      %p205 = pneg %p77
      %p206 = pneg %p74
      %p207 = scmp.lt.s32.totalorder %s18, 1
      %s208 = scalar_select %p207, %s18, 1
      %p209 = scmp.lt.s32.totalorder %s19, 0
      %s210 = scalar_select %p209, %s19, 0
      %s211 = sadd.s32 %s210, %s208
      %s212 = smul.addr %s211, 4
      %s213 = scalar_lea.vmem %s2, %s212
      %p214 = pneg %p105
      %p215 = pneg %p102
      %p216 = pneg %p133
      %p217 = pneg %p130
      %p218 = scmp.lt.s32.totalorder %s18, 1
      %s219 = scalar_select %p218, %s18, 1
      %p220 = scmp.lt.s32.totalorder %s19, 0
      %s221 = scalar_select %p220, %s19, 0
      %s222 = sadd.s32 %s221, %s219
      %s223 = smul.addr %s222, 4
      %s224 = scalar_lea.vmem %s3, %s223
      %p225 = scmp.lt.s32.totalorder %s18, 1
      %s226 = scalar_select %p225, %s18, 1
      %p227 = scmp.lt.s32.totalorder %s19, 0
      %s228 = scalar_select %p227, %s19, 0
      %s229 = sadd.s32 %s228, %s226
      %s230 = smul.addr %s229, 4
      %s231 = scalar_lea.vmem %s0, %s230
      %p232 = scmp.lt.s32.totalorder %s18, 1
      %s233 = scalar_select %p232, %s18, 1
      %p234 = scmp.lt.s32.totalorder %s19, 0
      %s235 = scalar_select %p234, %s19, 0
      %s236 = sadd.s32 %s235, %s233
      %s237 = smul.addr %s236, 4
      %s238 = scalar_lea.vmem %s1, %s237
      %p239 = scmp.lt.s32.totalorder %s18, 1
      %s240 = scalar_select %p239, %s18, 1
      %p241 = scmp.lt.s32.totalorder %s19, 0
      %s242 = scalar_select %p241, %s19, 0
      %s243 = sadd.s32 %s242, %s240
      %s244 = smul.addr %s243, 4
      %s245 = scalar_lea.vmem %s2, %s244
      %p246 = scmp.lt.s32.totalorder %s18, 1
      %s247 = scalar_select %p246, %s18, 1
      %p248 = scmp.lt.s32.totalorder %s19, 0
      %s249 = scalar_select %p248, %s19, 0
      %s250 = sadd.s32 %s249, %s247
      %s251 = smul.addr %s250, 4
      %s252 = scalar_lea.vmem %s3, %s251
      %v254 = vld [vmem:[%s231] sm:$0x7]
      %v255 = vld [vmem:[%s238] sm:$0x7]
      %v256 = vld [vmem:[%s245] sm:$0x7]
      %vm257 = vcmask 64512
      %v259 = vsel %vm257, %v254, 0
      %v262 = vsel %vm257, %v255, 0
      %264 = vmatprep.subr.bf16.mxu0 0
      %265 = vmatpush1.bf16.xpose.msra.mxu0 %v262
      %266 = vmatprep.subr.bf16.mxu0 0
      %267 = vmatpush1.bf16.xpose.msra.mxu0 0
      %268 = vmatprep.subr.bf16.mxu0 0
      %269 = vmatpush1.bf16.xpose.msra.mxu0 0
      %270 = vmatprep.subr.bf16.mxu0 0
      %271 = vmatpush1.bf16.xpose.msra.mxu0 0
      %272 = vmatprep.subr.bf16.mxu0 0
      %273 = vmatpush1.bf16.xpose.msra.mxu0 0
      %274 = vmatprep.subr.bf16.mxu0 0
      %275 = vmatpush1.bf16.xpose.msra.mxu0 0
      %276 = vmatprep.subr.bf16.mxu0 0
      %277 = vmatpush1.bf16.xpose.msra.mxu0 0
      %278 = vmatprep.subr.bf16.mxu0 0
      %279 = vmatpush1.bf16.xpose.msra.mxu0 0
      %280 = vmatprep.subr.bf16.mxu0 0
      %281 = vmatpush1.bf16.xpose.msra.mxu0 0
      %282 = vmatprep.subr.bf16.mxu0 0
      %283 = vmatpush1.bf16.xpose.msra.mxu0 0
      %284 = vmatprep.subr.bf16.mxu0 0
      %285 = vmatpush1.bf16.xpose.msra.mxu0 0
      %286 = vmatprep.subr.bf16.mxu0 0
      %287 = vmatpush1.bf16.xpose.msra.mxu0 0
      %288 = vmatprep.subr.bf16.mxu0 0
      %289 = vmatpush1.bf16.xpose.msra.mxu0 0
      %290 = vmatprep.subr.bf16.mxu0 0
      %291 = vmatpush1.bf16.xpose.msra.mxu0 0
      %292 = vmatprep.subr.bf16.mxu0 0
      %293 = vmatpush1.bf16.xpose.msra.mxu0 0
      %294 = vmatprep.subr.bf16.mxu0 0
      %295 = vmatpush1.bf16.xpose.msra.mxu0 0
      %296 = vmatprep.mubr.bf16.mxu0 0
      %297 = vmatmul.mubr.bf16.gmra.mrb[0].mxu0 %v259
      %v298 = vpop.f32.mrb[0].mxu0
      %v299 = vadd.f32 0.0, %v298
      %v300 = vpop.f32.mrb[0].mxu0
      %v301 = vpop.f32.mrb[0].mxu0
      %v302 = vpop.f32.mrb[0].mxu0
      %303 = vdwg.mxu0
      %vm304 = vcmask 36864
      %v305 = vsel %vm304, %v299, -inf
      %306 = vmax.xlane.f32.xlu0 %v305
      %v307 = vpop.xlane.xlu0 %306
      %v308 = vsub.f32 %v299, %v307
      %v309 = vmul.f32 %v308, 1.442695
      %v310 = vpow.pop %v309
      %v311 = vsel %vm304, %v310, 0.0
      %312 = vadd.xlane.f32.xlu0 %v311
      %v313 = vpop.xlane.xlu0 %312
      %v314 = vpack.c.bf16 %v310, %v310
      %vm315 = vcmask 39936
      %v317 = vsel %vm315, %v314, 0
      %vm319 = vcmask 1041408
      %vm320 = vcmask 1042432
      %v321 = vsel %vm319, 4294967295, 65535
      %v322 = vsel %vm320, %v321, 0
      %v324 = vand.u32 %v256, %v322
      %326 = vmatprep.subr.bf16.mxu0 0
      %327 = vmatpush1.bf16.msra.mxu0 %v324
      %328 = vmatprep.subr.bf16.mxu0 0
      %329 = vmatpush1.bf16.msra.mxu0 0
      %330 = vmatprep.subr.bf16.mxu0 0
      %331 = vmatpush1.bf16.msra.mxu0 0
      %332 = vmatprep.subr.bf16.mxu0 0
      %333 = vmatpush1.bf16.msra.mxu0 0
      %334 = vmatprep.subr.bf16.mxu0 0
      %335 = vmatpush1.bf16.msra.mxu0 0
      %336 = vmatprep.subr.bf16.mxu0 0
      %337 = vmatpush1.bf16.msra.mxu0 0
      %338 = vmatprep.subr.bf16.mxu0 0
      %339 = vmatpush1.bf16.msra.mxu0 0
      %340 = vmatprep.subr.bf16.mxu0 0
      %341 = vmatpush1.bf16.msra.mxu0 0
      %342 = vmatprep.subr.bf16.mxu0 0
      %343 = vmatpush1.bf16.msra.mxu0 0
      %344 = vmatprep.subr.bf16.mxu0 0
      %345 = vmatpush1.bf16.msra.mxu0 0
      %346 = vmatprep.subr.bf16.mxu0 0
      %347 = vmatpush1.bf16.msra.mxu0 0
      %348 = vmatprep.subr.bf16.mxu0 0
      %349 = vmatpush1.bf16.msra.mxu0 0
      %350 = vmatprep.subr.bf16.mxu0 0
      %351 = vmatpush1.bf16.msra.mxu0 0
      %352 = vmatprep.subr.bf16.mxu0 0
      %353 = vmatpush1.bf16.msra.mxu0 0
      %354 = vmatprep.subr.bf16.mxu0 0
      %355 = vmatpush1.bf16.msra.mxu0 0
      %356 = vmatprep.subr.bf16.mxu0 0
      %357 = vmatpush1.bf16.msra.mxu0 0
      %358 = vmatprep.mubr.bf16.mxu0 0
      %359 = vmatmul.mubr.bf16.gmra.mrb[0].mxu0 %v317
      %v360 = vpop.f32.mrb[0].mxu0
      %v361 = vadd.f32 0.0, %v360
      %v362 = vpop.f32.mrb[0].mxu0
      %v363 = vpop.f32.mrb[0].mxu0
      %v364 = vpop.f32.mrb[0].mxu0
      %365 = vdwg.mxu0
      %v366 = vrcp.pop %v313
      %v367 = vmul.f32 %v361, %v366
      %v368 = vpack.c.bf16 %v367, %v367
      %vm369 = vcmask 59392
      %vm370 = vsmask.f32 2304
      %vm371 = vmand %vm369, %vm370
      %v372 = vld [vmem:[%s252] sm:$0x7]
      %v373 = vsel %vm371, %v368, %v372
      %374 = vst [vmem:[%s252] sm:$0x7] %v373
      %v376 = vunpack.c.l.b16 %v254
      %v377 = vpack.c.b16 %v376, %v376
      %378 = vrot.lane.b32.xlu0 %v377, 120
      %v379 = vpop.permute.xlu0 %378
      %v381 = vunpack.c.l.b16 %v255
      %v382 = vpack.c.b16 %v381, %v381
      %383 = vrot.lane.b32.xlu0 %v382, 120
      %v384 = vpop.permute.xlu0 %383
      %v386 = vsel %vm257, %v379, 0
      %v389 = vsel %vm257, %v384, 0
      %391 = vmatprep.subr.bf16.mxu0 0
      %392 = vmatpush1.bf16.xpose.msra.mxu0 %v389
      %393 = vmatprep.subr.bf16.mxu0 0
      %394 = vmatpush1.bf16.xpose.msra.mxu0 0
      %395 = vmatprep.subr.bf16.mxu0 0
      %396 = vmatpush1.bf16.xpose.msra.mxu0 0
      %397 = vmatprep.subr.bf16.mxu0 0
      %398 = vmatpush1.bf16.xpose.msra.mxu0 0
      %399 = vmatprep.subr.bf16.mxu0 0
      %400 = vmatpush1.bf16.xpose.msra.mxu0 0
      %401 = vmatprep.subr.bf16.mxu0 0
      %402 = vmatpush1.bf16.xpose.msra.mxu0 0
      %403 = vmatprep.subr.bf16.mxu0 0
      %404 = vmatpush1.bf16.xpose.msra.mxu0 0
      %405 = vmatprep.subr.bf16.mxu0 0
      %406 = vmatpush1.bf16.xpose.msra.mxu0 0
      %407 = vmatprep.subr.bf16.mxu0 0
      %408 = vmatpush1.bf16.xpose.msra.mxu0 0
      %409 = vmatprep.subr.bf16.mxu0 0
      %410 = vmatpush1.bf16.xpose.msra.mxu0 0
      %411 = vmatprep.subr.bf16.mxu0 0
      %412 = vmatpush1.bf16.xpose.msra.mxu0 0
      %413 = vmatprep.subr.bf16.mxu0 0
      %414 = vmatpush1.bf16.xpose.msra.mxu0 0
      %415 = vmatprep.subr.bf16.mxu0 0
      %416 = vmatpush1.bf16.xpose.msra.mxu0 0
      %417 = vmatprep.subr.bf16.mxu0 0
      %418 = vmatpush1.bf16.xpose.msra.mxu0 0
      %419 = vmatprep.subr.bf16.mxu0 0
      %420 = vmatpush1.bf16.xpose.msra.mxu0 0
      %421 = vmatprep.subr.bf16.mxu0 0
      %422 = vmatpush1.bf16.xpose.msra.mxu0 0
      %423 = vmatprep.mubr.bf16.mxu0 0
      %424 = vmatmul.mubr.bf16.gmra.mrb[0].mxu0 %v386
      %v425 = vpop.f32.mrb[0].mxu0
      %v426 = vadd.f32 0.0, %v425
      %v427 = vpop.f32.mrb[0].mxu0
      %v428 = vpop.f32.mrb[0].mxu0
      %v429 = vpop.f32.mrb[0].mxu0
      %430 = vdwg.mxu0
      %v431 = vsel %vm304, %v426, -inf
      %432 = vmax.xlane.f32.xlu0 %v431
      %v433 = vpop.xlane.xlu0 %432
      %v434 = vsub.f32 %v426, %v433
      %v435 = vmul.f32 %v434, 1.442695
      %v436 = vpow.pop %v435
      %v437 = vsel %vm304, %v436, 0.0
      %438 = vadd.xlane.f32.xlu0 %v437
      %v439 = vpop.xlane.xlu0 %438
      %v440 = vpack.c.bf16 %v436, %v436
      %v442 = vunpack.c.l.b16 %v256
      %v443 = vpack.c.b16 %v442, %v442
      %444 = vrot.lane.b32.xlu0 %v443, 120
      %v445 = vpop.permute.xlu0 %444
      %v447 = vsel %vm315, %v440, 0
      %v450 = vand.u32 %v445, %v322
      %452 = vmatprep.subr.bf16.mxu0 0
      %453 = vmatpush1.bf16.msra.mxu0 %v450
      %454 = vmatprep.subr.bf16.mxu0 0
      %455 = vmatpush1.bf16.msra.mxu0 0
      %456 = vmatprep.subr.bf16.mxu0 0
      %457 = vmatpush1.bf16.msra.mxu0 0
      %458 = vmatprep.subr.bf16.mxu0 0
      %459 = vmatpush1.bf16.msra.mxu0 0
      %460 = vmatprep.subr.bf16.mxu0 0
      %461 = vmatpush1.bf16.msra.mxu0 0
      %462 = vmatprep.subr.bf16.mxu0 0
      %463 = vmatpush1.bf16.msra.mxu0 0
      %464 = vmatprep.subr.bf16.mxu0 0
      %465 = vmatpush1.bf16.msra.mxu0 0
      %466 = vmatprep.subr.bf16.mxu0 0
      %467 = vmatpush1.bf16.msra.mxu0 0
      %468 = vmatprep.subr.bf16.mxu0 0
      %469 = vmatpush1.bf16.msra.mxu0 0
      %470 = vmatprep.subr.bf16.mxu0 0
      %471 = vmatpush1.bf16.msra.mxu0 0
      %472 = vmatprep.subr.bf16.mxu0 0
      %473 = vmatpush1.bf16.msra.mxu0 0
      %474 = vmatprep.subr.bf16.mxu0 0
      %475 = vmatpush1.bf16.msra.mxu0 0
      %476 = vmatprep.subr.bf16.mxu0 0
      %477 = vmatpush1.bf16.msra.mxu0 0
      %478 = vmatprep.subr.bf16.mxu0 0
      %479 = vmatpush1.bf16.msra.mxu0 0
      %480 = vmatprep.subr.bf16.mxu0 0
      %481 = vmatpush1.bf16.msra.mxu0 0
      %482 = vmatprep.subr.bf16.mxu0 0
      %483 = vmatpush1.bf16.msra.mxu0 0
      %484 = vmatprep.mubr.bf16.mxu0 0
      %485 = vmatmul.mubr.bf16.gmra.mrb[0].mxu0 %v447
      %v486 = vpop.f32.mrb[0].mxu0
      %v487 = vadd.f32 0.0, %v486
      %v488 = vpop.f32.mrb[0].mxu0
      %v489 = vpop.f32.mrb[0].mxu0
      %v490 = vpop.f32.mrb[0].mxu0
      %491 = vdwg.mxu0
      %v492 = vrcp.pop %v439
      %v493 = vmul.f32 %v487, %v492
      %v494 = vpack.c.bf16 %v493, %v493
      %v496 = vunpack.c.l.b16 %v494
      %v497 = vpack.c.b16 %v496, %v496
      %498 = vrot.lane.b32.xlu0 %v497, 8
      %v499 = vpop.permute.xlu0 %498
      %vm501 = vcmask 124992
      %vm502 = vmand %vm501, %vm370
      %v503 = vld [vmem:[%s252] sm:$0x7]
      %v504 = vsel %vm502, %v499, %v503
      %505 = vst [vmem:[%s252] sm:$0x7] %v504
      %506 = vrot.lane.b32.xlu0 %v377, 112
      %v507 = vpop.permute.xlu0 %506
      %508 = vrot.lane.b32.xlu0 %v382, 112
      %v509 = vpop.permute.xlu0 %508
      %v511 = vsel %vm257, %v507, 0
      %v514 = vsel %vm257, %v509, 0
      %516 = vmatprep.subr.bf16.mxu0 0
      %517 = vmatpush1.bf16.xpose.msra.mxu0 %v514
      %518 = vmatprep.subr.bf16.mxu0 0
      %519 = vmatpush1.bf16.xpose.msra.mxu0 0
      %520 = vmatprep.subr.bf16.mxu0 0
      %521 = vmatpush1.bf16.xpose.msra.mxu0 0
      %522 = vmatprep.subr.bf16.mxu0 0
      %523 = vmatpush1.bf16.xpose.msra.mxu0 0
      %524 = vmatprep.subr.bf16.mxu0 0
      %525 = vmatpush1.bf16.xpose.msra.mxu0 0
      %526 = vmatprep.subr.bf16.mxu0 0
      %527 = vmatpush1.bf16.xpose.msra.mxu0 0
      %528 = vmatprep.subr.bf16.mxu0 0
      %529 = vmatpush1.bf16.xpose.msra.mxu0 0
      %530 = vmatprep.subr.bf16.mxu0 0
      %531 = vmatpush1.bf16.xpose.msra.mxu0 0
      %532 = vmatprep.subr.bf16.mxu0 0
      %533 = vmatpush1.bf16.xpose.msra.mxu0 0
      %534 = vmatprep.subr.bf16.mxu0 0
      %535 = vmatpush1.bf16.xpose.msra.mxu0 0
      %536 = vmatprep.subr.bf16.mxu0 0
      %537 = vmatpush1.bf16.xpose.msra.mxu0 0
      %538 = vmatprep.subr.bf16.mxu0 0
      %539 = vmatpush1.bf16.xpose.msra.mxu0 0
      %540 = vmatprep.subr.bf16.mxu0 0
      %541 = vmatpush1.bf16.xpose.msra.mxu0 0
      %542 = vmatprep.subr.bf16.mxu0 0
      %543 = vmatpush1.bf16.xpose.msra.mxu0 0
      %544 = vmatprep.subr.bf16.mxu0 0
      %545 = vmatpush1.bf16.xpose.msra.mxu0 0
      %546 = vmatprep.subr.bf16.mxu0 0
      %547 = vmatpush1.bf16.xpose.msra.mxu0 0
      %548 = vmatprep.mubr.bf16.mxu0 0
      %549 = vmatmul.mubr.bf16.gmra.mrb[0].mxu0 %v511
      %v550 = vpop.f32.mrb[0].mxu0
      %v551 = vadd.f32 0.0, %v550
      %v552 = vpop.f32.mrb[0].mxu0
      %v553 = vpop.f32.mrb[0].mxu0
      %v554 = vpop.f32.mrb[0].mxu0
      %555 = vdwg.mxu0
      %v556 = vsel %vm304, %v551, -inf
      %557 = vmax.xlane.f32.xlu0 %v556
      %v558 = vpop.xlane.xlu0 %557
      %v559 = vsub.f32 %v551, %v558
      %v560 = vmul.f32 %v559, 1.442695
      %v561 = vpow.pop %v560
      %v562 = vsel %vm304, %v561, 0.0
      %563 = vadd.xlane.f32.xlu0 %v562
      %v564 = vpop.xlane.xlu0 %563
      %v565 = vpack.c.bf16 %v561, %v561
      %566 = vrot.lane.b32.xlu0 %v443, 112
      %v567 = vpop.permute.xlu0 %566
      %v569 = vsel %vm315, %v565, 0
      %v572 = vand.u32 %v567, %v322
      %574 = vmatprep.subr.bf16.mxu0 0
      %575 = vmatpush1.bf16.msra.mxu0 %v572
      %576 = vmatprep.subr.bf16.mxu0 0
      %577 = vmatpush1.bf16.msra.mxu0 0
      %578 = vmatprep.subr.bf16.mxu0 0
      %579 = vmatpush1.bf16.msra.mxu0 0
      %580 = vmatprep.subr.bf16.mxu0 0
      %581 = vmatpush1.bf16.msra.mxu0 0
      %582 = vmatprep.subr.bf16.mxu0 0
      %583 = vmatpush1.bf16.msra.mxu0 0
      %584 = vmatprep.subr.bf16.mxu0 0
      %585 = vmatpush1.bf16.msra.mxu0 0
      %586 = vmatprep.subr.bf16.mxu0 0
      %587 = vmatpush1.bf16.msra.mxu0 0
      %588 = vmatprep.subr.bf16.mxu0 0
      %589 = vmatpush1.bf16.msra.mxu0 0
      %590 = vmatprep.subr.bf16.mxu0 0
      %591 = vmatpush1.bf16.msra.mxu0 0
      %592 = vmatprep.subr.bf16.mxu0 0
      %593 = vmatpush1.bf16.msra.mxu0 0
      %594 = vmatprep.subr.bf16.mxu0 0
      %595 = vmatpush1.bf16.msra.mxu0 0
      %596 = vmatprep.subr.bf16.mxu0 0
      %597 = vmatpush1.bf16.msra.mxu0 0
      %598 = vmatprep.subr.bf16.mxu0 0
      %599 = vmatpush1.bf16.msra.mxu0 0
      %600 = vmatprep.subr.bf16.mxu0 0
      %601 = vmatpush1.bf16.msra.mxu0 0
      %602 = vmatprep.subr.bf16.mxu0 0
      %603 = vmatpush1.bf16.msra.mxu0 0
      %604 = vmatprep.subr.bf16.mxu0 0
      %605 = vmatpush1.bf16.msra.mxu0 0
      %606 = vmatprep.mubr.bf16.mxu0 0
      %607 = vmatmul.mubr.bf16.gmra.mrb[0].mxu0 %v569
      %v608 = vpop.f32.mrb[0].mxu0
      %v609 = vadd.f32 0.0, %v608
      %v610 = vpop.f32.mrb[0].mxu0
      %v611 = vpop.f32.mrb[0].mxu0
      %v612 = vpop.f32.mrb[0].mxu0
      %613 = vdwg.mxu0
      %v614 = vrcp.pop %v564
      %v615 = vmul.f32 %v609, %v614
      %v616 = vpack.c.bf16 %v615, %v615
      %v618 = vunpack.c.l.b16 %v616
      %v619 = vpack.c.b16 %v618, %v618
      %620 = vrot.lane.b32.xlu0 %v619, 16
      %v621 = vpop.permute.xlu0 %620
      %vm623 = vcmask 190592
      %vm624 = vmand %vm623, %vm370
      %v625 = vld [vmem:[%s252] sm:$0x7]
      %v626 = vsel %vm624, %v621, %v625
      %627 = vst [vmem:[%s252] sm:$0x7] %v626
      %628 = vrot.lane.b32.xlu0 %v377, 104
      %v629 = vpop.permute.xlu0 %628
      %630 = vrot.lane.b32.xlu0 %v382, 104
      %v631 = vpop.permute.xlu0 %630
      %v633 = vsel %vm257, %v629, 0
      %v636 = vsel %vm257, %v631, 0
      %638 = vmatprep.subr.bf16.mxu0 0
      %639 = vmatpush1.bf16.xpose.msra.mxu0 %v636
      %640 = vmatprep.subr.bf16.mxu0 0
      %641 = vmatpush1.bf16.xpose.msra.mxu0 0
      %642 = vmatprep.subr.bf16.mxu0 0
      %643 = vmatpush1.bf16.xpose.msra.mxu0 0
      %644 = vmatprep.subr.bf16.mxu0 0
      %645 = vmatpush1.bf16.xpose.msra.mxu0 0
      %646 = vmatprep.subr.bf16.mxu0 0
      %647 = vmatpush1.bf16.xpose.msra.mxu0 0
      %648 = vmatprep.subr.bf16.mxu0 0
      %649 = vmatpush1.bf16.xpose.msra.mxu0 0
      %650 = vmatprep.subr.bf16.mxu0 0
      %651 = vmatpush1.bf16.xpose.msra.mxu0 0
      %652 = vmatprep.subr.bf16.mxu0 0
      %653 = vmatpush1.bf16.xpose.msra.mxu0 0
      %654 = vmatprep.subr.bf16.mxu0 0
      %655 = vmatpush1.bf16.xpose.msra.mxu0 0
      %656 = vmatprep.subr.bf16.mxu0 0
      %657 = vmatpush1.bf16.xpose.msra.mxu0 0
      %658 = vmatprep.subr.bf16.mxu0 0
      %659 = vmatpush1.bf16.xpose.msra.mxu0 0
      %660 = vmatprep.subr.bf16.mxu0 0
      %661 = vmatpush1.bf16.xpose.msra.mxu0 0
      %662 = vmatprep.subr.bf16.mxu0 0
      %663 = vmatpush1.bf16.xpose.msra.mxu0 0
      %664 = vmatprep.subr.bf16.mxu0 0
      %665 = vmatpush1.bf16.xpose.msra.mxu0 0
      %666 = vmatprep.subr.bf16.mxu0 0
      %667 = vmatpush1.bf16.xpose.msra.mxu0 0
      %668 = vmatprep.subr.bf16.mxu0 0
      %669 = vmatpush1.bf16.xpose.msra.mxu0 0
      %670 = vmatprep.mubr.bf16.mxu0 0
      %671 = vmatmul.mubr.bf16.gmra.mrb[0].mxu0 %v633
      %v672 = vpop.f32.mrb[0].mxu0
      %v673 = vadd.f32 0.0, %v672
      %v674 = vpop.f32.mrb[0].mxu0
      %v675 = vpop.f32.mrb[0].mxu0
      %v676 = vpop.f32.mrb[0].mxu0
      %677 = vdwg.mxu0
      %v678 = vsel %vm304, %v673, -inf
      %679 = vmax.xlane.f32.xlu0 %v678
      %v680 = vpop.xlane.xlu0 %679
      %v681 = vsub.f32 %v673, %v680
      %v682 = vmul.f32 %v681, 1.442695
      %v683 = vpow.pop %v682
      %v684 = vsel %vm304, %v683, 0.0
      %685 = vadd.xlane.f32.xlu0 %v684
      %v686 = vpop.xlane.xlu0 %685
      %v687 = vpack.c.bf16 %v683, %v683
      %688 = vrot.lane.b32.xlu0 %v443, 104
      %v689 = vpop.permute.xlu0 %688
      %v691 = vsel %vm315, %v687, 0
      %v694 = vand.u32 %v689, %v322
      %696 = vmatprep.subr.bf16.mxu0 0
      %697 = vmatpush1.bf16.msra.mxu0 %v694
      %698 = vmatprep.subr.bf16.mxu0 0
      %699 = vmatpush1.bf16.msra.mxu0 0
      %700 = vmatprep.subr.bf16.mxu0 0
      %701 = vmatpush1.bf16.msra.mxu0 0
      %702 = vmatprep.subr.bf16.mxu0 0
      %703 = vmatpush1.bf16.msra.mxu0 0
      %704 = vmatprep.subr.bf16.mxu0 0
      %705 = vmatpush1.bf16.msra.mxu0 0
      %706 = vmatprep.subr.bf16.mxu0 0
      %707 = vmatpush1.bf16.msra.mxu0 0
      %708 = vmatprep.subr.bf16.mxu0 0
      %709 = vmatpush1.bf16.msra.mxu0 0
      %710 = vmatprep.subr.bf16.mxu0 0
      %711 = vmatpush1.bf16.msra.mxu0 0
      %712 = vmatprep.subr.bf16.mxu0 0
      %713 = vmatpush1.bf16.msra.mxu0 0
      %714 = vmatprep.subr.bf16.mxu0 0
      %715 = vmatpush1.bf16.msra.mxu0 0
      %716 = vmatprep.subr.bf16.mxu0 0
      %717 = vmatpush1.bf16.msra.mxu0 0
      %718 = vmatprep.subr.bf16.mxu0 0
      %719 = vmatpush1.bf16.msra.mxu0 0
      %720 = vmatprep.subr.bf16.mxu0 0
      %721 = vmatpush1.bf16.msra.mxu0 0
      %722 = vmatprep.subr.bf16.mxu0 0
      %723 = vmatpush1.bf16.msra.mxu0 0
      %724 = vmatprep.subr.bf16.mxu0 0
      %725 = vmatpush1.bf16.msra.mxu0 0
      %726 = vmatprep.subr.bf16.mxu0 0
      %727 = vmatpush1.bf16.msra.mxu0 0
      %728 = vmatprep.mubr.bf16.mxu0 0
      %729 = vmatmul.mubr.bf16.gmra.mrb[0].mxu0 %v691
      %v730 = vpop.f32.mrb[0].mxu0
      %v731 = vadd.f32 0.0, %v730
      %v732 = vpop.f32.mrb[0].mxu0
      %v733 = vpop.f32.mrb[0].mxu0
      %v734 = vpop.f32.mrb[0].mxu0
      %735 = vdwg.mxu0
      %v736 = vrcp.pop %v686
      %v737 = vmul.f32 %v731, %v736
      %v738 = vpack.c.bf16 %v737, %v737
      %v740 = vunpack.c.l.b16 %v738
      %v741 = vpack.c.b16 %v740, %v740
      %742 = vrot.lane.b32.xlu0 %v741, 24
      %v743 = vpop.permute.xlu0 %742
      %vm745 = vcmask 256192
      %vm746 = vmand %vm745, %vm370
      %v747 = vld [vmem:[%s252] sm:$0x7]
      %v748 = vsel %vm746, %v743, %v747
      %749 = vst [vmem:[%s252] sm:$0x7] %v748
      %p750 = scmp.lt.s32.totalorder %s18, 1
      %s751 = scalar_select %p750, %s18, 1
      %p752 = scmp.lt.s32.totalorder %s19, 0
      %s753 = scalar_select %p752, %s19, 0
      %s754 = sadd.s32 %s753, %s751
      %s755 = smul.addr %s754, 4
      %s756 = scalar_lea.vmem %s3, %s755
      // Predicated region
      $region33: #{vit_forward.14} parent=31 // pred_check
        %p757 = pneg %p130
      $region34: #{vit_forward.14} parent=31 // pred_check_branch
        %759 = sbr.rel (%p757) target = $region36
      $region35: #{vit_forward.14} parent=31 // pred_region
        _
      $region36: #{vit_forward.14} parent=31 // pred_fallthru
        _
    $region32: #{vit_forward.14} parent=5 // pred_fallthru
      _
    %p760 = scmp.le.s32.totalorder 2, %s9
    // Predicated region
    $region37: #{vit_forward.14} parent=5 // pred_check
      %p761 = pneg %p760
    $region38: #{vit_forward.14} parent=5 // pred_check_branch
      %763 = sbr.rel (%p761) target = $region40
    $region39: #{vit_forward.14} parent=5 // pred_region
      %s764 = ssub.s32 %s9, 2
      // Predicated region
      $region41: #{vit_forward.14} parent=39 // pred_check
        %p765 = pneg %p136
      $region42: #{vit_forward.14} parent=39 // pred_check_branch
        %767 = sbr.rel (%p765) target = $region44
      $region43: #{vit_forward.14} parent=39 // pred_region
        %p768 = scmp.lt.s32.totalorder %s20, 1
        %s769 = scalar_select %p768, %s20, 1
        %p770 = scmp.lt.s32.totalorder %s21, 0
        %s771 = scalar_select %p770, %s21, 0
        %s772 = sadd.s32 %s771, %s769
        %s773 = smul.addr %s772, 4
        %s774 = scalar_lea.vmem %s3, %s773
      $region44: #{vit_forward.14} parent=39 // pred_fallthru
        _
    $region40: #{vit_forward.14} parent=5 // pred_fallthru
      _
  $region6: #{vit_forward.14} parent=0 // loop_footer
    %s13 = sadd.s32 1, %s9
  $region7: #{vit_forward.14} parent=0 // loop_footer_branch
    %8 = sbr.rel target = $region3
  $region8: #{vit_forward.14} parent=0 // loop_exit
    _

// kernel: vit_forward.12
$region0: #{vit_forward.12}
  #allocation0 [shape = 'u32[]', space=smem, size = 0x4, offset = 0x4, fixed_abs, tag = 'smem constant byte address 0x4 - core index']
  #allocation1 [shape = 'u32[144,128]{1,0:T(1,128)}', space=vmem, size = 0x12000, scoped, tag = 'internal scratch']
  %s0 = inlined_call_operand.vmem [shape: f32[2,4,768], index: 0, kind: input, shape index: {}]
  %s1 = inlined_call_operand.vmem [shape: bf16[768,32], index: 1, kind: input, shape index: {}]
  %s2 = inlined_call_operand.vmem [shape: f32[1,32], index: 2, kind: input, shape index: {}]
  %s3 = inlined_call_operand.vmem [shape: f32[1,32], index: 3, kind: input, shape index: {}]
  %s4 = inlined_call_operand.vmem [shape: f32[1,5,32], index: 4, kind: input, shape index: {}]
  %s5 = inlined_call_operand.vmem [shape: f32[2,5,32], index: 5, kind: output, shape index: {}]
  %s6 = sld [smem:[#allocation0]]
  $region53: #{vit_forward.12} parent=0
    _
  %s8 = ssub.s32 1, %s6
  %s9 = scalar_select 0, %s8, %s6
  loop: start=0, step=1, limit=4
  $region2: #{vit_forward.12} parent=0 // loop_pre_header
    _
  $region3: #{vit_forward.12} parent=0 // loop_header
    %s11 = sphi 0, %s15
    %p12 = scmp.ge.s32.totalorder %s11, 4
    %s21 = sphi 0, %s23
    %s24 = sphi 0, %s21
    %s25 = sphi 0, %s24
    %s41 = sphi 0, %s25
    %s45 = sphi 0, %s45
    %s47 = sphi 0, %s45
    %s48 = sphi 0, %s47
    %s62 = sphi 0, %s48
    %s66 = sphi 0, %s66
    %s68 = sphi 0, %s66
    %s69 = sphi 0, %s68
    %s83 = sphi 0, %s69
    %s87 = sphi 0, %s87
    %s89 = sphi 0, %s87
    %s90 = sphi 0, %s89
    %s104 = sphi 0, %s90
    %s108 = sphi 0, %s108
    %s110 = sphi 0, %s108
    %s111 = sphi 0, %s110
    %s125 = sphi 0, %s111
    %s131 = sphi 0, %s133
    %s134 = sphi 0, %s131
    %s135 = sphi 0, %s134
    %s151 = sphi 0, %s135
  $region4: #{vit_forward.12} parent=0 // loop_header_branch
    %14 = sbr.rel (%p12) target = $region8
  $region5: #{vit_forward.12} parent=0 // loop_body
    %s16 = ssub.s32 %s11, 1
    %s17 = ssub.s32 %s11, 2
    %s18 = sadd.s32 %s11, 1
    %s19 = ssub.s32 %s11, %s18
    %p20 = scmp.eq.s32.totalorder %s19, 0
    %s22 = sadd.s32 %s21, 1
    %s23 = scalar_select %p20, %s21, %s22
    %p26 = pneg %p20
    %p27 = scmp.eq.s32.totalorder %s11, 1
    %p28 = por %p26, %p27
    %p29 = scmp.ne.s32.totalorder %s21, %s24
    %p30 = scmp.eq.s32.totalorder %s11, 0
    %p31 = por %p29, %p30
    %p32 = scmp.ne.s32.totalorder %s21, %s24
    %p33 = scmp.eq.s32.totalorder %s16, 1
    %p34 = por %p32, %p33
    %p35 = scmp.ne.s32.totalorder %s24, %s25
    %p36 = scmp.eq.s32.totalorder %s16, 0
    %p37 = por %p35, %p36
    %p38 = scmp.ne.s32.totalorder %s24, %s25
    %p39 = scmp.eq.s32.totalorder %s17, 1
    %p40 = por %p38, %p39
    %p42 = scmp.ne.s32.totalorder %s25, %s41
    %p43 = scmp.eq.s32.totalorder %s17, 0
    %p44 = por %p42, %p43
    %s46 = sadd.s32 %s45, 1
    %p49 = scmp.eq.s32.totalorder %s11, 1
    %p50 = scmp.ne.s32.totalorder %s45, %s47
    %p51 = scmp.eq.s32.totalorder %s11, 0
    %p52 = por %p50, %p51
    %p53 = scmp.ne.s32.totalorder %s45, %s47
    %p54 = scmp.eq.s32.totalorder %s16, 1
    %p55 = por %p53, %p54
    %p56 = scmp.ne.s32.totalorder %s47, %s48
    %p57 = scmp.eq.s32.totalorder %s16, 0
    %p58 = por %p56, %p57
    %p59 = scmp.ne.s32.totalorder %s47, %s48
    %p60 = scmp.eq.s32.totalorder %s17, 1
    %p61 = por %p59, %p60
    %p63 = scmp.ne.s32.totalorder %s48, %s62
    %p64 = scmp.eq.s32.totalorder %s17, 0
    %p65 = por %p63, %p64
    %s67 = sadd.s32 %s66, 1
    %p70 = scmp.eq.s32.totalorder %s11, 1
    %p71 = scmp.ne.s32.totalorder %s66, %s68
    %p72 = scmp.eq.s32.totalorder %s11, 0
    %p73 = por %p71, %p72
    %p74 = scmp.ne.s32.totalorder %s66, %s68
    %p75 = scmp.eq.s32.totalorder %s16, 1
    %p76 = por %p74, %p75
    %p77 = scmp.ne.s32.totalorder %s68, %s69
    %p78 = scmp.eq.s32.totalorder %s16, 0
    %p79 = por %p77, %p78
    %p80 = scmp.ne.s32.totalorder %s68, %s69
    %p81 = scmp.eq.s32.totalorder %s17, 1
    %p82 = por %p80, %p81
    %p84 = scmp.ne.s32.totalorder %s69, %s83
    %p85 = scmp.eq.s32.totalorder %s17, 0
    %p86 = por %p84, %p85
    %s88 = sadd.s32 %s87, 1
    %p91 = scmp.eq.s32.totalorder %s11, 1
    %p92 = scmp.ne.s32.totalorder %s87, %s89
    %p93 = scmp.eq.s32.totalorder %s11, 0
    %p94 = por %p92, %p93
    %p95 = scmp.ne.s32.totalorder %s87, %s89
    %p96 = scmp.eq.s32.totalorder %s16, 1
    %p97 = por %p95, %p96
    %p98 = scmp.ne.s32.totalorder %s89, %s90
    %p99 = scmp.eq.s32.totalorder %s16, 0
    %p100 = por %p98, %p99
    %p101 = scmp.ne.s32.totalorder %s89, %s90
    %p102 = scmp.eq.s32.totalorder %s17, 1
    %p103 = por %p101, %p102
    %p105 = scmp.ne.s32.totalorder %s90, %s104
    %p106 = scmp.eq.s32.totalorder %s17, 0
    %p107 = por %p105, %p106
    %s109 = sadd.s32 %s108, 1
    %p112 = scmp.eq.s32.totalorder %s11, 1
    %p113 = scmp.ne.s32.totalorder %s108, %s110
    %p114 = scmp.eq.s32.totalorder %s11, 0
    %p115 = por %p113, %p114
    %p116 = scmp.ne.s32.totalorder %s108, %s110
    %p117 = scmp.eq.s32.totalorder %s16, 1
    %p118 = por %p116, %p117
    %p119 = scmp.ne.s32.totalorder %s110, %s111
    %p120 = scmp.eq.s32.totalorder %s16, 0
    %p121 = por %p119, %p120
    %p122 = scmp.ne.s32.totalorder %s110, %s111
    %p123 = scmp.eq.s32.totalorder %s17, 1
    %p124 = por %p122, %p123
    %p126 = scmp.ne.s32.totalorder %s111, %s125
    %p127 = scmp.eq.s32.totalorder %s17, 0
    %p128 = por %p126, %p127
    %s129 = ssub.s32 %s11, %s18
    %p130 = scmp.eq.s32.totalorder %s129, 0
    %s132 = sadd.s32 %s131, 1
    %s133 = scalar_select %p130, %s131, %s132
    %p136 = pneg %p130
    %p137 = scmp.eq.s32.totalorder %s11, 1
    %p138 = por %p136, %p137
    %p139 = scmp.ne.s32.totalorder %s131, %s134
    %p140 = scmp.eq.s32.totalorder %s11, 0
    %p141 = por %p139, %p140
    %p142 = scmp.ne.s32.totalorder %s131, %s134
    %p143 = scmp.eq.s32.totalorder %s16, 1
    %p144 = por %p142, %p143
    %p145 = scmp.ne.s32.totalorder %s134, %s135
    %p146 = scmp.eq.s32.totalorder %s16, 0
    %p147 = por %p145, %p146
    %p148 = scmp.ne.s32.totalorder %s134, %s135
    %p149 = scmp.eq.s32.totalorder %s17, 1
    %p150 = por %p148, %p149
    %p152 = scmp.ne.s32.totalorder %s135, %s151
    %p153 = scmp.eq.s32.totalorder %s17, 0
    %p154 = por %p152, %p153
    %p155 = scmp.le.s32.totalorder 1, %s11
    %p156 = scmp.lt.s32.totalorder %s11, 3
    %p157 = pnand %p155, %p156
    %p158 = pneg %p157
    // Predicated region
    $region9: #{vit_forward.12} parent=5 // pred_check
      _
    $region10: #{vit_forward.12} parent=5 // pred_check_branch
      %160 = sbr.rel (%p157) target = $region12
    $region11: #{vit_forward.12} parent=5 // pred_region
      %s161 = ssub.s32 %s11, 1
      // Predicated region
      $region13: #{vit_forward.12} parent=11 // pred_check
        %p162 = pneg %p58
      $region14: #{vit_forward.12} parent=11 // pred_check_branch
        %164 = sbr.rel (%p162) target = $region16
      $region15: #{vit_forward.12} parent=11 // pred_region
        _
      $region16: #{vit_forward.12} parent=11 // pred_fallthru
        _
      // Predicated region
      $region17: #{vit_forward.12} parent=11 // pred_check
        %p165 = pneg %p79
      $region18: #{vit_forward.12} parent=11 // pred_check_branch
        %167 = sbr.rel (%p165) target = $region20
      $region19: #{vit_forward.12} parent=11 // pred_region
        _
      $region20: #{vit_forward.12} parent=11 // pred_fallthru
        _
      // Predicated region
      $region21: #{vit_forward.12} parent=11 // pred_check
        %p168 = pneg %p100
      $region22: #{vit_forward.12} parent=11 // pred_check_branch
        %170 = sbr.rel (%p168) target = $region24
      $region23: #{vit_forward.12} parent=11 // pred_region
        _
      $region24: #{vit_forward.12} parent=11 // pred_fallthru
        _
      // Predicated region
      $region25: #{vit_forward.12} parent=11 // pred_check
        %p171 = pneg %p121
      $region26: #{vit_forward.12} parent=11 // pred_check_branch
        %173 = sbr.rel (%p171) target = $region28
      $region27: #{vit_forward.12} parent=11 // pred_region
        _
      $region28: #{vit_forward.12} parent=11 // pred_fallthru
        _
    $region12: #{vit_forward.12} parent=5 // pred_fallthru
      _
    %p174 = scmp.lt.s32.totalorder %s11, 2
    // Predicated region
    $region29: #{vit_forward.12} parent=5 // pred_check
      %p175 = pneg %p174
    $region30: #{vit_forward.12} parent=5 // pred_check_branch
      %177 = sbr.rel (%p175) target = $region32
    $region31: #{vit_forward.12} parent=5 // pred_region
      // Predicated region
      $region33: #{vit_forward.12} parent=31 // pred_check
        %p178 = pneg %p31
      $region34: #{vit_forward.12} parent=31 // pred_check_branch
        %180 = sbr.rel (%p178) target = $region36
      $region35: #{vit_forward.12} parent=31 // pred_region
        %p181 = scmp.lt.s32.totalorder %s11, 1
        %s182 = scalar_select %p181, %s11, 1
        %s183 = smul.addr %s182, 6
        %s184 = smul.addr %s183, 4
        %s185 = scalar_lea.vmem %s0, %s184
      $region36: #{vit_forward.12} parent=31 // pred_fallthru
        _
    $region32: #{vit_forward.12} parent=5 // pred_fallthru
      _
    %p186 = scmp.le.s32.totalorder 1, %s11
    %p187 = scmp.lt.s32.totalorder %s11, 3
    %p188 = pnand %p186, %p187
    %p189 = pneg %p188
    // Predicated region
    $region37: #{vit_forward.12} parent=5 // pred_check
      _
    $region38: #{vit_forward.12} parent=5 // pred_check_branch
      %191 = sbr.rel (%p188) target = $region40
    $region39: #{vit_forward.12} parent=5 // pred_region
      %s192 = ssub.s32 %s11, 1
      %p193 = scmp.lt.s32.totalorder %s16, 1
      %s194 = scalar_select %p193, %s16, 1
      %s195 = smul.addr %s194, 6
      %s196 = smul.addr %s195, 4
      %s197 = scalar_lea.vmem %s0, %s196
      %p198 = pneg %p37
      %p199 = pneg %p34
      %p200 = pneg %p58
      %p201 = pneg %p55
      %p202 = pneg %p79
      %p203 = pneg %p76
      %p204 = pneg %p100
      %p205 = pneg %p97
      %p206 = pneg %p121
      %p207 = pneg %p118
      %p208 = pneg %p147
      %p209 = pneg %p144
      %p210 = scmp.lt.s32.totalorder %s16, 1
      %s211 = scalar_select %p210, %s16, 1
      %s212 = smul.addr %s211, 8
      %s213 = scalar_lea.vmem %s5, %s212
      %p214 = scmp.lt.s32.totalorder %s16, 1
      %s215 = scalar_select %p214, %s16, 1
      %s216 = smul.addr %s215, 6
      %s217 = smul.addr %s216, 4
      %s218 = scalar_lea.vmem %s0, %s217
      %p219 = scmp.lt.s32.totalorder %s16, 1
      %s220 = scalar_select %p219, %s16, 1
      %s221 = smul.addr %s220, 8
      %s222 = scalar_lea.vmem %s5, %s221
      %v224 = vld [vmem:[%s218] sm:$0xff]
      %v225 = vld [vmem:[%s218 + $0x8] sm:$0xff]
      %v226 = vld [vmem:[%s218 + $0x10] sm:$0xff]
      %v230 = vcombine.high %v224, %v224
      %v231 = vcombine.high %v225, %v225
      %v232 = vcombine.high %v226, %v226
      %v236 = vpack.c.bf16 %v224, %v224
      %v237 = vpack.c.bf16 %v230, %v230
      %v238 = vpack.c.bf16 %v225, %v225
      %v239 = vpack.c.bf16 %v231, %v231
      %v240 = vpack.c.bf16 %v226, %v226
      %v241 = vpack.c.bf16 %v232, %v232
      %v242 = vld [vmem:[%s1] sm:$0xf]
      %v243 = vld [vmem:[%s1 + $0x4] sm:$0xf]
      %v244 = vld [vmem:[%s1 + $0x8] sm:$0xf]
      %v245 = vld [vmem:[%s1 + $0xc] sm:$0xf]
      %v246 = vld [vmem:[%s1 + $0x10] sm:$0xf]
      %v247 = vld [vmem:[%s1 + $0x14] sm:$0xf]
      %v248 = vld [vmem:[%s1 + $0x18] sm:$0xf]
      %v249 = vld [vmem:[%s1 + $0x1c] sm:$0xf]
      %v250 = vld [vmem:[%s1 + $0x20] sm:$0xf]
      %v251 = vld [vmem:[%s1 + $0x24] sm:$0xf]
      %v252 = vld [vmem:[%s1 + $0x28] sm:$0xf]
      %v253 = vld [vmem:[%s1 + $0x2c] sm:$0xf]
      %v254 = vld [vmem:[%s1 + $0x30] sm:$0xf]
      %v255 = vld [vmem:[%s1 + $0x34] sm:$0xf]
      %v256 = vld [vmem:[%s1 + $0x38] sm:$0xf]
      %v257 = vld [vmem:[%s1 + $0x3c] sm:$0xf]
      %v258 = vld [vmem:[%s1 + $0x40] sm:$0xf]
      %v259 = vld [vmem:[%s1 + $0x44] sm:$0xf]
      %v260 = vld [vmem:[%s1 + $0x48] sm:$0xf]
      %v261 = vld [vmem:[%s1 + $0x4c] sm:$0xf]
      %v262 = vld [vmem:[%s1 + $0x50] sm:$0xf]
      %v263 = vld [vmem:[%s1 + $0x54] sm:$0xf]
      %v264 = vld [vmem:[%s1 + $0x58] sm:$0xf]
      %v265 = vld [vmem:[%s1 + $0x5c] sm:$0xf]
      %v266 = vld [vmem:[%s1 + $0x60] sm:$0xf]
      %v267 = vld [vmem:[%s1 + $0x64] sm:$0xf]
      %v268 = vld [vmem:[%s1 + $0x68] sm:$0xf]
      %v269 = vld [vmem:[%s1 + $0x6c] sm:$0xf]
      %v270 = vld [vmem:[%s1 + $0x70] sm:$0xf]
      %v271 = vld [vmem:[%s1 + $0x74] sm:$0xf]
      %v272 = vld [vmem:[%s1 + $0x78] sm:$0xf]
      %v273 = vld [vmem:[%s1 + $0x7c] sm:$0xf]
      %v274 = vld [vmem:[%s1 + $0x80] sm:$0xf]
      %v275 = vld [vmem:[%s1 + $0x84] sm:$0xf]
      %v276 = vld [vmem:[%s1 + $0x88] sm:$0xf]
      %v277 = vld [vmem:[%s1 + $0x8c] sm:$0xf]
      %v278 = vld [vmem:[%s1 + $0x90] sm:$0xf]
      %v279 = vld [vmem:[%s1 + $0x94] sm:$0xf]
      %v280 = vld [vmem:[%s1 + $0x98] sm:$0xf]
      %v281 = vld [vmem:[%s1 + $0x9c] sm:$0xf]
      %v282 = vld [vmem:[%s1 + $0xa0] sm:$0xf]
      %v283 = vld [vmem:[%s1 + $0xa4] sm:$0xf]
      %v284 = vld [vmem:[%s1 + $0xa8] sm:$0xf]
      %v285 = vld [vmem:[%s1 + $0xac] sm:$0xf]
      %v286 = vld [vmem:[%s1 + $0xb0] sm:$0xf]
      %v287 = vld [vmem:[%s1 + $0xb4] sm:$0xf]
      %v288 = vld [vmem:[%s1 + $0xb8] sm:$0xf]
      %v289 = vld [vmem:[%s1 + $0xbc] sm:$0xf]
      %v290 = vld [vmem:[%s1 + $0xc0] sm:$0xf]
      %v291 = vld [vmem:[%s1 + $0xc4] sm:$0xf]
      %v292 = vld [vmem:[%s1 + $0xc8] sm:$0xf]
      %v293 = vld [vmem:[%s1 + $0xcc] sm:$0xf]
      %v294 = vld [vmem:[%s1 + $0xd0] sm:$0xf]
      %v295 = vld [vmem:[%s1 + $0xd4] sm:$0xf]
      %v296 = vld [vmem:[%s1 + $0xd8] sm:$0xf]
      %v297 = vld [vmem:[%s1 + $0xdc] sm:$0xf]
      %v298 = vld [vmem:[%s1 + $0xe0] sm:$0xf]
      %v299 = vld [vmem:[%s1 + $0xe4] sm:$0xf]
      %v300 = vld [vmem:[%s1 + $0xe8] sm:$0xf]
      %v301 = vld [vmem:[%s1 + $0xec] sm:$0xf]
      %v302 = vld [vmem:[%s1 + $0xf0] sm:$0xf]
      %v303 = vld [vmem:[%s1 + $0xf4] sm:$0xf]
      %v304 = vld [vmem:[%s1 + $0xf8] sm:$0xf]
      %v305 = vld [vmem:[%s1 + $0xfc] sm:$0xf]
      %v306 = vld [vmem:[%s1 + $0x100] sm:$0xf]
      %v307 = vld [vmem:[%s1 + $0x104] sm:$0xf]
      %v308 = vld [vmem:[%s1 + $0x108] sm:$0xf]
      %v309 = vld [vmem:[%s1 + $0x10c] sm:$0xf]
      %v310 = vld [vmem:[%s1 + $0x110] sm:$0xf]
      %v311 = vld [vmem:[%s1 + $0x114] sm:$0xf]
      %v312 = vld [vmem:[%s1 + $0x118] sm:$0xf]
      %v313 = vld [vmem:[%s1 + $0x11c] sm:$0xf]
      %v314 = vld [vmem:[%s1 + $0x120] sm:$0xf]
      %v315 = vld [vmem:[%s1 + $0x124] sm:$0xf]
      %v316 = vld [vmem:[%s1 + $0x128] sm:$0xf]
      %v317 = vld [vmem:[%s1 + $0x12c] sm:$0xf]
      %v318 = vld [vmem:[%s1 + $0x130] sm:$0xf]
      %v319 = vld [vmem:[%s1 + $0x134] sm:$0xf]
      %v320 = vld [vmem:[%s1 + $0x138] sm:$0xf]
      %v321 = vld [vmem:[%s1 + $0x13c] sm:$0xf]
      %v322 = vld [vmem:[%s1 + $0x140] sm:$0xf]
      %v323 = vld [vmem:[%s1 + $0x144] sm:$0xf]
      %v324 = vld [vmem:[%s1 + $0x148] sm:$0xf]
      %v325 = vld [vmem:[%s1 + $0x14c] sm:$0xf]
      %v326 = vld [vmem:[%s1 + $0x150] sm:$0xf]
      %v327 = vld [vmem:[%s1 + $0x154] sm:$0xf]
      %v328 = vld [vmem:[%s1 + $0x158] sm:$0xf]
      %v329 = vld [vmem:[%s1 + $0x15c] sm:$0xf]
      %v330 = vld [vmem:[%s1 + $0x160] sm:$0xf]
      %v331 = vld [vmem:[%s1 + $0x164] sm:$0xf]
      %v332 = vld [vmem:[%s1 + $0x168] sm:$0xf]
      %v333 = vld [vmem:[%s1 + $0x16c] sm:$0xf]
      %v334 = vld [vmem:[%s1 + $0x170] sm:$0xf]
      %v335 = vld [vmem:[%s1 + $0x174] sm:$0xf]
      %v336 = vld [vmem:[%s1 + $0x178] sm:$0xf]
      %v337 = vld [vmem:[%s1 + $0x17c] sm:$0xf]
      %v338 = vld [vmem:[%s2] sm:$0x1]
      %v340 = vlaneseq
      %v341 = vshrl.u32 %v340, 7
      %v342 = vsub.s32 0, %v341
      %v343 = vrot.slane %v338, %v342
      %v441 = vunpack.c.l.b16 %v242
      %v442 = vunpack.c.l.b16 %v243
      %v443 = vunpack.c.l.b16 %v244
      %v444 = vunpack.c.l.b16 %v245
      %v445 = vunpack.c.l.b16 %v246
      %v446 = vunpack.c.l.b16 %v247
      %v447 = vunpack.c.l.b16 %v248
      %v448 = vunpack.c.l.b16 %v249
      %v449 = vunpack.c.l.b16 %v250
      %v450 = vunpack.c.l.b16 %v251
      %v451 = vunpack.c.l.b16 %v252
      %v452 = vunpack.c.l.b16 %v253
      %v453 = vunpack.c.l.b16 %v254
      %v454 = vunpack.c.l.b16 %v255
      %v455 = vunpack.c.l.b16 %v256
      %v456 = vunpack.c.l.b16 %v257
      %v457 = vunpack.c.l.b16 %v258
      %v458 = vunpack.c.l.b16 %v259
      %v459 = vunpack.c.l.b16 %v260
      %v460 = vunpack.c.l.b16 %v261
      %v461 = vunpack.c.l.b16 %v262
      %v462 = vunpack.c.l.b16 %v263
      %v463 = vunpack.c.l.b16 %v264
      %v464 = vunpack.c.l.b16 %v265
      %v465 = vunpack.c.l.b16 %v266
      %v466 = vunpack.c.l.b16 %v267
      %v467 = vunpack.c.l.b16 %v268
      %v468 = vunpack.c.l.b16 %v269
      %v469 = vunpack.c.l.b16 %v270
      %v470 = vunpack.c.l.b16 %v271
      %v471 = vunpack.c.l.b16 %v272
      %v472 = vunpack.c.l.b16 %v273
      %v473 = vunpack.c.l.b16 %v274
      %v474 = vunpack.c.l.b16 %v275
      %v475 = vunpack.c.l.b16 %v276
      %v476 = vunpack.c.l.b16 %v277
      %v477 = vunpack.c.l.b16 %v278
      %v478 = vunpack.c.l.b16 %v279
      %v479 = vunpack.c.l.b16 %v280
      %v480 = vunpack.c.l.b16 %v281
      %v481 = vunpack.c.l.b16 %v282
      %v482 = vunpack.c.l.b16 %v283
      %v483 = vunpack.c.l.b16 %v284
      %v484 = vunpack.c.l.b16 %v285
      %v485 = vunpack.c.l.b16 %v286
      %v486 = vunpack.c.l.b16 %v287
      %v487 = vunpack.c.l.b16 %v288
      %v488 = vunpack.c.l.b16 %v289
      %v489 = vunpack.c.l.b16 %v290
      %v490 = vunpack.c.l.b16 %v291
      %v491 = vunpack.c.l.b16 %v292
      %v492 = vunpack.c.l.b16 %v293
      %v493 = vunpack.c.l.b16 %v294
      %v494 = vunpack.c.l.b16 %v295
      %v495 = vunpack.c.l.b16 %v296
      %v496 = vunpack.c.l.b16 %v297
      %v497 = vunpack.c.l.b16 %v298
      %v498 = vunpack.c.l.b16 %v299
      %v499 = vunpack.c.l.b16 %v300
      %v500 = vunpack.c.l.b16 %v301
      %v501 = vunpack.c.l.b16 %v302
      %v502 = vunpack.c.l.b16 %v303
      %v503 = vunpack.c.l.b16 %v304
      %v504 = vunpack.c.l.b16 %v305
      %v505 = vunpack.c.l.b16 %v306
      %v506 = vunpack.c.l.b16 %v307
      %v507 = vunpack.c.l.b16 %v308
      %v508 = vunpack.c.l.b16 %v309
      %v509 = vunpack.c.l.b16 %v310
      %v510 = vunpack.c.l.b16 %v311
      %v511 = vunpack.c.l.b16 %v312
      %v512 = vunpack.c.l.b16 %v313
      %v513 = vunpack.c.l.b16 %v314
      %v514 = vunpack.c.l.b16 %v315
      %v515 = vunpack.c.l.b16 %v316
      %v516 = vunpack.c.l.b16 %v317
      %v517 = vunpack.c.l.b16 %v318
      %v518 = vunpack.c.l.b16 %v319
      %v519 = vunpack.c.l.b16 %v320
      %v520 = vunpack.c.l.b16 %v321
      %v521 = vunpack.c.l.b16 %v322
      %v522 = vunpack.c.l.b16 %v323
      %v523 = vunpack.c.l.b16 %v324
      %v524 = vunpack.c.l.b16 %v325
      %v525 = vunpack.c.l.b16 %v326
      %v526 = vunpack.c.l.b16 %v327
      %v527 = vunpack.c.l.b16 %v328
      %v528 = vunpack.c.l.b16 %v329
      %v529 = vunpack.c.l.b16 %v330
      %v530 = vunpack.c.l.b16 %v331
      %v531 = vunpack.c.l.b16 %v332
      %v532 = vunpack.c.l.b16 %v333
      %v533 = vunpack.c.l.b16 %v334
      %v534 = vunpack.c.l.b16 %v335
      %v535 = vunpack.c.l.b16 %v336
      %v536 = vunpack.c.l.b16 %v337
      %v537 = vpack.c.b16 %v442, %v441
      %v538 = vpack.c.b16 %v444, %v443
      %v539 = vpack.c.b16 %v446, %v445
      %v540 = vpack.c.b16 %v448, %v447
      %v541 = vpack.c.b16 %v450, %v449
      %v542 = vpack.c.b16 %v452, %v451
      %v543 = vpack.c.b16 %v454, %v453
      %v544 = vpack.c.b16 %v456, %v455
      %v545 = vpack.c.b16 %v458, %v457
      %v546 = vpack.c.b16 %v460, %v459
      %v547 = vpack.c.b16 %v462, %v461
      %v548 = vpack.c.b16 %v464, %v463
      %v549 = vpack.c.b16 %v466, %v465
      %v550 = vpack.c.b16 %v468, %v467
      %v551 = vpack.c.b16 %v470, %v469
      %v552 = vpack.c.b16 %v472, %v471
      %v553 = vpack.c.b16 %v474, %v473
      %v554 = vpack.c.b16 %v476, %v475
      %v555 = vpack.c.b16 %v478, %v477
      %v556 = vpack.c.b16 %v480, %v479
      %v557 = vpack.c.b16 %v482, %v481
      %v558 = vpack.c.b16 %v484, %v483
      %v559 = vpack.c.b16 %v486, %v485
      %v560 = vpack.c.b16 %v488, %v487
      %v561 = vpack.c.b16 %v490, %v489
      %v562 = vpack.c.b16 %v492, %v491
      %v563 = vpack.c.b16 %v494, %v493
      %v564 = vpack.c.b16 %v496, %v495
      %v565 = vpack.c.b16 %v498, %v497
      %v566 = vpack.c.b16 %v500, %v499
      %v567 = vpack.c.b16 %v502, %v501
      %v568 = vpack.c.b16 %v504, %v503
      %v569 = vpack.c.b16 %v506, %v505
      %v570 = vpack.c.b16 %v508, %v507
      %v571 = vpack.c.b16 %v510, %v509
      %v572 = vpack.c.b16 %v512, %v511
      %v573 = vpack.c.b16 %v514, %v513
      %v574 = vpack.c.b16 %v516, %v515
      %v575 = vpack.c.b16 %v518, %v517
      %v576 = vpack.c.b16 %v520, %v519
      %v577 = vpack.c.b16 %v522, %v521
      %v578 = vpack.c.b16 %v524, %v523
      %v579 = vpack.c.b16 %v526, %v525
      %v580 = vpack.c.b16 %v528, %v527
      %v581 = vpack.c.b16 %v530, %v529
      %v582 = vpack.c.b16 %v532, %v531
      %v583 = vpack.c.b16 %v534, %v533
      %v584 = vpack.c.b16 %v536, %v535
      %633 = vmatprep.subr.bf16.mxu0 0
      %634 = vmatpush1.bf16.msra.mxu0 %v537
      %635 = vmatprep.subr.bf16.mxu0 0
      %636 = vmatpush1.bf16.msra.mxu0 %v538
      %637 = vmatprep.subr.bf16.mxu0 0
      %638 = vmatpush1.bf16.msra.mxu0 %v539
      %639 = vmatprep.subr.bf16.mxu0 0
      %640 = vmatpush1.bf16.msra.mxu0 %v540
      %641 = vmatprep.subr.bf16.mxu0 0
      %642 = vmatpush1.bf16.msra.mxu0 %v541
      %643 = vmatprep.subr.bf16.mxu0 0
      %644 = vmatpush1.bf16.msra.mxu0 %v542
      %645 = vmatprep.subr.bf16.mxu0 0
      %646 = vmatpush1.bf16.msra.mxu0 %v543
      %647 = vmatprep.subr.bf16.mxu0 0
      %648 = vmatpush1.bf16.msra.mxu0 %v544
      %649 = vmatprep.subr.bf16.mxu0 0
      %650 = vmatpush1.bf16.msra.mxu0 %v545
      %651 = vmatprep.subr.bf16.mxu0 0
      %652 = vmatpush1.bf16.msra.mxu0 %v546
      %653 = vmatprep.subr.bf16.mxu0 0
      %654 = vmatpush1.bf16.msra.mxu0 %v547
      %655 = vmatprep.subr.bf16.mxu0 0
      %656 = vmatpush1.bf16.msra.mxu0 %v548
      %657 = vmatprep.subr.bf16.mxu0 0
      %658 = vmatpush1.bf16.msra.mxu0 %v549
      %659 = vmatprep.subr.bf16.mxu0 0
      %660 = vmatpush1.bf16.msra.mxu0 %v550
      %661 = vmatprep.subr.bf16.mxu0 0
      %662 = vmatpush1.bf16.msra.mxu0 %v551
      %663 = vmatprep.subr.bf16.mxu0 0
      %664 = vmatpush1.bf16.msra.mxu0 %v552
      %665 = vmatprep.mubr.bf16.mxu0 %v237
      %666 = vmatmul.mubr.bf16.gmra.mrb[0].mxu0 %v236
      %v667 = vpop.f32.mrb[0].mxu0
      %v668 = vadd.f32 %v343, %v667
      %v669 = vpop.f32.mrb[0].mxu0
      %v670 = vpop.f32.mrb[0].mxu0
      %v671 = vpop.f32.mrb[0].mxu0
      %672 = vdwg.mxu0
      %673 = vmatprep.subr.bf16.mxu0 0
      %674 = vmatpush1.bf16.msra.mxu0 %v553
      %675 = vmatprep.subr.bf16.mxu0 0
      %676 = vmatpush1.bf16.msra.mxu0 %v554
      %677 = vmatprep.subr.bf16.mxu0 0
      %678 = vmatpush1.bf16.msra.mxu0 %v555
      %679 = vmatprep.subr.bf16.mxu0 0
      %680 = vmatpush1.bf16.msra.mxu0 %v556
      %681 = vmatprep.subr.bf16.mxu0 0
      %682 = vmatpush1.bf16.msra.mxu0 %v557
      %683 = vmatprep.subr.bf16.mxu0 0
      %684 = vmatpush1.bf16.msra.mxu0 %v558
      %685 = vmatprep.subr.bf16.mxu0 0
      %686 = vmatpush1.bf16.msra.mxu0 %v559
      %687 = vmatprep.subr.bf16.mxu0 0
      %688 = vmatpush1.bf16.msra.mxu0 %v560
      %689 = vmatprep.subr.bf16.mxu0 0
      %690 = vmatpush1.bf16.msra.mxu0 %v561
      %691 = vmatprep.subr.bf16.mxu0 0
      %692 = vmatpush1.bf16.msra.mxu0 %v562
      %693 = vmatprep.subr.bf16.mxu0 0
      %694 = vmatpush1.bf16.msra.mxu0 %v563
      %695 = vmatprep.subr.bf16.mxu0 0
      %696 = vmatpush1.bf16.msra.mxu0 %v564
      %697 = vmatprep.subr.bf16.mxu0 0
      %698 = vmatpush1.bf16.msra.mxu0 %v565
      %699 = vmatprep.subr.bf16.mxu0 0
      %700 = vmatpush1.bf16.msra.mxu0 %v566
      %701 = vmatprep.subr.bf16.mxu0 0
      %702 = vmatpush1.bf16.msra.mxu0 %v567
      %703 = vmatprep.subr.bf16.mxu0 0
      %704 = vmatpush1.bf16.msra.mxu0 %v568
      %705 = vmatprep.mubr.bf16.mxu0 %v239
      %706 = vmatmul.mubr.bf16.gmra.mrb[0].mxu0 %v238
      %v707 = vpop.f32.mrb[0].mxu0
      %v708 = vadd.f32 %v668, %v707
      %v709 = vpop.f32.mrb[0].mxu0
      %v710 = vpop.f32.mrb[0].mxu0
      %v711 = vpop.f32.mrb[0].mxu0
      %712 = vdwg.mxu0
      %713 = vmatprep.subr.bf16.mxu0 0
      %714 = vmatpush1.bf16.msra.mxu0 %v569
      %715 = vmatprep.subr.bf16.mxu0 0
      %716 = vmatpush1.bf16.msra.mxu0 %v570
      %717 = vmatprep.subr.bf16.mxu0 0
      %718 = vmatpush1.bf16.msra.mxu0 %v571
      %719 = vmatprep.subr.bf16.mxu0 0
      %720 = vmatpush1.bf16.msra.mxu0 %v572
      %721 = vmatprep.subr.bf16.mxu0 0
      %722 = vmatpush1.bf16.msra.mxu0 %v573
      %723 = vmatprep.subr.bf16.mxu0 0
      %724 = vmatpush1.bf16.msra.mxu0 %v574
      %725 = vmatprep.subr.bf16.mxu0 0
      %726 = vmatpush1.bf16.msra.mxu0 %v575
      %727 = vmatprep.subr.bf16.mxu0 0
      %728 = vmatpush1.bf16.msra.mxu0 %v576
      %729 = vmatprep.subr.bf16.mxu0 0
      %730 = vmatpush1.bf16.msra.mxu0 %v577
      %731 = vmatprep.subr.bf16.mxu0 0
      %732 = vmatpush1.bf16.msra.mxu0 %v578
      %733 = vmatprep.subr.bf16.mxu0 0
      %734 = vmatpush1.bf16.msra.mxu0 %v579
      %735 = vmatprep.subr.bf16.mxu0 0
      %736 = vmatpush1.bf16.msra.mxu0 %v580
      %737 = vmatprep.subr.bf16.mxu0 0
      %738 = vmatpush1.bf16.msra.mxu0 %v581
      %739 = vmatprep.subr.bf16.mxu0 0
      %740 = vmatpush1.bf16.msra.mxu0 %v582
      %741 = vmatprep.subr.bf16.mxu0 0
      %742 = vmatpush1.bf16.msra.mxu0 %v583
      %743 = vmatprep.subr.bf16.mxu0 0
      %744 = vmatpush1.bf16.msra.mxu0 %v584
      %745 = vmatprep.mubr.bf16.mxu0 %v241
      %746 = vmatmul.mubr.bf16.gmra.mrb[0].mxu0 %v240
      %v747 = vpop.f32.mrb[0].mxu0
      %v748 = vadd.f32 %v708, %v747
      %v749 = vpop.f32.mrb[0].mxu0
      %v750 = vpop.f32.mrb[0].mxu0
      %v751 = vpop.f32.mrb[0].mxu0
      %752 = vdwg.mxu0
      %v753 = vld [vmem:[%s3] sm:$0x1]
      %v755 = vrot.slane %v748, 7
      %vm757 = vcmask 1040384
      %v758 = vsel %vm757, %v753, %v755
      %v759 = vld [vmem:[%s4] sm:$0x1f]
      %v760 = vadd.f32 %v758, %v759
      %vm761 = vcmask 258048
      %762 = vst.msk [vmem:[%s222] sm:$0x1f] %vm761, %v760
      %p763 = scmp.lt.s32.totalorder %s16, 1
      %s764 = scalar_select %p763, %s16, 1
      %s765 = smul.addr %s764, 8
      %s766 = scalar_lea.vmem %s5, %s765
      // Predicated region
      $region41: #{vit_forward.12} parent=39 // pred_check
        %p767 = pneg %p144
      $region42: #{vit_forward.12} parent=39 // pred_check_branch
        %769 = sbr.rel (%p767) target = $region44
      $region43: #{vit_forward.12} parent=39 // pred_region
        _
      $region44: #{vit_forward.12} parent=39 // pred_fallthru
        _
    $region40: #{vit_forward.12} parent=5 // pred_fallthru
      _
    %p770 = scmp.le.s32.totalorder 2, %s11
    // Predicated region
    $region45: #{vit_forward.12} parent=5 // pred_check
      %p771 = pneg %p770
    $region46: #{vit_forward.12} parent=5 // pred_check_branch
      %773 = sbr.rel (%p771) target = $region48
    $region47: #{vit_forward.12} parent=5 // pred_region
      %s774 = ssub.s32 %s11, 2
      // Predicated region
      $region49: #{vit_forward.12} parent=47 // pred_check
        %p775 = pneg %p150
      $region50: #{vit_forward.12} parent=47 // pred_check_branch
        %777 = sbr.rel (%p775) target = $region52
      $region51: #{vit_forward.12} parent=47 // pred_region
        %p778 = scmp.lt.s32.totalorder %s17, 1
        %s779 = scalar_select %p778, %s17, 1
        %s780 = smul.addr %s779, 8
        %s781 = scalar_lea.vmem %s5, %s780
      $region52: #{vit_forward.12} parent=47 // pred_fallthru
        _
    $region48: #{vit_forward.12} parent=5 // pred_fallthru
      _
  $region6: #{vit_forward.12} parent=0 // loop_footer
    %s15 = sadd.s32 1, %s11
  $region7: #{vit_forward.12} parent=0 // loop_footer_branch
    %10 = sbr.rel target = $region3
  $region8: #{vit_forward.12} parent=0 // loop_exit
    _

// kernel: vit_forward.17
$region0: #{vit_forward.17}
  #allocation0 [shape = 'u32[]', space=smem, size = 0x4, offset = 0x4, fixed_abs, tag = 'smem constant byte address 0x4 - core index']
  #allocation1 [shape = 'u32[144,128]{1,0:T(1,128)}', space=vmem, size = 0x12000, scoped, tag = 'internal scratch']
  %s0 = inlined_call_operand.vmem [shape: bf16[10,64], index: 0, kind: input, shape index: {}]
  %s1 = inlined_call_operand.vmem [shape: bf16[64,32], index: 1, kind: input, shape index: {}]
  %s2 = inlined_call_operand.vmem [shape: f32[1,32], index: 2, kind: input, shape index: {}]
  %s3 = inlined_call_operand.vmem [shape: f32[10,32], index: 3, kind: input, shape index: {}]
  %s4 = inlined_call_operand.vmem [shape: f32[10,32], index: 4, kind: output, shape index: {}]
  %s5 = sld [smem:[#allocation0]]
  $region26: #{vit_forward.17} parent=0
    _
  %s7 = ssub.s32 1, %s5
  %s8 = scalar_select 0, %s7, %s5
  // Predicated region
  $region2: #{vit_forward.17} parent=0 // pred_check
    _
  $region3: #{vit_forward.17} parent=0 // pred_check_branch
    %10 = sbr.rel (0) target = $region5
  $region4: #{vit_forward.17} parent=0 // pred_region
    _
  $region5: #{vit_forward.17} parent=0 // pred_fallthru
    _
  // Predicated region
  $region6: #{vit_forward.17} parent=0 // pred_check
    _
  $region7: #{vit_forward.17} parent=0 // pred_check_branch
    %12 = sbr.rel (0) target = $region9
  $region8: #{vit_forward.17} parent=0 // pred_region
    _
  $region9: #{vit_forward.17} parent=0 // pred_fallthru
    _
  // Predicated region
  $region10: #{vit_forward.17} parent=0 // pred_check
    _
  $region11: #{vit_forward.17} parent=0 // pred_check_branch
    %14 = sbr.rel (0) target = $region13
  $region12: #{vit_forward.17} parent=0 // pred_region
    _
  $region13: #{vit_forward.17} parent=0 // pred_fallthru
    _
  // Predicated region
  $region14: #{vit_forward.17} parent=0 // pred_check
    _
  $region15: #{vit_forward.17} parent=0 // pred_check_branch
    %16 = sbr.rel (0) target = $region17
  $region16: #{vit_forward.17} parent=0 // pred_region
    _
  $region17: #{vit_forward.17} parent=0 // pred_fallthru
    _
  %v18 = vld [vmem:[%s0] sm:$0xf]
  %v19 = vld [vmem:[%s0 + $0x4] sm:$0x1]
  %v20 = vld [vmem:[%s1] sm:$0xf]
  %v21 = vld [vmem:[%s1 + $0x4] sm:$0xf]
  %v22 = vld [vmem:[%s1 + $0x8] sm:$0xf]
  %v23 = vld [vmem:[%s1 + $0xc] sm:$0xf]
  %v24 = vld [vmem:[%s1 + $0x10] sm:$0xf]
  %v25 = vld [vmem:[%s1 + $0x14] sm:$0xf]
  %v26 = vld [vmem:[%s1 + $0x18] sm:$0xf]
  %v27 = vld [vmem:[%s1 + $0x1c] sm:$0xf]
  %v28 = vld [vmem:[%s2] sm:$0x1]
  %v30 = vlaneseq
  %v31 = vshrl.u32 %v30, 7
  %v32 = vsub.s32 0, %v31
  %v33 = vrot.slane %v28, %v32
  %v37 = vunpack.c.l.b16 %v18
  %v38 = vunpack.c.l.b16 %v19
  %v39 = vpack.c.b16 %v38, %v37
  %v48 = vunpack.c.l.b16 %v20
  %v49 = vunpack.c.l.b16 %v21
  %v50 = vunpack.c.l.b16 %v22
  %v51 = vunpack.c.l.b16 %v23
  %v52 = vunpack.c.l.b16 %v24
  %v53 = vunpack.c.l.b16 %v25
  %v54 = vunpack.c.l.b16 %v26
  %v55 = vunpack.c.l.b16 %v27
  %v56 = vpack.c.b16 %v49, %v48
  %v57 = vpack.c.b16 %v51, %v50
  %v58 = vpack.c.b16 %v53, %v52
  %v59 = vpack.c.b16 %v55, %v54
  %vm64 = vcmask 523264
  %v66 = vsel %vm64, %v39, 0
  %68 = vmatprep.subr.bf16.mxu0 0
  %69 = vmatpush1.bf16.msra.mxu0 %v56
  %70 = vmatprep.subr.bf16.mxu0 0
  %71 = vmatpush1.bf16.msra.mxu0 %v57
  %72 = vmatprep.subr.bf16.mxu0 0
  %73 = vmatpush1.bf16.msra.mxu0 %v58
  %74 = vmatprep.subr.bf16.mxu0 0
  %75 = vmatpush1.bf16.msra.mxu0 %v59
  %76 = vmatprep.subr.bf16.mxu0 0
  %77 = vmatpush1.bf16.msra.mxu0 0
  %78 = vmatprep.subr.bf16.mxu0 0
  %79 = vmatpush1.bf16.msra.mxu0 0
  %80 = vmatprep.subr.bf16.mxu0 0
  %81 = vmatpush1.bf16.msra.mxu0 0
  %82 = vmatprep.subr.bf16.mxu0 0
  %83 = vmatpush1.bf16.msra.mxu0 0
  %84 = vmatprep.subr.bf16.mxu0 0
  %85 = vmatpush1.bf16.msra.mxu0 0
  %86 = vmatprep.subr.bf16.mxu0 0
  %87 = vmatpush1.bf16.msra.mxu0 0
  %88 = vmatprep.subr.bf16.mxu0 0
  %89 = vmatpush1.bf16.msra.mxu0 0
  %90 = vmatprep.subr.bf16.mxu0 0
  %91 = vmatpush1.bf16.msra.mxu0 0
  %92 = vmatprep.subr.bf16.mxu0 0
  %93 = vmatpush1.bf16.msra.mxu0 0
  %94 = vmatprep.subr.bf16.mxu0 0
  %95 = vmatpush1.bf16.msra.mxu0 0
  %96 = vmatprep.subr.bf16.mxu0 0
  %97 = vmatpush1.bf16.msra.mxu0 0
  %98 = vmatprep.subr.bf16.mxu0 0
  %99 = vmatpush1.bf16.msra.mxu0 0
  %100 = vmatprep.mubr.bf16.mxu0 0
  %101 = vmatmul.mubr.bf16.gmra.mrb[0].mxu0 %v66
  %v102 = vpop.f32.mrb[0].mxu0
  %v103 = vadd.f32 %v33, %v102
  %v104 = vpop.f32.mrb[0].mxu0
  %v105 = vpop.f32.mrb[0].mxu0
  %v106 = vadd.f32 %v33, %v105
  %v107 = vpop.f32.mrb[0].mxu0
  %108 = vdwg.mxu0
  %v109 = vld [vmem:[%s3] sm:$0xff]
  %v110 = vld [vmem:[%s3 + $0x8] sm:$0x3]
  %v111 = vadd.f32 %v103, %v109
  %v112 = vadd.f32 %v106, %v110
  %vm113 = vcmask 261120
  %114 = vst.msk [vmem:[%s4] sm:$0xff] %vm113, %v111
  %vm115 = vcmask 254976
  %116 = vst.msk [vmem:[%s4 + $0x8] sm:$0x3] %vm115, %v112
  // Predicated region
  $region18: #{vit_forward.17} parent=0 // pred_check
    _
  $region19: #{vit_forward.17} parent=0 // pred_check_branch
    %118 = sbr.rel (0) target = $region21
  $region20: #{vit_forward.17} parent=0 // pred_region
    _
  $region21: #{vit_forward.17} parent=0 // pred_fallthru
    _
  // Predicated region
  $region22: #{vit_forward.17} parent=0 // pred_check
    _
  $region23: #{vit_forward.17} parent=0 // pred_check_branch
    %120 = sbr.rel (0) target = $region25
  $region24: #{vit_forward.17} parent=0 // pred_region
    _
  $region25: #{vit_forward.17} parent=0 // pred_fallthru
    _

// kernel: vit_forward.23
$region0: #{vit_forward.23}
  #allocation0 [shape = 'u32[]', space=smem, size = 0x4, offset = 0x4, fixed_abs, tag = 'smem constant byte address 0x4 - core index']
  #allocation1 [shape = 'u32[144,128]{1,0:T(1,128)}', space=vmem, size = 0x12000, scoped, tag = 'internal scratch']
  %s0 = inlined_call_operand.vmem [shape: f32[10,32], index: 0, kind: input, shape index: {}]
  %s1 = inlined_call_operand.vmem [shape: f32[1,32], index: 1, kind: input, shape index: {}]
  %s2 = inlined_call_operand.vmem [shape: f32[1,32], index: 2, kind: input, shape index: {}]
  %s3 = inlined_call_operand.vmem [shape: f32[10,32], index: 3, kind: output, shape index: {}]
  %s4 = sld [smem:[#allocation0]]
  $region22: #{vit_forward.23} parent=0
    _
  %s6 = ssub.s32 1, %s4
  %s7 = scalar_select 0, %s6, %s4
  // Predicated region
  $region2: #{vit_forward.23} parent=0 // pred_check
    _
  $region3: #{vit_forward.23} parent=0 // pred_check_branch
    %9 = sbr.rel (0) target = $region5
  $region4: #{vit_forward.23} parent=0 // pred_region
    _
  $region5: #{vit_forward.23} parent=0 // pred_fallthru
    _
  // Predicated region
  $region6: #{vit_forward.23} parent=0 // pred_check
    _
  $region7: #{vit_forward.23} parent=0 // pred_check_branch
    %11 = sbr.rel (0) target = $region9
  $region8: #{vit_forward.23} parent=0 // pred_region
    _
  $region9: #{vit_forward.23} parent=0 // pred_fallthru
    _
  // Predicated region
  $region10: #{vit_forward.23} parent=0 // pred_check
    _
  $region11: #{vit_forward.23} parent=0 // pred_check_branch
    %13 = sbr.rel (0) target = $region13
  $region12: #{vit_forward.23} parent=0 // pred_region
    _
  $region13: #{vit_forward.23} parent=0 // pred_fallthru
    _
  %v14 = vld [vmem:[%s0] sm:$0xff]
  %v15 = vld [vmem:[%s0 + $0x8] sm:$0x3]
  %v16 = vld [vmem:[%s1] sm:$0x1]
  %v17 = vld [vmem:[%s2] sm:$0x1]
  %vm18 = vcmask 261120
  %v19 = vsel %vm18, %v14, 0.0
  %20 = vadd.xlane.f32.xlu0 %v19
  %v21 = vpop.xlane.xlu0 %20
  %vm22 = vcmask 254976
  %v23 = vsel %vm22, %v15, 0.0
  %24 = vadd.xlane.f32.xlu0 %v23
  %v25 = vpop.xlane.xlu0 %24
  %v26 = vrcp.pop 32.0
  %v27 = vmul.f32 %v21, %v26
  %v28 = vmul.f32 %v25, %v26
  %v29 = vsub.f32 %v14, %v27
  %v30 = vsub.f32 %v15, %v28
  %v31 = vmul.f32 %v29, %v29
  %v32 = vmul.f32 %v30, %v30
  %v33 = vsel %vm18, %v31, 0.0
  %34 = vadd.xlane.f32.xlu0 %v33
  %v35 = vpop.xlane.xlu0 %34
  %v36 = vsel %vm22, %v32, 0.0
  %37 = vadd.xlane.f32.xlu0 %v36
  %v38 = vpop.xlane.xlu0 %37
  %v39 = vmul.f32 %v35, %v26
  %v40 = vmul.f32 %v38, %v26
  %v41 = vadd.f32 %v39, 1e-06
  %v42 = vadd.f32 %v40, 1e-06
  %v43 = vrsqrt.pop %v41
  %v44 = vrsqrt.pop %v42
  %v45 = vmul.f32 %v29, %v43
  %v46 = vmul.f32 %v30, %v44
  %v48 = vlaneseq
  %v49 = vshrl.u32 %v48, 7
  %v50 = vsub.s32 0, %v49
  %v51 = vrot.slane %v16, %v50
  %v53 = vmul.f32 %v45, %v51
  %v54 = vmul.f32 %v46, %v51
  %v56 = vlaneseq
  %v57 = vshrl.u32 %v56, 7
  %v58 = vsub.s32 0, %v57
  %v59 = vrot.slane %v17, %v58
  %v61 = vadd.f32 %v53, %v59
  %v62 = vadd.f32 %v54, %v59
  %63 = vst.msk [vmem:[%s3] sm:$0xff] %vm18, %v61
  %64 = vst.msk [vmem:[%s3 + $0x8] sm:$0x3] %vm22, %v62
  // Predicated region
  $region14: #{vit_forward.23} parent=0 // pred_check
    _
  $region15: #{vit_forward.23} parent=0 // pred_check_branch
    %66 = sbr.rel (0) target = $region17
  $region16: #{vit_forward.23} parent=0 // pred_region
    _
  $region17: #{vit_forward.23} parent=0 // pred_fallthru
    _
  // Predicated region
  $region18: #{vit_forward.23} parent=0 // pred_check
    _
  $region19: #{vit_forward.23} parent=0 // pred_check_branch
    %68 = sbr.rel (0) target = $region21
  $region20: #{vit_forward.23} parent=0 // pred_region
    _
  $region21: #{vit_forward.23} parent=0 // pred_fallthru
    _

// kernel: vit_forward.16
$region0: #{vit_forward.16}
  #allocation0 [shape = 'u32[]', space=smem, size = 0x4, offset = 0x4, fixed_abs, tag = 'smem constant byte address 0x4 - core index']
  #allocation1 [shape = 'u32[144,128]{1,0:T(1,128)}', space=vmem, size = 0x12000, scoped, tag = 'internal scratch']
  %s0 = inlined_call_operand.vmem [shape: f32[10,32], index: 0, kind: input, shape index: {}]
  %s1 = inlined_call_operand.vmem [shape: f32[1,32], index: 1, kind: input, shape index: {}]
  %s2 = inlined_call_operand.vmem [shape: f32[1,32], index: 2, kind: input, shape index: {}]
  %s3 = inlined_call_operand.vmem [shape: bf16[32,64], index: 3, kind: input, shape index: {}]
  %s4 = inlined_call_operand.vmem [shape: f32[1,64], index: 4, kind: input, shape index: {}]
  %s5 = inlined_call_operand.vmem [shape: bf16[10,64], index: 5, kind: output, shape index: {}]
  %s6 = sld [smem:[#allocation0]]
  $region30: #{vit_forward.16} parent=0
    _
  %s8 = ssub.s32 1, %s6
  %s9 = scalar_select 0, %s8, %s6
  // Predicated region
  $region2: #{vit_forward.16} parent=0 // pred_check
    _
  $region3: #{vit_forward.16} parent=0 // pred_check_branch
    %11 = sbr.rel (0) target = $region5
  $region4: #{vit_forward.16} parent=0 // pred_region
    _
  $region5: #{vit_forward.16} parent=0 // pred_fallthru
    _
  // Predicated region
  $region6: #{vit_forward.16} parent=0 // pred_check
    _
  $region7: #{vit_forward.16} parent=0 // pred_check_branch
    %13 = sbr.rel (0) target = $region9
  $region8: #{vit_forward.16} parent=0 // pred_region
    _
  $region9: #{vit_forward.16} parent=0 // pred_fallthru
    _
  // Predicated region
  $region10: #{vit_forward.16} parent=0 // pred_check
    _
  $region11: #{vit_forward.16} parent=0 // pred_check_branch
    %15 = sbr.rel (0) target = $region13
  $region12: #{vit_forward.16} parent=0 // pred_region
    _
  $region13: #{vit_forward.16} parent=0 // pred_fallthru
    _
  // Predicated region
  $region14: #{vit_forward.16} parent=0 // pred_check
    _
  $region15: #{vit_forward.16} parent=0 // pred_check_branch
    %17 = sbr.rel (0) target = $region17
  $region16: #{vit_forward.16} parent=0 // pred_region
    _
  $region17: #{vit_forward.16} parent=0 // pred_fallthru
    _
  // Predicated region
  $region18: #{vit_forward.16} parent=0 // pred_check
    _
  $region19: #{vit_forward.16} parent=0 // pred_check_branch
    %19 = sbr.rel (0) target = $region21
  $region20: #{vit_forward.16} parent=0 // pred_region
    _
  $region21: #{vit_forward.16} parent=0 // pred_fallthru
    _
  %v21 = vld [vmem:[%s0] sm:$0xff]
  %v22 = vld [vmem:[%s0 + $0x8] sm:$0x3]
  %v23 = vld [vmem:[%s1] sm:$0x1]
  %v24 = vld [vmem:[%s2] sm:$0x1]
  %vm25 = vcmask 261120
  %v26 = vsel %vm25, %v21, 0.0
  %27 = vadd.xlane.f32.xlu0 %v26
  %v28 = vpop.xlane.xlu0 %27
  %vm29 = vcmask 254976
  %v30 = vsel %vm29, %v22, 0.0
  %31 = vadd.xlane.f32.xlu0 %v30
  %v32 = vpop.xlane.xlu0 %31
  %v33 = vrcp.pop 32.0
  %v34 = vmul.f32 %v28, %v33
  %v35 = vmul.f32 %v32, %v33
  %v36 = vsub.f32 %v21, %v34
  %v37 = vsub.f32 %v22, %v35
  %v38 = vmul.f32 %v36, %v36
  %v39 = vmul.f32 %v37, %v37
  %v40 = vsel %vm25, %v38, 0.0
  %41 = vadd.xlane.f32.xlu0 %v40
  %v42 = vpop.xlane.xlu0 %41
  %v43 = vsel %vm29, %v39, 0.0
  %44 = vadd.xlane.f32.xlu0 %v43
  %v45 = vpop.xlane.xlu0 %44
  %v46 = vmul.f32 %v42, %v33
  %v47 = vmul.f32 %v45, %v33
  %v48 = vadd.f32 %v46, 1e-06
  %v49 = vadd.f32 %v47, 1e-06
  %v50 = vrsqrt.pop %v48
  %v51 = vrsqrt.pop %v49
  %v52 = vmul.f32 %v36, %v50
  %v53 = vmul.f32 %v37, %v51
  %v55 = vlaneseq
  %v56 = vshrl.u32 %v55, 7
  %v57 = vsub.s32 0, %v56
  %v58 = vrot.slane %v23, %v57
  %v60 = vmul.f32 %v52, %v58
  %v61 = vmul.f32 %v53, %v58
  %v63 = vlaneseq
  %v64 = vshrl.u32 %v63, 7
  %v65 = vsub.s32 0, %v64
  %v66 = vrot.slane %v24, %v65
  %v68 = vadd.f32 %v60, %v66
  %v69 = vadd.f32 %v61, %v66
  %v70 = vpack.c.bf16 %v69, %v68
  %v71 = vld [vmem:[%s3] sm:$0xf]
  %v72 = vld [vmem:[%s3 + $0x4] sm:$0xf]
  %v73 = vld [vmem:[%s3 + $0x8] sm:$0xf]
  %v74 = vld [vmem:[%s3 + $0xc] sm:$0xf]
  %v75 = vld [vmem:[%s4] sm:$0x1]
  %v77 = vlaneseq
  %v78 = vshrl.u32 %v77, 7
  %v79 = vsub.s32 0, %v78
  %v80 = vrot.slane %v75, %v79
  %v86 = vunpack.c.l.b16 %v71
  %v87 = vunpack.c.l.b16 %v72
  %v88 = vunpack.c.l.b16 %v73
  %v89 = vunpack.c.l.b16 %v74
  %v90 = vpack.c.b16 %v87, %v86
  %v91 = vpack.c.b16 %v89, %v88
  %v95 = vsel %vm25, %v70, 0
  %97 = vmatprep.subr.bf16.mxu0 0
  %98 = vmatpush1.bf16.msra.mxu0 %v90
  %99 = vmatprep.subr.bf16.mxu0 0
  %100 = vmatpush1.bf16.msra.mxu0 %v91
  %101 = vmatprep.subr.bf16.mxu0 0
  %102 = vmatpush1.bf16.msra.mxu0 0
  %103 = vmatprep.subr.bf16.mxu0 0
  %104 = vmatpush1.bf16.msra.mxu0 0
  %105 = vmatprep.subr.bf16.mxu0 0
  %106 = vmatpush1.bf16.msra.mxu0 0
  %107 = vmatprep.subr.bf16.mxu0 0
  %108 = vmatpush1.bf16.msra.mxu0 0
  %109 = vmatprep.subr.bf16.mxu0 0
  %110 = vmatpush1.bf16.msra.mxu0 0
  %111 = vmatprep.subr.bf16.mxu0 0
  %112 = vmatpush1.bf16.msra.mxu0 0
  %113 = vmatprep.subr.bf16.mxu0 0
  %114 = vmatpush1.bf16.msra.mxu0 0
  %115 = vmatprep.subr.bf16.mxu0 0
  %116 = vmatpush1.bf16.msra.mxu0 0
  %117 = vmatprep.subr.bf16.mxu0 0
  %118 = vmatpush1.bf16.msra.mxu0 0
  %119 = vmatprep.subr.bf16.mxu0 0
  %120 = vmatpush1.bf16.msra.mxu0 0
  %121 = vmatprep.subr.bf16.mxu0 0
  %122 = vmatpush1.bf16.msra.mxu0 0
  %123 = vmatprep.subr.bf16.mxu0 0
  %124 = vmatpush1.bf16.msra.mxu0 0
  %125 = vmatprep.subr.bf16.mxu0 0
  %126 = vmatpush1.bf16.msra.mxu0 0
  %127 = vmatprep.subr.bf16.mxu0 0
  %128 = vmatpush1.bf16.msra.mxu0 0
  %129 = vmatprep.mubr.bf16.mxu0 0
  %130 = vmatmul.mubr.bf16.gmra.mrb[0].mxu0 %v95
  %v131 = vpop.f32.mrb[0].mxu0
  %v132 = vadd.f32 %v80, %v131
  %v133 = vpop.f32.mrb[0].mxu0
  %v134 = vpop.f32.mrb[0].mxu0
  %v135 = vadd.f32 %v80, %v134
  %v136 = vpop.f32.mrb[0].mxu0
  %137 = vdwg.mxu0
  %v138 = vmul.f32 %v132, 0.5
  %v139 = vmul.f32 %v135, 0.5
  %v140 = vmul.f32 %v132, 0.70710677
  %v141 = vmul.f32 %v135, 0.70710677
  %v142 = verf.f32.pop %v140
  %v143 = verf.f32.pop %v141
  %v144 = vadd.f32 %v142, 1.0
  %v145 = vadd.f32 %v143, 1.0
  %v146 = vmul.f32 %v138, %v144
  %v147 = vmul.f32 %v139, %v145
  %v148 = vpack.c.bf16 %v147, %v146
  %v150 = vunpack.c.l.b16 %v148
  %v151 = vunpack.c.h.b16 %v148
  %v152 = vpack.c.b16 %v150, %v150
  %v153 = vpack.c.b16 %v151, %v151
  %vm156 = vcmask 519168
  %157 = vst.msk [vmem:[%s5] sm:$0xf] %vm156, %v152
  %vm158 = vcmask 516096
  %159 = vst.msk [vmem:[%s5 + $0x4] sm:$0x1] %vm158, %v153
  // Predicated region
  $region22: #{vit_forward.16} parent=0 // pred_check
    _
  $region23: #{vit_forward.16} parent=0 // pred_check_branch
    %161 = sbr.rel (0) target = $region25
  $region24: #{vit_forward.16} parent=0 // pred_region
    _
  $region25: #{vit_forward.16} parent=0 // pred_fallthru
    _
  // Predicated region
  $region26: #{vit_forward.16} parent=0 // pred_check
    _
  $region27: #{vit_forward.16} parent=0 // pred_check_branch
    %163 = sbr.rel (0) target = $region29
  $region28: #{vit_forward.16} parent=0 // pred_region
    _
  $region29: #{vit_forward.16} parent=0 // pred_fallthru
    _

</llo_original>
